<compile_context>
chip_gen: v7x
topology: tpu7x:2x2x1
jax: 0.10.0
libtpu: 0.0.40
codegen_flags: <defaults>
</compile_context>

<pallas_src>
import functools

import jax
import jax.numpy as jnp
from jax.experimental import pallas as pl
from jax.experimental.pallas import tpu as pltpu

LEAKY_SLOPE = 0.01     # nn.LeakyReLU default
BN_EPS = 1e-5          # nn.BatchNorm2d default


# --------------------------------------------------------------------------- #
# VMEM sizing helpers (generation aware, dtype aware)
# --------------------------------------------------------------------------- #

def _vmem_caps():
    cap = 64 * (1 << 20)                       # conservative default (v7x per-TC)
    try:
        info = pltpu.get_tpu_info()
        cap = int(getattr(info, "vmem_capacity_bytes", cap))
    except Exception:
        pass
    limit = max(24 * (1 << 20), min(cap - 8 * (1 << 20), 100 * (1 << 20)))
    budget = int(limit * 0.45)                 # per-grid-step working-set target
    return limit, budget


def _largest_divisor_at_most(n, cap):
    cap = max(1, min(n, cap))
    for d in range(cap, 0, -1):
        if n % d == 0:
            return d
    return 1


def _conv_batch_tile(batch, h, w, cinp, cp, item, budget):
    c2 = 2 * cp
    in_b = h * w * cinp * item                          # input block
    out_b = h * 2 * w * c2 * item                       # packed conv output block
    scr_b = (h + 1) * (w + 1) * cinp * item             # haloed-activation scratch
    tmp_b = (h * w * cinp * 4                           # activated input (f32)
             + (h + 1) * w * 2 * cinp * item            # lhs_full
             + 3 * h * w * c2 * 4)                      # y_even / y_odd / centered temps
    per = 2 * in_b + 2 * out_b + scr_b + tmp_b          # in/out are double-buffered
    fixed = 2 * (3 * (2 * cinp) * c2 * item) + 8 * c2 + 8 * cinp  # weights(x2 bufs)+bias+scale/shift
    avail = max(budget - fixed, per)
    cap_vmem = max(1, avail // per)
    cap_m = max(1, -(-4096 // (h * w)))                 # M <= ~4096 rows per step
    return _largest_divisor_at_most(batch, min(cap_vmem, cap_m))


def _bn_batch_tile(batch, h, w, c, item, budget):
    per = 2 * h * w * c * item + 4 * h * w * c * 4 + h * w * c * 4
    cap_vmem = max(1, budget // per)
    cap_m = max(1, -(-4096 // (h * w)))
    return _largest_divisor_at_most(batch, min(cap_vmem, cap_m))


# --------------------------------------------------------------------------- #
# Pallas kernels
# --------------------------------------------------------------------------- #

def _fused_conv_kernel(x_ref, scale_ref, shift_ref, we_ref, wo1_ref, wo2_ref,
                       b_ref, y_ref, mu_ref, m2_ref, xh_ref, *, apply_act):
    """[BN-affine + LeakyReLU of the previous layer] -> sub-pixel
    ConvTranspose2d(k=3, s=2, p=1, op=1) + bias -> BN partial statistics.

    x  : (Bb, H, W, Cin)   RAW conv output of the previous layer (or the linear
                           head output for layer 0); no halo, even sizes.
    scale, shift : (1,1,1,Cin) f32 BN affine of the previous layer (unused when
                           apply_act=False).
    we/wo1/wo2 : (2*Cin, 2*Cp) tap-stacked weights;  b : (1,1,1,2*Cp) bias.
    y  : (Bb, H, 2, W, 2*Cp) packed RAW conv output: reshape(B,2H,2W,Cp) is the
                           interleaved 2x-upsampled NHWC conv output.
    mu, m2 : (1, 1, 2*Cp)  per-tile mean / centered sum of squares (f32).
    xh : VMEM scratch (Bb, H+1, W+1, Cin) -- in-VMEM zero halo (replaces the
                           old HBM halo + separate BN pass).
    """
    bb, h, _, w, c2 = y_ref.shape
    cin = x_ref.shape[-1]

    x = x_ref[...]
    if apply_act:
        zf = x.astype(jnp.float32) * scale_ref[...] + shift_ref[...]
        zf = jnp.where(zf >= 0.0, zf, LEAKY_SLOPE * zf)
        z = zf.astype(x_ref.dtype)
    else:
        z = x

    # Activated tile + zero halo (must be zero AFTER the activation).
    xh_ref[:, 0:h, 0:w, :] = z
    xh_ref[:, h:h + 1, :, :] = jnp.zeros((bb, 1, w + 1, cin), z.dtype)
    xh_ref[:, 0:h, w:w + 1, :] = jnp.zeros((bb, h, 1, cin), z.dtype)

    # Tap-stacked LHS built once over all h+1 rows; H offsets are free slices.
    lhs_full = jnp.concatenate(
        [xh_ref[:, :, 0:w, :], xh_ref[:, :, 1:w + 1, :]], axis=-1)
    lhs_a = lhs_full[:, 0:h]        # [x00 | x01]
    lhs_b = lhs_full[:, 1:h + 1]    # [x10 | x11]

    bias = b_ref[...]
    y_even = jnp.einsum('bhwk,kn->bhwn', lhs_a, we_ref[...],
                        preferred_element_type=jnp.float32) + bias
    y_odd = (jnp.einsum('bhwk,kn->bhwn', lhs_a, wo1_ref[...],
                        preferred_element_type=jnp.float32)
             + jnp.einsum('bhwk,kn->bhwn', lhs_b, wo2_ref[...],
                          preferred_element_type=jnp.float32)
             + bias)

    # Packed store: dim 2 = output-row parity, lanes [0:Cp]/[Cp:2Cp] = col parity.
    y_ref[:, :, 0:1, :, :] = y_even.reshape(bb, h, 1, w, c2).astype(y_ref.dtype)
    y_ref[:, :, 1:2, :, :] = y_odd.reshape(bb, h, 1, w, c2).astype(y_ref.dtype)

    # Per-tile BatchNorm partials in f32 (mean + centered M2 -> no cancellation).
    cnt = 2.0 * bb * h * w
    s = (jnp.sum(y_even, axis=(0, 1, 2), keepdims=True)
         + jnp.sum(y_odd, axis=(0, 1, 2), keepdims=True))
    mu = s * (1.0 / cnt)
    de = y_even - mu
    do = y_odd - mu
    m2 = (jnp.sum(de * de, axis=(0, 1, 2), keepdims=True)
          + jnp.sum(do * do, axis=(0, 1, 2), keepdims=True))
    mu_ref[...] = mu.reshape(1, 1, c2)
    m2_ref[...] = m2.reshape(1, 1, c2)


def _bn_lrelu_kernel(y_ref, scale_ref, shift_ref, o_ref):
    """Fused BatchNorm affine + LeakyReLU (final layer epilogue only)."""
    z = y_ref[...].astype(jnp.float32) * scale_ref[...] + shift_ref[...]
    o_ref[...] = jnp.where(z >= 0.0, z, LEAKY_SLOPE * z).astype(o_ref.dtype)


# --------------------------------------------------------------------------- #
# Per-layer driver
# --------------------------------------------------------------------------- #

def _fused_conv_layer(x, scale_in, shift_in, layer, apply_act, act_dtype):
    """One stage: [act of previous layer] -> ConvTranspose2d -> BN partials.

    x: (B, H, W, Cin) raw previous output.  Returns (y_interleaved, scale, shift)
    where y_interleaved is (B, 2H, 2W, Cp) RAW conv output and scale/shift is the
    BN affine of THIS layer (to be applied downstream)."""
    batch, h, w, cinp = x.shape
    cp = layer['cp']
    c2 = 2 * cp
    item = jnp.dtype(act_dtype).itemsize
    limit, budget = _vmem_caps()
    bb = _conv_batch_tile(batch, h, w, cinp, cp, item, budget)
    nb = batch // bb

    kern = functools.partial(_fused_conv_kernel, apply_act=apply_act)
    y, mu_t, m2_t = pl.pallas_call(
        kern,
        out_shape=(jax.ShapeDtypeStruct((batch, h, 2, w, c2), act_dtype),
                   jax.ShapeDtypeStruct((nb, 1, c2), jnp.float32),
                   jax.ShapeDtypeStruct((nb, 1, c2), jnp.float32)),
        grid=(nb,),
        in_specs=[
            pl.BlockSpec((bb, h, w, cinp), lambda b: (b, 0, 0, 0)),
            pl.BlockSpec((1, 1, 1, cinp), lambda b: (0, 0, 0, 0)),
            pl.BlockSpec((1, 1, 1, cinp), lambda b: (0, 0, 0, 0)),
            pl.BlockSpec((2 * cinp, c2), lambda b: (0, 0)),
            pl.BlockSpec((2 * cinp, c2), lambda b: (0, 0)),
            pl.BlockSpec((2 * cinp, c2), lambda b: (0, 0)),
            pl.BlockSpec((1, 1, 1, c2), lambda b: (0, 0, 0, 0)),
        ],
        out_specs=(
            pl.BlockSpec((bb, h, 2, w, c2), lambda b: (b, 0, 0, 0, 0)),
            pl.BlockSpec((1, 1, c2), lambda b: (b, 0, 0)),
            pl.BlockSpec((1, 1, c2), lambda b: (b, 0, 0)),
        ),
        scratch_shapes=[pltpu.VMEM((bb, h + 1, w + 1, cinp), act_dtype)],
        compiler_params=pltpu.CompilerParams(
            dimension_semantics=("parallel",),
            vmem_limit_bytes=limit),
    )(x, scale_in, shift_in, layer['w_e'], layer['w_o1'], layer['w_o2'],
      layer['b_packed'])

    # Combine per-tile (mean, M2) partials Chan/Welford-style (equal counts).
    cnt = 2.0 * bb * h * w
    mu_g = mu_t.reshape(nb, 2, cp)
    m2_g = m2_t.reshape(nb, 2, cp)
    mean = jnp.mean(mu_g, axis=(0, 1))
    var = (jnp.sum(m2_g, axis=(0, 1))
           + cnt * jnp.sum((mu_g - mean) ** 2, axis=(0, 1))) / (2.0 * nb * cnt)
    var = jnp.maximum(var, 0.0)
    scale_v = layer['gamma_p'] * jax.lax.rsqrt(var + BN_EPS)
    shift_v = layer['beta_p'] - mean * scale_v
    scale = scale_v.reshape(1, 1, 1, cp).astype(jnp.float32)
    shift = shift_v.reshape(1, 1, 1, cp).astype(jnp.float32)

    y_il = y.reshape(batch, 2 * h, 2 * w, cp)     # free: packed == interleaved layout
    return y_il, scale, shift


def _bn_lrelu(y, scale, shift):
    """Final-layer BN affine + LeakyReLU (f32 output)."""
    batch, h, w, c = y.shape
    limit, budget = _vmem_caps()
    bb = _bn_batch_tile(batch, h, w, c, jnp.dtype(y.dtype).itemsize, budget)
    nb = batch // bb
    return pl.pallas_call(
        _bn_lrelu_kernel,
        out_shape=jax.ShapeDtypeStruct((batch, h, w, c), jnp.float32),
        grid=(nb,),
        in_specs=[
            pl.BlockSpec((bb, h, w, c), lambda b: (b, 0, 0, 0)),
            pl.BlockSpec((1, 1, 1, c), lambda b: (0, 0, 0, 0)),
            pl.BlockSpec((1, 1, 1, c), lambda b: (0, 0, 0, 0)),
        ],
        out_specs=pl.BlockSpec((bb, h, w, c), lambda b: (b, 0, 0, 0)),
        compiler_params=pltpu.CompilerParams(
            dimension_semantics=("parallel",),
            vmem_limit_bytes=limit),
    )(y, scale, shift)


# --------------------------------------------------------------------------- #
# Parameter packing
# --------------------------------------------------------------------------- #

def _pack_convt_weights(wt, bias, cinp, cp, dtype):
    """Pack PyTorch ConvTranspose2d weights (Cin, Cout, 3, 3) for the sub-pixel
    matmuls.  Output phases (pr, pc) of out[2r+pr, 2c+pc]:
      EE = x00*W[1,1]
      EO = x00*W[1,2] + x01*W[1,0]
      OE = x00*W[2,1] + x10*W[0,1]
      OO = x00*W[2,2] + x01*W[2,0] + x10*W[0,2] + x11*W[0,0]
    packed as:  [x00|x01] @ W_e  -> [EE|EO]
                [x00|x01] @ W_o1 + [x10|x11] @ W_o2 -> [OE|OO]
    Cin is zero-padded to cinp (lane-padded previous layer), Cout to cp."""
    cin, cout = wt.shape[0], wt.shape[1]
    wpad = jnp.zeros((cinp, cp, 3, 3), jnp.float32).at[:cin, :cout].set(wt)

    def k(kh, kw):
        return wpad[:, :, kh, kw]                               # (Cinp, Cp)

    zero = jnp.zeros((cinp, cp), jnp.float32)
    w_e = jnp.concatenate([jnp.concatenate([k(1, 1), k(1, 2)], axis=1),
                           jnp.concatenate([zero,    k(1, 0)], axis=1)], axis=0)
    w_o1 = jnp.concatenate([jnp.concatenate([k(2, 1), k(2, 2)], axis=1),
                            jnp.concatenate([zero,    k(2, 0)], axis=1)], axis=0)
    w_o2 = jnp.concatenate([jnp.concatenate([k(0, 1), k(0, 2)], axis=1),
                            jnp.concatenate([zero,    k(0, 0)], axis=1)], axis=0)
    b_pad = jnp.zeros((cp,), jnp.float32).at[:cout].set(bias)
    b_packed = jnp.concatenate([b_pad, b_pad]).reshape(1, 1, 1, 2 * cp)
    return (w_e.astype(dtype), w_o1.astype(dtype), w_o2.astype(dtype), b_packed)


# --------------------------------------------------------------------------- #
# Module
# --------------------------------------------------------------------------- #

class Upsampling:
    """JAX/Pallas port of pyqg_generative.tools.cnn_tools.upsampling."""

    def __init__(self, key, n_up, n_in, n_out, nx=64,
                 hidden_dims=(32, 64, 128, 256, 512, 1024), flatten=True,
                 compute_dtype=jnp.bfloat16):
        # compute_dtype=bfloat16 (default): MXU operands and activation storage
        # bf16; accumulation, BN statistics and the BN affine stay in f32.
        hd = list(hidden_dims)[:n_up][::-1]
        self.n_up = n_up
        self.n_out = n_out
        self.flatten = flatten
        self.compute_dtype = compute_dtype
        keys = jax.random.split(key, 2 + 2 * n_up)

        self.params = {}
        if flatten:
            self.nx_coarse = int(nx / 2 ** n_up)
            c0 = hd[0]
            dout = c0 * self.nx_coarse ** 2
            lim = 1.0 / (n_in ** 0.5)
            w_raw = jax.random.uniform(keys[0], (n_in, dout), jnp.float32, -lim, lim)
            b_raw = jax.random.uniform(keys[1], (dout,), jnp.float32, -lim, lim)
            # Permute columns so x @ w directly yields NHWC ordering (saves a
            # transpose; equivalent to PyTorch's .view(B, C, nxc, nxc) + NHWC).
            w_nhwc = (w_raw.reshape(n_in, c0, self.nx_coarse, self.nx_coarse)
                      .transpose(0, 2, 3, 1).reshape(n_in, dout))
            b_nhwc = (b_raw.reshape(c0, self.nx_coarse, self.nx_coarse)
                      .transpose(1, 2, 0).reshape(dout))
            self.params.update(ann_w=w_raw, ann_b=b_raw,
                               ann_w_nhwc=w_nhwc, ann_b_nhwc=b_nhwc)

        self.layers = []
        prev_cp = hd[0] if flatten else n_in      # channels feeding layer 0
        for i in range(n_up):
            nin = n_in if (i == 0 and not flatten) else hd[i]
            nout = n_out if i == n_up - 1 else hd[i + 1]
            # Lane-dense layers: any cout < 64 is padded so the packed lane
            # width is 128 and stores are unmasked vst (padded channels carry
            # exact zeros and are annihilated by zero Cin rows downstream).
            cp = 64 if nout < 64 else nout
            cinp = prev_cp
            lim = 1.0 / ((nin * 9) ** 0.5)
            wt = jax.random.uniform(keys[2 + 2 * i], (nin, nout, 3, 3),
                                    jnp.float32, -lim, lim)
            b = jax.random.uniform(keys[3 + 2 * i], (nout,), jnp.float32, -lim, lim)
            gamma = jnp.ones((nout,), jnp.float32)     # BatchNorm2d defaults
            beta = jnp.zeros((nout,), jnp.float32)
            w_e, w_o1, w_o2, b_packed = _pack_convt_weights(
                wt, b, cinp, cp, compute_dtype)
            gamma_p = jnp.zeros((cp,), jnp.float32).at[:nout].set(gamma)
            beta_p = jnp.zeros((cp,), jnp.float32).at[:nout].set(beta)
            self.layers.append(dict(
                wt=wt, b=b, gamma=gamma, beta=beta,                 # raw (reference)
                w_e=w_e, w_o1=w_o1, w_o2=w_o2, b_packed=b_packed,   # packed (kernels)
                gamma_p=gamma_p, beta_p=beta_p,
                cout=nout, cp=cp, cinp=cinp))
            prev_cp = cp

    def __call__(self, x):
        cd = self.compute_dtype
        if self.flatten:
            # K = n_in is far too small to feed the MXU; the dense head stays in
            # XLA per the performance review.
            h = (x.astype(jnp.float32) @ self.params['ann_w_nhwc']
                 + self.params['ann_b_nhwc'])
            h = h.reshape(x.shape[0], self.nx_coarse, self.nx_coarse, -1)
        else:
            h = jnp.transpose(x, (0, 2, 3, 1)).astype(jnp.float32)  # NCHW -> NHWC
        cur = h.astype(cd)

        scale = shift = None
        for i, layer in enumerate(self.layers):
            apply_act = i > 0
            if not apply_act:
                cinp = layer['cinp']
                scale = jnp.ones((1, 1, 1, cinp), jnp.float32)   # unused (no act)
                shift = jnp.zeros((1, 1, 1, cinp), jnp.float32)
            cur, scale, shift = _fused_conv_layer(cur, scale, shift, layer,
                                                  apply_act, cd)

        out = _bn_lrelu(cur, scale, shift)               # final BN + LeakyReLU
        out = out[:, :, :, :self.n_out]                  # drop lane padding
        return jnp.transpose(out, (0, 3, 1, 2)).astype(jnp.float32)   # NCHW


# --------------------------------------------------------------------------- #
# Pure-JAX reference (independent formulation: dilate + pad + flipped 3x3 conv)
# --------------------------------------------------------------------------- #

def _reference_forward(model, x):
    if model.flatten:
        h = x @ model.params['ann_w'] + model.params['ann_b']
        h = h.reshape(x.shape[0], -1, model.nx_coarse, model.nx_coarse)
        h = jnp.transpose(h, (0, 2, 3, 1))
    else:
        h = jnp.transpose(x, (0, 2, 3, 1))
    for lyr in model.layers:
        w_conv = jnp.flip(lyr['wt'], axis=(2, 3)).transpose(2, 3, 0, 1)  # (kh,kw,Cin,Cout)
        bsz, hh, ww, _ = h.shape
        xd = jnp.zeros((bsz, 2 * hh - 1, 2 * ww - 1, h.shape[-1]), h.dtype)
        xd = xd.at[:, ::2, ::2, :].set(h)
        xp = jnp.pad(xd, ((0, 0), (1, 2), (1, 2), (0, 0)))
        ho, wo = 2 * hh, 2 * ww
        y = lyr['b'].reshape(1, 1, 1, -1)
        for dy in range(3):
            for dx in range(3):
                y = y + jnp.einsum('bhwc,cd->bhwd',
                                   xp[:, dy:dy + ho, dx:dx + wo, :],
                                   w_conv[dy, dx])
        mean = jnp.mean(y, axis=(0, 1, 2), keepdims=True)
        var = jnp.mean((y - mean) ** 2, axis=(0, 1, 2), keepdims=True)
        zz = (lyr['gamma'].reshape(1, 1, 1, -1) * (y - mean)
              / jnp.sqrt(var + BN_EPS) + lyr['beta'].reshape(1, 1, 1, -1))
        h = jnp.where(zz >= 0, zz, LEAKY_SLOPE * zz)
    return jnp.transpose(h, (0, 3, 1, 2))


# --------------------------------------------------------------------------- #
# Self-test
# --------------------------------------------------------------------------- #

if __name__ == "__main__":
    key = jax.random.PRNGKey(0)
    k_params, k_x = jax.random.split(key)

    # small config: n_up=2, n_in=4, n_out=3, nx=16 -> nx_coarse=4,
    # hidden (reversed) = [64, 32]; stages: 64->32(pad 64) (4->8), 32->3(pad 64) (8->16)
    n_up, n_in, n_out, nx = 2, 4, 3, 16
    x = jax.random.normal(k_x, (2, n_in), jnp.float32)    # flatten=True -> (B, n_in)

    # f32 compute path: must match the pure-JAX reference tightly.
    model32 = Upsampling(k_params, n_up, n_in, n_out, nx=nx,
                         compute_dtype=jnp.float32)
    out32 = jax.block_until_ready(jax.jit(model32.__call__)(x))
    assert out32.shape == (2, n_out, nx, nx), out32.shape
    ref = _reference_forward(model32, x)
    err = float(jnp.max(jnp.abs(out32 - ref)))
    assert jnp.allclose(out32, ref, atol=2e-3, rtol=2e-3), err

    # bf16 compute path (default): same weights, loose agreement check.
    model16 = Upsampling(k_params, n_up, n_in, n_out, nx=nx,
                         compute_dtype=jnp.bfloat16)
    out16 = jax.block_until_ready(jax.jit(model16.__call__)(x))
    assert out16.shape == (2, n_out, nx, nx), out16.shape
    assert bool(jnp.all(jnp.isfinite(out16)))
    rel = float(jnp.sqrt(jnp.sum((out16 - ref) ** 2))
                / (jnp.sqrt(jnp.sum(ref ** 2)) + 1e-6))
    assert rel < 0.15, rel

    print("KERNEL_OK")
</pallas_src>

<mosaic_0001>
module attributes {stable_mosaic.version = 11 : i64} {
  func.func @_fused_conv_kernel(%arg0: i32, %arg1: memref<2x4x4x64xf32, #tpu.memory_space<vmem>>, %arg2: memref<1x1x1x64xf32, #tpu.memory_space<vmem>>, %arg3: memref<1x1x1x64xf32, #tpu.memory_space<vmem>>, %arg4: memref<128x128xf32, #tpu.memory_space<vmem>>, %arg5: memref<128x128xf32, #tpu.memory_space<vmem>>, %arg6: memref<128x128xf32, #tpu.memory_space<vmem>>, %arg7: memref<1x1x1x128xf32, #tpu.memory_space<vmem>>, %arg8: memref<2x4x2x4x128xf32, #tpu.memory_space<vmem>>, %arg9: memref<1x1x128xf32, #tpu.memory_space<vmem>>, %arg10: memref<1x1x128xf32, #tpu.memory_space<vmem>>, %arg11: memref<2x5x5x64xf32, #tpu.memory_space<vmem>>) attributes {dimension_semantics = [#tpu.dimension_semantics<parallel>], iteration_bounds = array<i64: 1>, scalar_prefetch = 0 : i64, scratch_operands = 1 : i64, tpu.core_type = #tpu.core_type<tc>, window_params = [{transform_indices = @transform_0, window_bounds = array<i64: 2, 4, 4, 64>}, {pipeline_mode = #tpu.pipeline_mode<synchronous>, transform_indices = @transform_1, window_bounds = array<i64: 1, 1, 1, 64>}, {pipeline_mode = #tpu.pipeline_mode<synchronous>, transform_indices = @transform_2, window_bounds = array<i64: 1, 1, 1, 64>}, {pipeline_mode = #tpu.pipeline_mode<synchronous>, transform_indices = @transform_3, window_bounds = array<i64: 128, 128>}, {pipeline_mode = #tpu.pipeline_mode<synchronous>, transform_indices = @transform_4, window_bounds = array<i64: 128, 128>}, {pipeline_mode = #tpu.pipeline_mode<synchronous>, transform_indices = @transform_5, window_bounds = array<i64: 128, 128>}, {pipeline_mode = #tpu.pipeline_mode<synchronous>, transform_indices = @transform_6, window_bounds = array<i64: 1, 1, 1, 128>}, {transform_indices = @transform_7, window_bounds = array<i64: 2, 4, 2, 4, 128>}, {transform_indices = @transform_8, window_bounds = array<i64: 1, 1, 128>}, {transform_indices = @transform_9, window_bounds = array<i64: 1, 1, 128>}]} {
    %c0 = arith.constant 0 : index
    %c0_0 = arith.constant 0 : index
    %c0_1 = arith.constant 0 : index
    %c0_2 = arith.constant 0 : index
    %0 = vector.load %arg1[%c0, %c0_0, %c0_1, %c0_2] : memref<2x4x4x64xf32, #tpu.memory_space<vmem>>, vector<2x4x4x64xf32>
    %c0_3 = arith.constant 0 : index
    %c0_4 = arith.constant 0 : index
    %c0_5 = arith.constant 0 : index
    %c0_6 = arith.constant 0 : index
    %1 = vector.load %arg11[%c0_3, %c0_4, %c0_5, %c0_6] : memref<2x5x5x64xf32, #tpu.memory_space<vmem>>, vector<2x4x4x64xf32>
    tpu.vector_store %arg11[%c0_3, %c0_4, %c0_5, %c0_6], %0 {strides = array<i32>} : memref<2x5x5x64xf32, #tpu.memory_space<vmem>>, vector<2x4x4x64xf32>,
    %cst = arith.constant 0.000000e+00 : f32
    %2 = vector.broadcast %cst : f32 to vector<2x1x5x64xf32>
    %c0_7 = arith.constant 0 : index
    %c4 = arith.constant 4 : index
    %c0_8 = arith.constant 0 : index
    %c0_9 = arith.constant 0 : index
    %3 = vector.load %arg11[%c0_7, %c4, %c0_8, %c0_9] : memref<2x5x5x64xf32, #tpu.memory_space<vmem>>, vector<2x1x5x64xf32>
    tpu.vector_store %arg11[%c0_7, %c4, %c0_8, %c0_9], %2 {strides = array<i32>} : memref<2x5x5x64xf32, #tpu.memory_space<vmem>>, vector<2x1x5x64xf32>,
    %cst_10 = arith.constant 0.000000e+00 : f32
    %4 = vector.broadcast %cst_10 : f32 to vector<2x4x1x64xf32>
    %c0_11 = arith.constant 0 : index
    %c0_12 = arith.constant 0 : index
    %c4_13 = arith.constant 4 : index
    %c0_14 = arith.constant 0 : index
    %5 = vector.load %arg11[%c0_11, %c0_12, %c4_13, %c0_14] : memref<2x5x5x64xf32, #tpu.memory_space<vmem>>, vector<2x4x1x64xf32>
    tpu.vector_store %arg11[%c0_11, %c0_12, %c4_13, %c0_14], %4 {strides = array<i32>} : memref<2x5x5x64xf32, #tpu.memory_space<vmem>>, vector<2x4x1x64xf32>,
    %c0_15 = arith.constant 0 : index
    %c0_16 = arith.constant 0 : index
    %c0_17 = arith.constant 0 : index
    %c0_18 = arith.constant 0 : index
    %6 = vector.load %arg11[%c0_15, %c0_16, %c0_17, %c0_18] : memref<2x5x5x64xf32, #tpu.memory_space<vmem>>, vector<2x5x4x64xf32>
    %c0_19 = arith.constant 0 : index
    %c0_20 = arith.constant 0 : index
    %c1 = arith.constant 1 : index
    %c0_21 = arith.constant 0 : index
    %7 = vector.load %arg11[%c0_19, %c0_20, %c1, %c0_21] : memref<2x5x5x64xf32, #tpu.memory_space<vmem>>, vector<2x5x4x64xf32>
    %8 = tpu.concatenate %6, %7 in 3 : vector<2x5x4x64xf32>, vector<2x5x4x64xf32> -> vector<2x5x4x128xf32>
    %9 = vector.extract_strided_slice %8 {offsets = [0, 0, 0, 0], sizes = [2, 4, 4, 128], strides = [1, 1, 1, 1]} : vector<2x5x4x128xf32> to vector<2x4x4x128xf32>
    %10 = vector.extract_strided_slice %8 {offsets = [0, 1, 0, 0], sizes = [2, 4, 4, 128], strides = [1, 1, 1, 1]} : vector<2x5x4x128xf32> to vector<2x4x4x128xf32>
    %c0_22 = arith.constant 0 : index
    %c0_23 = arith.constant 0 : index
    %c0_24 = arith.constant 0 : index
    %c0_25 = arith.constant 0 : index
    %11 = vector.load %arg7[%c0_22, %c0_23, %c0_24, %c0_25] : memref<1x1x1x128xf32, #tpu.memory_space<vmem>>, vector<1x1x1x128xf32>
    %c0_26 = arith.constant 0 : index
    %c0_27 = arith.constant 0 : index
    %12 = vector.load %arg4[%c0_26, %c0_27] : memref<128x128xf32, #tpu.memory_space<vmem>>, vector<128x128xf32>
    "tpu.trace_start"() <{level = 10 : i32, message = "bhwk,kn->bhwn"}> : () -> ()
    %cst_28 = arith.constant dense<0.000000e+00> : vector<2x4x4x128xf32>
    %13 = tpu.matmul %9, %12, %cst_28 {dimension_numbers = #tpu.dot_dimension_numbers<[3], [0], [0, 1, 2], [1], [0, 0, 0, 1, 0, 2, 1, 1], [], []>} : vector<2x4x4x128xf32>, vector<128x128xf32>, vector<2x4x4x128xf32> -> vector<2x4x4x128xf32>
    "tpu.trace_stop"() : () -> ()
    %14 = vector.broadcast %11 : vector<1x1x1x128xf32> to vector<2x4x4x128xf32>
    %15 = arith.addf %13, %14 : vector<2x4x4x128xf32>
    %c0_29 = arith.constant 0 : index
    %c0_30 = arith.constant 0 : index
    %16 = vector.load %arg5[%c0_29, %c0_30] : memref<128x128xf32, #tpu.memory_space<vmem>>, vector<128x128xf32>
    "tpu.trace_start"() <{level = 10 : i32, message = "bhwk,kn->bhwn"}> : () -> ()
    %cst_31 = arith.constant dense<0.000000e+00> : vector<2x4x4x128xf32>
    %17 = tpu.matmul %9, %16, %cst_31 {dimension_numbers = #tpu.dot_dimension_numbers<[3], [0], [0, 1, 2], [1], [0, 0, 0, 1, 0, 2, 1, 1], [], []>} : vector<2x4x4x128xf32>, vector<128x128xf32>, vector<2x4x4x128xf32> -> vector<2x4x4x128xf32>
    "tpu.trace_stop"() : () -> ()
    %c0_32 = arith.constant 0 : index
    %c0_33 = arith.constant 0 : index
    %18 = vector.load %arg6[%c0_32, %c0_33] : memref<128x128xf32, #tpu.memory_space<vmem>>, vector<128x128xf32>
    "tpu.trace_start"() <{level = 10 : i32, message = "bhwk,kn->bhwn"}> : () -> ()
    %cst_34 = arith.constant dense<0.000000e+00> : vector<2x4x4x128xf32>
    %19 = tpu.matmul %10, %18, %cst_34 {dimension_numbers = #tpu.dot_dimension_numbers<[3], [0], [0, 1, 2], [1], [0, 0, 0, 1, 0, 2, 1, 1], [], []>} : vector<2x4x4x128xf32>, vector<128x128xf32>, vector<2x4x4x128xf32> -> vector<2x4x4x128xf32>
    "tpu.trace_stop"() : () -> ()
    %20 = arith.addf %17, %19 : vector<2x4x4x128xf32>
    %21 = vector.broadcast %11 : vector<1x1x1x128xf32> to vector<2x4x4x128xf32>
    %22 = arith.addf %20, %21 : vector<2x4x4x128xf32>
    %23 = vector.shape_cast %15 : vector<2x4x4x128xf32> to vector<2x4x1x4x128xf32>
    %c0_35 = arith.constant 0 : index
    %c0_36 = arith.constant 0 : index
    %c0_37 = arith.constant 0 : index
    %c0_38 = arith.constant 0 : index
    %c0_39 = arith.constant 0 : index
    %24 = vector.load %arg8[%c0_35, %c0_36, %c0_37, %c0_38, %c0_39] : memref<2x4x2x4x128xf32, #tpu.memory_space<vmem>>, vector<2x4x1x4x128xf32>
    tpu.vector_store %arg8[%c0_35, %c0_36, %c0_37, %c0_38, %c0_39], %23 {strides = array<i32>} : memref<2x4x2x4x128xf32, #tpu.memory_space<vmem>>, vector<2x4x1x4x128xf32>,
    %25 = vector.shape_cast %22 : vector<2x4x4x128xf32> to vector<2x4x1x4x128xf32>
    %c0_40 = arith.constant 0 : index
    %c0_41 = arith.constant 0 : index
    %c1_42 = arith.constant 1 : index
    %c0_43 = arith.constant 0 : index
    %c0_44 = arith.constant 0 : index
    %26 = vector.load %arg8[%c0_40, %c0_41, %c1_42, %c0_43, %c0_44] : memref<2x4x2x4x128xf32, #tpu.memory_space<vmem>>, vector<2x4x1x4x128xf32>
    tpu.vector_store %arg8[%c0_40, %c0_41, %c1_42, %c0_43, %c0_44], %25 {strides = array<i32>} : memref<2x4x2x4x128xf32, #tpu.memory_space<vmem>>, vector<2x4x1x4x128xf32>,
    %cst_45 = arith.constant dense<0.000000e+00> : vector<128xf32>
    %27 = vector.multi_reduction <add>, %15, %cst_45 [0, 1, 2] : vector<2x4x4x128xf32> to vector<128xf32>
    %28 = vector.shape_cast %27 : vector<128xf32> to vector<1x1x1x128xf32>
    %cst_46 = arith.constant dense<0.000000e+00> : vector<128xf32>
    %29 = vector.multi_reduction <add>, %22, %cst_46 [0, 1, 2] : vector<2x4x4x128xf32> to vector<128xf32>
    %30 = vector.shape_cast %29 : vector<128xf32> to vector<1x1x1x128xf32>
    %31 = arith.addf %28, %30 : vector<1x1x1x128xf32>
    %cst_47 = arith.constant 1.562500e-02 : f32
    %32 = vector.broadcast %cst_47 : f32 to vector<1x1x1x128xf32>
    %33 = arith.mulf %31, %32 : vector<1x1x1x128xf32>
    %34 = vector.broadcast %33 : vector<1x1x1x128xf32> to vector<2x4x4x128xf32>
    %35 = arith.subf %15, %34 : vector<2x4x4x128xf32>
    %36 = vector.broadcast %33 : vector<1x1x1x128xf32> to vector<2x4x4x128xf32>
    %37 = arith.subf %22, %36 : vector<2x4x4x128xf32>
    %38 = arith.mulf %35, %35 : vector<2x4x4x128xf32>
    %cst_48 = arith.constant dense<0.000000e+00> : vector<128xf32>
    %39 = vector.multi_reduction <add>, %38, %cst_48 [0, 1, 2] : vector<2x4x4x128xf32> to vector<128xf32>
    %40 = vector.shape_cast %39 : vector<128xf32> to vector<1x1x1x128xf32>
    %41 = arith.mulf %37, %37 : vector<2x4x4x128xf32>
    %cst_49 = arith.constant dense<0.000000e+00> : vector<128xf32>
    %42 = vector.multi_reduction <add>, %41, %cst_49 [0, 1, 2] : vector<2x4x4x128xf32> to vector<128xf32>
    %43 = vector.shape_cast %42 : vector<128xf32> to vector<1x1x1x128xf32>
    %44 = arith.addf %40, %43 : vector<1x1x1x128xf32>
    %45 = vector.shape_cast %33 : vector<1x1x1x128xf32> to vector<1x1x128xf32>
    %c0_50 = arith.constant 0 : index
    %c0_51 = arith.constant 0 : index
    %c0_52 = arith.constant 0 : index
    %46 = vector.load %arg9[%c0_50, %c0_51, %c0_52] : memref<1x1x128xf32, #tpu.memory_space<vmem>>, vector<1x1x128xf32>
    tpu.vector_store %arg9[%c0_50, %c0_51, %c0_52], %45 {strides = array<i32>} : memref<1x1x128xf32, #tpu.memory_space<vmem>>, vector<1x1x128xf32>,
    %47 = vector.shape_cast %44 : vector<1x1x1x128xf32> to vector<1x1x128xf32>
    %c0_53 = arith.constant 0 : index
    %c0_54 = arith.constant 0 : index
    %c0_55 = arith.constant 0 : index
    %48 = vector.load %arg10[%c0_53, %c0_54, %c0_55] : memref<1x1x128xf32, #tpu.memory_space<vmem>>, vector<1x1x128xf32>
    tpu.vector_store %arg10[%c0_53, %c0_54, %c0_55], %47 {strides = array<i32>} : memref<1x1x128xf32, #tpu.memory_space<vmem>>, vector<1x1x128xf32>,
    return
  }
  func.func @transform_0(%arg0: i32) -> (i32, i32, i32, i32) {
    %c0_i32 = arith.constant 0 : i32
    %c0_i32_0 = arith.constant 0 : i32
    %c0_i32_1 = arith.constant 0 : i32
    %c0_i32_2 = arith.constant 0 : i32
    return %arg0, %c0_i32, %c0_i32_0, %c0_i32_1 : i32, i32, i32, i32
  }
  func.func @transform_1(%arg0: i32) -> (i32, i32, i32, i32) {
    %c0_i32 = arith.constant 0 : i32
    %c0_i32_0 = arith.constant 0 : i32
    %c0_i32_1 = arith.constant 0 : i32
    %c0_i32_2 = arith.constant 0 : i32
    %c0_i32_3 = arith.constant 0 : i32
    return %c0_i32, %c0_i32_0, %c0_i32_1, %c0_i32_2 : i32, i32, i32, i32
  }
  func.func @transform_2(%arg0: i32) -> (i32, i32, i32, i32) {
    %c0_i32 = arith.constant 0 : i32
    %c0_i32_0 = arith.constant 0 : i32
    %c0_i32_1 = arith.constant 0 : i32
    %c0_i32_2 = arith.constant 0 : i32
    %c0_i32_3 = arith.constant 0 : i32
    return %c0_i32, %c0_i32_0, %c0_i32_1, %c0_i32_2 : i32, i32, i32, i32
  }
  func.func @transform_3(%arg0: i32) -> (i32, i32) {
    %c0_i32 = arith.constant 0 : i32
    %c0_i32_0 = arith.constant 0 : i32
    %c0_i32_1 = arith.constant 0 : i32
    return %c0_i32, %c0_i32_0 : i32, i32
  }
  func.func @transform_4(%arg0: i32) -> (i32, i32) {
    %c0_i32 = arith.constant 0 : i32
    %c0_i32_0 = arith.constant 0 : i32
    %c0_i32_1 = arith.constant 0 : i32
    return %c0_i32, %c0_i32_0 : i32, i32
  }
  func.func @transform_5(%arg0: i32) -> (i32, i32) {
    %c0_i32 = arith.constant 0 : i32
    %c0_i32_0 = arith.constant 0 : i32
    %c0_i32_1 = arith.constant 0 : i32
    return %c0_i32, %c0_i32_0 : i32, i32
  }
  func.func @transform_6(%arg0: i32) -> (i32, i32, i32, i32) {
    %c0_i32 = arith.constant 0 : i32
    %c0_i32_0 = arith.constant 0 : i32
    %c0_i32_1 = arith.constant 0 : i32
    %c0_i32_2 = arith.constant 0 : i32
    %c0_i32_3 = arith.constant 0 : i32
    return %c0_i32, %c0_i32_0, %c0_i32_1, %c0_i32_2 : i32, i32, i32, i32
  }
  func.func @transform_7(%arg0: i32) -> (i32, i32, i32, i32, i32) {
    %c0_i32 = arith.constant 0 : i32
    %c0_i32_0 = arith.constant 0 : i32
    %c0_i32_1 = arith.constant 0 : i32
    %c0_i32_2 = arith.constant 0 : i32
    %c0_i32_3 = arith.constant 0 : i32
    return %arg0, %c0_i32, %c0_i32_0, %c0_i32_1, %c0_i32_2 : i32, i32, i32, i32, i32
  }
  func.func @transform_8(%arg0: i32) -> (i32, i32, i32) {
    %c0_i32 = arith.constant 0 : i32
    %c0_i32_0 = arith.constant 0 : i32
    %c0_i32_1 = arith.constant 0 : i32
    return %arg0, %c0_i32, %c0_i32_0 : i32, i32, i32
  }
  func.func @transform_9(%arg0: i32) -> (i32, i32, i32) {
    %c0_i32 = arith.constant 0 : i32
    %c0_i32_0 = arith.constant 0 : i32
    %c0_i32_1 = arith.constant 0 : i32
    return %arg0, %c0_i32, %c0_i32_0 : i32, i32, i32
  }
}

module attributes {stable_mosaic.version = 11 : i64} {
  func.func @_fused_conv_kernel(%arg0: i32, %arg1: memref<2x8x8x64xf32, #tpu.memory_space<vmem>>, %arg2: memref<1x1x1x64xf32, #tpu.memory_space<vmem>>, %arg3: memref<1x1x1x64xf32, #tpu.memory_space<vmem>>, %arg4: memref<128x128xf32, #tpu.memory_space<vmem>>, %arg5: memref<128x128xf32, #tpu.memory_space<vmem>>, %arg6: memref<128x128xf32, #tpu.memory_space<vmem>>, %arg7: memref<1x1x1x128xf32, #tpu.memory_space<vmem>>, %arg8: memref<2x8x2x8x128xf32, #tpu.memory_space<vmem>>, %arg9: memref<1x1x128xf32, #tpu.memory_space<vmem>>, %arg10: memref<1x1x128xf32, #tpu.memory_space<vmem>>, %arg11: memref<2x9x9x64xf32, #tpu.memory_space<vmem>>) attributes {dimension_semantics = [#tpu.dimension_semantics<parallel>], iteration_bounds = array<i64: 1>, scalar_prefetch = 0 : i64, scratch_operands = 1 : i64, tpu.core_type = #tpu.core_type<tc>, window_params = [{transform_indices = @transform_0, window_bounds = array<i64: 2, 8, 8, 64>}, {pipeline_mode = #tpu.pipeline_mode<synchronous>, transform_indices = @transform_1, window_bounds = array<i64: 1, 1, 1, 64>}, {pipeline_mode = #tpu.pipeline_mode<synchronous>, transform_indices = @transform_2, window_bounds = array<i64: 1, 1, 1, 64>}, {pipeline_mode = #tpu.pipeline_mode<synchronous>, transform_indices = @transform_3, window_bounds = array<i64: 128, 128>}, {pipeline_mode = #tpu.pipeline_mode<synchronous>, transform_indices = @transform_4, window_bounds = array<i64: 128, 128>}, {pipeline_mode = #tpu.pipeline_mode<synchronous>, transform_indices = @transform_5, window_bounds = array<i64: 128, 128>}, {pipeline_mode = #tpu.pipeline_mode<synchronous>, transform_indices = @transform_6, window_bounds = array<i64: 1, 1, 1, 128>}, {transform_indices = @transform_7, window_bounds = array<i64: 2, 8, 2, 8, 128>}, {transform_indices = @transform_8, window_bounds = array<i64: 1, 1, 128>}, {transform_indices = @transform_9, window_bounds = array<i64: 1, 1, 128>}]} {
    %c0 = arith.constant 0 : index
    %c0_0 = arith.constant 0 : index
    %c0_1 = arith.constant 0 : index
    %c0_2 = arith.constant 0 : index
    %0 = vector.load %arg1[%c0, %c0_0, %c0_1, %c0_2] : memref<2x8x8x64xf32, #tpu.memory_space<vmem>>, vector<2x8x8x64xf32>
    %c0_3 = arith.constant 0 : index
    %c0_4 = arith.constant 0 : index
    %c0_5 = arith.constant 0 : index
    %c0_6 = arith.constant 0 : index
    %1 = vector.load %arg2[%c0_3, %c0_4, %c0_5, %c0_6] : memref<1x1x1x64xf32, #tpu.memory_space<vmem>>, vector<1x1x1x64xf32>
    %2 = vector.broadcast %1 : vector<1x1x1x64xf32> to vector<2x8x8x64xf32>
    %3 = arith.mulf %0, %2 : vector<2x8x8x64xf32>
    %c0_7 = arith.constant 0 : index
    %c0_8 = arith.constant 0 : index
    %c0_9 = arith.constant 0 : index
    %c0_10 = arith.constant 0 : index
    %4 = vector.load %arg3[%c0_7, %c0_8, %c0_9, %c0_10] : memref<1x1x1x64xf32, #tpu.memory_space<vmem>>, vector<1x1x1x64xf32>
    %5 = vector.broadcast %4 : vector<1x1x1x64xf32> to vector<2x8x8x64xf32>
    %6 = arith.addf %3, %5 : vector<2x8x8x64xf32>
    %cst = arith.constant 0.000000e+00 : f32
    %7 = vector.broadcast %cst : f32 to vector<2x8x8x64xf32>
    %8 = arith.cmpf oge, %6, %7 : vector<2x8x8x64xf32>
    %cst_11 = arith.constant 0.00999999977 : f32
    %9 = vector.broadcast %cst_11 : f32 to vector<2x8x8x64xf32>
    %10 = arith.mulf %9, %6 : vector<2x8x8x64xf32>
    %11 = arith.select %8, %6, %10 : vector<2x8x8x64xi1>, vector<2x8x8x64xf32>
    %c0_12 = arith.constant 0 : index
    %c0_13 = arith.constant 0 : index
    %c0_14 = arith.constant 0 : index
    %c0_15 = arith.constant 0 : index
    %12 = vector.load %arg11[%c0_12, %c0_13, %c0_14, %c0_15] : memref<2x9x9x64xf32, #tpu.memory_space<vmem>>, vector<2x8x8x64xf32>
    tpu.vector_store %arg11[%c0_12, %c0_13, %c0_14, %c0_15], %11 {strides = array<i32>} : memref<2x9x9x64xf32, #tpu.memory_space<vmem>>, vector<2x8x8x64xf32>,
    %cst_16 = arith.constant 0.000000e+00 : f32
    %13 = vector.broadcast %cst_16 : f32 to vector<2x1x9x64xf32>
    %c0_17 = arith.constant 0 : index
    %c8 = arith.constant 8 : index
    %c0_18 = arith.constant 0 : index
    %c0_19 = arith.constant 0 : index
    %14 = vector.load %arg11[%c0_17, %c8, %c0_18, %c0_19] : memref<2x9x9x64xf32, #tpu.memory_space<vmem>>, vector<2x1x9x64xf32>
    tpu.vector_store %arg11[%c0_17, %c8, %c0_18, %c0_19], %13 {strides = array<i32>} : memref<2x9x9x64xf32, #tpu.memory_space<vmem>>, vector<2x1x9x64xf32>,
    %cst_20 = arith.constant 0.000000e+00 : f32
    %15 = vector.broadcast %cst_20 : f32 to vector<2x8x1x64xf32>
    %c0_21 = arith.constant 0 : index
    %c0_22 = arith.constant 0 : index
    %c8_23 = arith.constant 8 : index
    %c0_24 = arith.constant 0 : index
    %16 = vector.load %arg11[%c0_21, %c0_22, %c8_23, %c0_24] : memref<2x9x9x64xf32, #tpu.memory_space<vmem>>, vector<2x8x1x64xf32>
    tpu.vector_store %arg11[%c0_21, %c0_22, %c8_23, %c0_24], %15 {strides = array<i32>} : memref<2x9x9x64xf32, #tpu.memory_space<vmem>>, vector<2x8x1x64xf32>,
    %c0_25 = arith.constant 0 : index
    %c0_26 = arith.constant 0 : index
    %c0_27 = arith.constant 0 : index
    %c0_28 = arith.constant 0 : index
    %17 = vector.load %arg11[%c0_25, %c0_26, %c0_27, %c0_28] : memref<2x9x9x64xf32, #tpu.memory_space<vmem>>, vector<2x9x8x64xf32>
    %c0_29 = arith.constant 0 : index
    %c0_30 = arith.constant 0 : index
    %c1 = arith.constant 1 : index
    %c0_31 = arith.constant 0 : index
    %18 = vector.load %arg11[%c0_29, %c0_30, %c1, %c0_31] : memref<2x9x9x64xf32, #tpu.memory_space<vmem>>, vector<2x9x8x64xf32>
    %19 = tpu.concatenate %17, %18 in 3 : vector<2x9x8x64xf32>, vector<2x9x8x64xf32> -> vector<2x9x8x128xf32>
    %20 = vector.extract_strided_slice %19 {offsets = [0, 0, 0, 0], sizes = [2, 8, 8, 128], strides = [1, 1, 1, 1]} : vector<2x9x8x128xf32> to vector<2x8x8x128xf32>
    %21 = vector.extract_strided_slice %19 {offsets = [0, 1, 0, 0], sizes = [2, 8, 8, 128], strides = [1, 1, 1, 1]} : vector<2x9x8x128xf32> to vector<2x8x8x128xf32>
    %c0_32 = arith.constant 0 : index
    %c0_33 = arith.constant 0 : index
    %c0_34 = arith.constant 0 : index
    %c0_35 = arith.constant 0 : index
    %22 = vector.load %arg7[%c0_32, %c0_33, %c0_34, %c0_35] : memref<1x1x1x128xf32, #tpu.memory_space<vmem>>, vector<1x1x1x128xf32>
    %c0_36 = arith.constant 0 : index
    %c0_37 = arith.constant 0 : index
    %23 = vector.load %arg4[%c0_36, %c0_37] : memref<128x128xf32, #tpu.memory_space<vmem>>, vector<128x128xf32>
    "tpu.trace_start"() <{level = 10 : i32, message = "bhwk,kn->bhwn"}> : () -> ()
    %cst_38 = arith.constant dense<0.000000e+00> : vector<2x8x8x128xf32>
    %24 = tpu.matmul %20, %23, %cst_38 {dimension_numbers = #tpu.dot_dimension_numbers<[3], [0], [0, 1, 2], [1], [0, 0, 0, 1, 0, 2, 1, 1], [], []>} : vector<2x8x8x128xf32>, vector<128x128xf32>, vector<2x8x8x128xf32> -> vector<2x8x8x128xf32>
    "tpu.trace_stop"() : () -> ()
    %25 = vector.broadcast %22 : vector<1x1x1x128xf32> to vector<2x8x8x128xf32>
    %26 = arith.addf %24, %25 : vector<2x8x8x128xf32>
    %c0_39 = arith.constant 0 : index
    %c0_40 = arith.constant 0 : index
    %27 = vector.load %arg5[%c0_39, %c0_40] : memref<128x128xf32, #tpu.memory_space<vmem>>, vector<128x128xf32>
    "tpu.trace_start"() <{level = 10 : i32, message = "bhwk,kn->bhwn"}> : () -> ()
    %cst_41 = arith.constant dense<0.000000e+00> : vector<2x8x8x128xf32>
    %28 = tpu.matmul %20, %27, %cst_41 {dimension_numbers = #tpu.dot_dimension_numbers<[3], [0], [0, 1, 2], [1], [0, 0, 0, 1, 0, 2, 1, 1], [], []>} : vector<2x8x8x128xf32>, vector<128x128xf32>, vector<2x8x8x128xf32> -> vector<2x8x8x128xf32>
    "tpu.trace_stop"() : () -> ()
    %c0_42 = arith.constant 0 : index
    %c0_43 = arith.constant 0 : index
    %29 = vector.load %arg6[%c0_42, %c0_43] : memref<128x128xf32, #tpu.memory_space<vmem>>, vector<128x128xf32>
    "tpu.trace_start"() <{level = 10 : i32, message = "bhwk,kn->bhwn"}> : () -> ()
    %cst_44 = arith.constant dense<0.000000e+00> : vector<2x8x8x128xf32>
    %30 = tpu.matmul %21, %29, %cst_44 {dimension_numbers = #tpu.dot_dimension_numbers<[3], [0], [0, 1, 2], [1], [0, 0, 0, 1, 0, 2, 1, 1], [], []>} : vector<2x8x8x128xf32>, vector<128x128xf32>, vector<2x8x8x128xf32> -> vector<2x8x8x128xf32>
    "tpu.trace_stop"() : () -> ()
    %31 = arith.addf %28, %30 : vector<2x8x8x128xf32>
    %32 = vector.broadcast %22 : vector<1x1x1x128xf32> to vector<2x8x8x128xf32>
    %33 = arith.addf %31, %32 : vector<2x8x8x128xf32>
    %34 = vector.shape_cast %26 : vector<2x8x8x128xf32> to vector<2x8x1x8x128xf32>
    %c0_45 = arith.constant 0 : index
    %c0_46 = arith.constant 0 : index
    %c0_47 = arith.constant 0 : index
    %c0_48 = arith.constant 0 : index
    %c0_49 = arith.constant 0 : index
    %35 = vector.load %arg8[%c0_45, %c0_46, %c0_47, %c0_48, %c0_49] : memref<2x8x2x8x128xf32, #tpu.memory_space<vmem>>, vector<2x8x1x8x128xf32>
    tpu.vector_store %arg8[%c0_45, %c0_46, %c0_47, %c0_48, %c0_49], %34 {strides = array<i32>} : memref<2x8x2x8x128xf32, #tpu.memory_space<vmem>>, vector<2x8x1x8x128xf32>,
    %36 = vector.shape_cast %33 : vector<2x8x8x128xf32> to vector<2x8x1x8x128xf32>
    %c0_50 = arith.constant 0 : index
    %c0_51 = arith.constant 0 : index
    %c1_52 = arith.constant 1 : index
    %c0_53 = arith.constant 0 : index
    %c0_54 = arith.constant 0 : index
    %37 = vector.load %arg8[%c0_50, %c0_51, %c1_52, %c0_53, %c0_54] : memref<2x8x2x8x128xf32, #tpu.memory_space<vmem>>, vector<2x8x1x8x128xf32>
    tpu.vector_store %arg8[%c0_50, %c0_51, %c1_52, %c0_53, %c0_54], %36 {strides = array<i32>} : memref<2x8x2x8x128xf32, #tpu.memory_space<vmem>>, vector<2x8x1x8x128xf32>,
    %cst_55 = arith.constant dense<0.000000e+00> : vector<128xf32>
    %38 = vector.multi_reduction <add>, %26, %cst_55 [0, 1, 2] : vector<2x8x8x128xf32> to vector<128xf32>
    %39 = vector.shape_cast %38 : vector<128xf32> to vector<1x1x1x128xf32>
    %cst_56 = arith.constant dense<0.000000e+00> : vector<128xf32>
    %40 = vector.multi_reduction <add>, %33, %cst_56 [0, 1, 2] : vector<2x8x8x128xf32> to vector<128xf32>
    %41 = vector.shape_cast %40 : vector<128xf32> to vector<1x1x1x128xf32>
    %42 = arith.addf %39, %41 : vector<1x1x1x128xf32>
    %cst_57 = arith.constant 3.906250e-03 : f32
    %43 = vector.broadcast %cst_57 : f32 to vector<1x1x1x128xf32>
    %44 = arith.mulf %42, %43 : vector<1x1x1x128xf32>
    %45 = vector.broadcast %44 : vector<1x1x1x128xf32> to vector<2x8x8x128xf32>
    %46 = arith.subf %26, %45 : vector<2x8x8x128xf32>
    %47 = vector.broadcast %44 : vector<1x1x1x128xf32> to vector<2x8x8x128xf32>
    %48 = arith.subf %33, %47 : vector<2x8x8x128xf32>
    %49 = arith.mulf %46, %46 : vector<2x8x8x128xf32>
    %cst_58 = arith.constant dense<0.000000e+00> : vector<128xf32>
    %50 = vector.multi_reduction <add>, %49, %cst_58 [0, 1, 2] : vector<2x8x8x128xf32> to vector<128xf32>
    %51 = vector.shape_cast %50 : vector<128xf32> to vector<1x1x1x128xf32>
    %52 = arith.mulf %48, %48 : vector<2x8x8x128xf32>
    %cst_59 = arith.constant dense<0.000000e+00> : vector<128xf32>
    %53 = vector.multi_reduction <add>, %52, %cst_59 [0, 1, 2] : vector<2x8x8x128xf32> to vector<128xf32>
    %54 = vector.shape_cast %53 : vector<128xf32> to vector<1x1x1x128xf32>
    %55 = arith.addf %51, %54 : vector<1x1x1x128xf32>
    %56 = vector.shape_cast %44 : vector<1x1x1x128xf32> to vector<1x1x128xf32>
    %c0_60 = arith.constant 0 : index
    %c0_61 = arith.constant 0 : index
    %c0_62 = arith.constant 0 : index
    %57 = vector.load %arg9[%c0_60, %c0_61, %c0_62] : memref<1x1x128xf32, #tpu.memory_space<vmem>>, vector<1x1x128xf32>
    tpu.vector_store %arg9[%c0_60, %c0_61, %c0_62], %56 {strides = array<i32>} : memref<1x1x128xf32, #tpu.memory_space<vmem>>, vector<1x1x128xf32>,
    %58 = vector.shape_cast %55 : vector<1x1x1x128xf32> to vector<1x1x128xf32>
    %c0_63 = arith.constant 0 : index
    %c0_64 = arith.constant 0 : index
    %c0_65 = arith.constant 0 : index
    %59 = vector.load %arg10[%c0_63, %c0_64, %c0_65] : memref<1x1x128xf32, #tpu.memory_space<vmem>>, vector<1x1x128xf32>
    tpu.vector_store %arg10[%c0_63, %c0_64, %c0_65], %58 {strides = array<i32>} : memref<1x1x128xf32, #tpu.memory_space<vmem>>, vector<1x1x128xf32>,
    return
  }
  func.func @transform_0(%arg0: i32) -> (i32, i32, i32, i32) {
    %c0_i32 = arith.constant 0 : i32
    %c0_i32_0 = arith.constant 0 : i32
    %c0_i32_1 = arith.constant 0 : i32
    %c0_i32_2 = arith.constant 0 : i32
    return %arg0, %c0_i32, %c0_i32_0, %c0_i32_1 : i32, i32, i32, i32
  }
  func.func @transform_1(%arg0: i32) -> (i32, i32, i32, i32) {
    %c0_i32 = arith.constant 0 : i32
    %c0_i32_0 = arith.constant 0 : i32
    %c0_i32_1 = arith.constant 0 : i32
    %c0_i32_2 = arith.constant 0 : i32
    %c0_i32_3 = arith.constant 0 : i32
    return %c0_i32, %c0_i32_0, %c0_i32_1, %c0_i32_2 : i32, i32, i32, i32
  }
  func.func @transform_2(%arg0: i32) -> (i32, i32, i32, i32) {
    %c0_i32 = arith.constant 0 : i32
    %c0_i32_0 = arith.constant 0 : i32
    %c0_i32_1 = arith.constant 0 : i32
    %c0_i32_2 = arith.constant 0 : i32
    %c0_i32_3 = arith.constant 0 : i32
    return %c0_i32, %c0_i32_0, %c0_i32_1, %c0_i32_2 : i32, i32, i32, i32
  }
  func.func @transform_3(%arg0: i32) -> (i32, i32) {
    %c0_i32 = arith.constant 0 : i32
    %c0_i32_0 = arith.constant 0 : i32
    %c0_i32_1 = arith.constant 0 : i32
    return %c0_i32, %c0_i32_0 : i32, i32
  }
  func.func @transform_4(%arg0: i32) -> (i32, i32) {
    %c0_i32 = arith.constant 0 : i32
    %c0_i32_0 = arith.constant 0 : i32
    %c0_i32_1 = arith.constant 0 : i32
    return %c0_i32, %c0_i32_0 : i32, i32
  }
  func.func @transform_5(%arg0: i32) -> (i32, i32) {
    %c0_i32 = arith.constant 0 : i32
    %c0_i32_0 = arith.constant 0 : i32
    %c0_i32_1 = arith.constant 0 : i32
    return %c0_i32, %c0_i32_0 : i32, i32
  }
  func.func @transform_6(%arg0: i32) -> (i32, i32, i32, i32) {
    %c0_i32 = arith.constant 0 : i32
    %c0_i32_0 = arith.constant 0 : i32
    %c0_i32_1 = arith.constant 0 : i32
    %c0_i32_2 = arith.constant 0 : i32
    %c0_i32_3 = arith.constant 0 : i32
    return %c0_i32, %c0_i32_0, %c0_i32_1, %c0_i32_2 : i32, i32, i32, i32
  }
  func.func @transform_7(%arg0: i32) -> (i32, i32, i32, i32, i32) {
    %c0_i32 = arith.constant 0 : i32
    %c0_i32_0 = arith.constant 0 : i32
    %c0_i32_1 = arith.constant 0 : i32
    %c0_i32_2 = arith.constant 0 : i32
    %c0_i32_3 = arith.constant 0 : i32
    return %arg0, %c0_i32, %c0_i32_0, %c0_i32_1, %c0_i32_2 : i32, i32, i32, i32, i32
  }
  func.func @transform_8(%arg0: i32) -> (i32, i32, i32) {
    %c0_i32 = arith.constant 0 : i32
    %c0_i32_0 = arith.constant 0 : i32
    %c0_i32_1 = arith.constant 0 : i32
    return %arg0, %c0_i32, %c0_i32_0 : i32, i32, i32
  }
  func.func @transform_9(%arg0: i32) -> (i32, i32, i32) {
    %c0_i32 = arith.constant 0 : i32
    %c0_i32_0 = arith.constant 0 : i32
    %c0_i32_1 = arith.constant 0 : i32
    return %arg0, %c0_i32, %c0_i32_0 : i32, i32, i32
  }
}

module attributes {stable_mosaic.version = 11 : i64} {
  func.func @_bn_lrelu_kernel(%arg0: i32, %arg1: memref<2x16x16x64xf32, #tpu.memory_space<vmem>>, %arg2: memref<1x1x1x64xf32, #tpu.memory_space<vmem>>, %arg3: memref<1x1x1x64xf32, #tpu.memory_space<vmem>>, %arg4: memref<2x16x16x64xf32, #tpu.memory_space<vmem>>) attributes {dimension_semantics = [#tpu.dimension_semantics<parallel>], iteration_bounds = array<i64: 1>, scalar_prefetch = 0 : i64, scratch_operands = 0 : i64, tpu.core_type = #tpu.core_type<tc>, window_params = [{transform_indices = @transform_0, window_bounds = array<i64: 2, 16, 16, 64>}, {pipeline_mode = #tpu.pipeline_mode<synchronous>, transform_indices = @transform_1, window_bounds = array<i64: 1, 1, 1, 64>}, {pipeline_mode = #tpu.pipeline_mode<synchronous>, transform_indices = @transform_2, window_bounds = array<i64: 1, 1, 1, 64>}, {transform_indices = @transform_3, window_bounds = array<i64: 2, 16, 16, 64>}]} {
    %c0 = arith.constant 0 : index
    %c0_0 = arith.constant 0 : index
    %c0_1 = arith.constant 0 : index
    %c0_2 = arith.constant 0 : index
    %0 = vector.load %arg1[%c0, %c0_0, %c0_1, %c0_2] : memref<2x16x16x64xf32, #tpu.memory_space<vmem>>, vector<2x16x16x64xf32>
    %c0_3 = arith.constant 0 : index
    %c0_4 = arith.constant 0 : index
    %c0_5 = arith.constant 0 : index
    %c0_6 = arith.constant 0 : index
    %1 = vector.load %arg2[%c0_3, %c0_4, %c0_5, %c0_6] : memref<1x1x1x64xf32, #tpu.memory_space<vmem>>, vector<1x1x1x64xf32>
    %2 = vector.broadcast %1 : vector<1x1x1x64xf32> to vector<2x16x16x64xf32>
    %3 = arith.mulf %0, %2 : vector<2x16x16x64xf32>
    %c0_7 = arith.constant 0 : index
    %c0_8 = arith.constant 0 : index
    %c0_9 = arith.constant 0 : index
    %c0_10 = arith.constant 0 : index
    %4 = vector.load %arg3[%c0_7, %c0_8, %c0_9, %c0_10] : memref<1x1x1x64xf32, #tpu.memory_space<vmem>>, vector<1x1x1x64xf32>
    %5 = vector.broadcast %4 : vector<1x1x1x64xf32> to vector<2x16x16x64xf32>
    %6 = arith.addf %3, %5 : vector<2x16x16x64xf32>
    %cst = arith.constant 0.000000e+00 : f32
    %7 = vector.broadcast %cst : f32 to vector<2x16x16x64xf32>
    %8 = arith.cmpf oge, %6, %7 : vector<2x16x16x64xf32>
    %cst_11 = arith.constant 0.00999999977 : f32
    %9 = vector.broadcast %cst_11 : f32 to vector<2x16x16x64xf32>
    %10 = arith.mulf %9, %6 : vector<2x16x16x64xf32>
    %11 = arith.select %8, %6, %10 : vector<2x16x16x64xi1>, vector<2x16x16x64xf32>
    %c0_12 = arith.constant 0 : index
    %c0_13 = arith.constant 0 : index
    %c0_14 = arith.constant 0 : index
    %c0_15 = arith.constant 0 : index
    %12 = vector.load %arg4[%c0_12, %c0_13, %c0_14, %c0_15] : memref<2x16x16x64xf32, #tpu.memory_space<vmem>>, vector<2x16x16x64xf32>
    tpu.vector_store %arg4[%c0_12, %c0_13, %c0_14, %c0_15], %11 {strides = array<i32>} : memref<2x16x16x64xf32, #tpu.memory_space<vmem>>, vector<2x16x16x64xf32>,
    return
  }
  func.func @transform_0(%arg0: i32) -> (i32, i32, i32, i32) {
    %c0_i32 = arith.constant 0 : i32
    %c0_i32_0 = arith.constant 0 : i32
    %c0_i32_1 = arith.constant 0 : i32
    %c0_i32_2 = arith.constant 0 : i32
    return %arg0, %c0_i32, %c0_i32_0, %c0_i32_1 : i32, i32, i32, i32
  }
  func.func @transform_1(%arg0: i32) -> (i32, i32, i32, i32) {
    %c0_i32 = arith.constant 0 : i32
    %c0_i32_0 = arith.constant 0 : i32
    %c0_i32_1 = arith.constant 0 : i32
    %c0_i32_2 = arith.constant 0 : i32
    %c0_i32_3 = arith.constant 0 : i32
    return %c0_i32, %c0_i32_0, %c0_i32_1, %c0_i32_2 : i32, i32, i32, i32
  }
  func.func @transform_2(%arg0: i32) -> (i32, i32, i32, i32) {
    %c0_i32 = arith.constant 0 : i32
    %c0_i32_0 = arith.constant 0 : i32
    %c0_i32_1 = arith.constant 0 : i32
    %c0_i32_2 = arith.constant 0 : i32
    %c0_i32_3 = arith.constant 0 : i32
    return %c0_i32, %c0_i32_0, %c0_i32_1, %c0_i32_2 : i32, i32, i32, i32
  }
  func.func @transform_3(%arg0: i32) -> (i32, i32, i32, i32) {
    %c0_i32 = arith.constant 0 : i32
    %c0_i32_0 = arith.constant 0 : i32
    %c0_i32_1 = arith.constant 0 : i32
    %c0_i32_2 = arith.constant 0 : i32
    return %arg0, %c0_i32, %c0_i32_0, %c0_i32_1 : i32, i32, i32, i32
  }
}

</mosaic_0001>

<llo_original>
// kernel: a_call__.3
$region0: #{a_call__.3}
  #allocation0 [shape = 'u32[]', space=smem, size = 0x4, offset = 0x4, fixed_abs, tag = 'smem constant byte address 0x4 - core index']
  #allocation1 [shape = 'u32[144,128]{1,0:T(1,128)}', space=vmem, size = 0x12000, scoped, tag = 'internal scratch']
  #allocation2 [shape = 'f32[2,5,5,64]{3,2,1,0:T(8,128)}', space=vmem, size = 0xa000, scoped, tag = 'scratch operand']
  %s0 = inlined_call_operand.vmem [shape: f32[2,4,4,64], index: 0, kind: input, shape index: {}]
  %s1 = inlined_call_operand.vmem [shape: f32[1,1,1,64], index: 1, kind: input, shape index: {}]
  %s2 = inlined_call_operand.vmem [shape: f32[1,1,1,64], index: 2, kind: input, shape index: {}]
  %s3 = inlined_call_operand.hbm [shape: f32[128,128], index: 3, kind: input, shape index: {}]
  %s4 = inlined_call_operand.hbm [shape: f32[128,128], index: 4, kind: input, shape index: {}]
  %s5 = inlined_call_operand.vmem [shape: f32[128,128], index: 5, kind: input, shape index: {}]
  %s6 = inlined_call_operand.vmem [shape: f32[1,1,1,128], index: 6, kind: input, shape index: {}]
  %s7 = inlined_call_operand.vmem [shape: f32[2,4,2,4,128], index: 7, kind: output, shape index: {0}]
  %s8 = inlined_call_operand.vmem [shape: f32[1,1,128], index: 8, kind: output, shape index: {1}]
  %s9 = inlined_call_operand.vmem [shape: f32[1,1,128], index: 9, kind: output, shape index: {2}]
  %10 = xla_tuple %s7, %s8, %s9
  %s11 = sld [smem:[#allocation0]]
  $region62: #{a_call__.3} parent=0
    _
  %s13 = ssub.s32 1, %s11
  %s14 = scalar_select 0, %s13, %s11
  $region1: #{a_call__.3} parent=0
    #allocation3 [shape = 'u8[65536]{0}', space=vmem, size = 0x10000, scoped, tag = 'input window, operand 3, single buffered']
    #allocation4 [shape = 's32[1]{0}', space=sflag, size = 0x4, scoped, tag = 'scoped memory for a_call__.3']
    #allocation5 [shape = 'u8[65536]{0}', space=vmem, size = 0x10000, scoped, tag = 'input window, operand 4, single buffered']
    #allocation6 [shape = 's32[1]{0}', space=sflag, size = 0x4, scoped, tag = 'scoped memory for a_call__.3']
    %15 = vsyncpa [#allocation4], 0
    %16 = vsyncpa [#allocation6], 0
    // Predicated region
    $region2: #{a_call__.3} parent=1 // pred_check
      _
    $region3: #{a_call__.3} parent=1 // pred_check_branch
      %18 = sbr.rel (0) target = $region5
    $region4: #{a_call__.3} parent=1 // pred_region
      _
    $region5: #{a_call__.3} parent=1 // pred_fallthru
      _
    // Predicated region
    $region6: #{a_call__.3} parent=1 // pred_check
      _
    $region7: #{a_call__.3} parent=1 // pred_check_branch
      %20 = sbr.rel (0) target = $region9
    $region8: #{a_call__.3} parent=1 // pred_region
      _
    $region9: #{a_call__.3} parent=1 // pred_fallthru
      _
    // Predicated region
    $region10: #{a_call__.3} parent=1 // pred_check
      _
    $region11: #{a_call__.3} parent=1 // pred_check_branch
      %22 = sbr.rel (0) target = $region13
    $region12: #{a_call__.3} parent=1 // pred_region
      _
    $region13: #{a_call__.3} parent=1 // pred_fallthru
      _
    // Predicated region
    $region14: #{a_call__.3} parent=1 // pred_check
      _
    $region15: #{a_call__.3} parent=1 // pred_check_branch
      %24 = sbr.rel (0) target = $region17
    $region16: #{a_call__.3} parent=1 // pred_region
      %s26 = ssub.s32 2048, 2048
      %27 = vsyncadd [#allocation4], %s26
      %s28 = sshll.u32 [#allocation3], 4
      %s29 = int_to_ptr.vmem [resolvable:$true] %s28
      %34 = dma.hbm_to_vmem [thread:$0]  %s3, 2048, %s29, [#allocation4], 128, 128, 8
    $region17: #{a_call__.3} parent=1 // pred_fallthru
      _
    // Predicated region
    $region18: #{a_call__.3} parent=1 // pred_check
      _
    $region19: #{a_call__.3} parent=1 // pred_check_branch
      %36 = sbr.rel (0) target = $region21
    $region20: #{a_call__.3} parent=1 // pred_region
      %s38 = ssub.s32 2048, 2048
      %39 = vsyncadd [#allocation6], %s38
      %s40 = sshll.u32 [#allocation5], 4
      %s41 = int_to_ptr.vmem [resolvable:$true] %s40
      %46 = dma.hbm_to_vmem [thread:$0]  %s4, 2048, %s41, [#allocation6], 128, 128, 8
    $region21: #{a_call__.3} parent=1 // pred_fallthru
      _
    // Predicated region
    $region22: #{a_call__.3} parent=1 // pred_check
      _
    $region23: #{a_call__.3} parent=1 // pred_check_branch
      %48 = sbr.rel (0) target = $region25
    $region24: #{a_call__.3} parent=1 // pred_region
      _
    $region25: #{a_call__.3} parent=1 // pred_fallthru
      _
    // Predicated region
    $region26: #{a_call__.3} parent=1 // pred_check
      _
    $region27: #{a_call__.3} parent=1 // pred_check_branch
      %50 = sbr.rel (0) target = $region29
    $region28: #{a_call__.3} parent=1 // pred_region
      _
    $region29: #{a_call__.3} parent=1 // pred_fallthru
      _
    // Predicated region
    $region30: #{a_call__.3} parent=1 // pred_check
      _
    $region31: #{a_call__.3} parent=1 // pred_check_branch
      %52 = sbr.rel (0) target = $region33
    $region32: #{a_call__.3} parent=1 // pred_region
      %53 = dma.done [#allocation4], 2048
    $region33: #{a_call__.3} parent=1 // pred_fallthru
      _
    // Predicated region
    $region34: #{a_call__.3} parent=1 // pred_check
      _
    $region35: #{a_call__.3} parent=1 // pred_check_branch
      %55 = sbr.rel (0) target = $region37
    $region36: #{a_call__.3} parent=1 // pred_region
      %56 = dma.done [#allocation6], 2048
    $region37: #{a_call__.3} parent=1 // pred_fallthru
      _
    %v57 = vld [vmem:[%s0] sm:$0xf]
    %v58 = vld [vmem:[%s0 + $0x4] sm:$0xf]
    %v59 = vld [vmem:[%s0 + $0x8] sm:$0xf]
    %v60 = vld [vmem:[%s0 + $0xc] sm:$0xf]
    %v61 = vld [vmem:[%s0 + $0x10] sm:$0xf]
    %v62 = vld [vmem:[%s0 + $0x14] sm:$0xf]
    %v63 = vld [vmem:[%s0 + $0x18] sm:$0xf]
    %v64 = vld [vmem:[%s0 + $0x1c] sm:$0xf]
    %vm65 = vcmask 519168
    %66 = vst.msk [vmem:[#allocation2] sm:$0xf] %vm65, %v57
    %67 = vst.msk [vmem:[#allocation2 + $0x8] sm:$0xf] %vm65, %v58
    %68 = vst.msk [vmem:[#allocation2 + $0x10] sm:$0xf] %vm65, %v59
    %69 = vst.msk [vmem:[#allocation2 + $0x18] sm:$0xf] %vm65, %v60
    %70 = vst.msk [vmem:[#allocation2 + $0x28] sm:$0xf] %vm65, %v61
    %71 = vst.msk [vmem:[#allocation2 + $0x30] sm:$0xf] %vm65, %v62
    %72 = vst.msk [vmem:[#allocation2 + $0x38] sm:$0xf] %vm65, %v63
    %73 = vst.msk [vmem:[#allocation2 + $0x40] sm:$0xf] %vm65, %v64
    %s74 = scalar_lea.vmem [#allocation2], 32
    %vm75 = vcmask 520192
    %76 = vst.msk [vmem:[%s74] sm:$0x1f] %vm75, 0.0
    %77 = vst.msk [vmem:[%s74 + $0x28] sm:$0x1f] %vm75, 0.0
    %vm78 = vcmask 516096
    %79 = vst.msk [vmem:[#allocation2 + $0x4] sm:$0x1] %vm78, 0.0
    %80 = vst.msk [vmem:[#allocation2 + $0xc] sm:$0x1] %vm78, 0.0
    %81 = vst.msk [vmem:[#allocation2 + $0x14] sm:$0x1] %vm78, 0.0
    %82 = vst.msk [vmem:[#allocation2 + $0x1c] sm:$0x1] %vm78, 0.0
    %83 = vst.msk [vmem:[#allocation2 + $0x2c] sm:$0x1] %vm78, 0.0
    %84 = vst.msk [vmem:[#allocation2 + $0x34] sm:$0x1] %vm78, 0.0
    %85 = vst.msk [vmem:[#allocation2 + $0x3c] sm:$0x1] %vm78, 0.0
    %86 = vst.msk [vmem:[#allocation2 + $0x44] sm:$0x1] %vm78, 0.0
    %v87 = vld [vmem:[#allocation2] sm:$0xf]
    %v88 = vld [vmem:[#allocation2 + $0x8] sm:$0xf]
    %v89 = vld [vmem:[#allocation2 + $0x10] sm:$0xf]
    %v90 = vld [vmem:[#allocation2 + $0x18] sm:$0xf]
    %v91 = vld [vmem:[#allocation2 + $0x20] sm:$0xf]
    %v92 = vld [vmem:[#allocation2 + $0x28] sm:$0xf]
    %v93 = vld [vmem:[#allocation2 + $0x30] sm:$0xf]
    %v94 = vld [vmem:[#allocation2 + $0x38] sm:$0xf]
    %v95 = vld [vmem:[#allocation2 + $0x40] sm:$0xf]
    %v96 = vld [vmem:[#allocation2 + $0x48] sm:$0xf]
    %v97 = vld [vmem:[#allocation2 + $0x1] sm:$0xf]
    %v98 = vld [vmem:[#allocation2 + $0x9] sm:$0xf]
    %v99 = vld [vmem:[#allocation2 + $0x11] sm:$0xf]
    %v100 = vld [vmem:[#allocation2 + $0x19] sm:$0xf]
    %v101 = vld [vmem:[#allocation2 + $0x21] sm:$0xf]
    %v102 = vld [vmem:[#allocation2 + $0x29] sm:$0xf]
    %v103 = vld [vmem:[#allocation2 + $0x31] sm:$0xf]
    %v104 = vld [vmem:[#allocation2 + $0x39] sm:$0xf]
    %v105 = vld [vmem:[#allocation2 + $0x41] sm:$0xf]
    %v106 = vld [vmem:[#allocation2 + $0x49] sm:$0xf]
    %117 = vrot.lane.b32.xlu0 %v97, 64
    %v118 = vpop.permute.xlu0 %117
    %119 = vrot.lane.b32.xlu0 %v98, 64
    %v120 = vpop.permute.xlu0 %119
    %121 = vrot.lane.b32.xlu0 %v99, 64
    %v122 = vpop.permute.xlu0 %121
    %123 = vrot.lane.b32.xlu0 %v100, 64
    %v124 = vpop.permute.xlu0 %123
    %125 = vrot.lane.b32.xlu0 %v101, 64
    %v126 = vpop.permute.xlu0 %125
    %127 = vrot.lane.b32.xlu0 %v102, 64
    %v128 = vpop.permute.xlu0 %127
    %129 = vrot.lane.b32.xlu0 %v103, 64
    %v130 = vpop.permute.xlu0 %129
    %131 = vrot.lane.b32.xlu0 %v104, 64
    %v132 = vpop.permute.xlu0 %131
    %133 = vrot.lane.b32.xlu0 %v105, 64
    %v134 = vpop.permute.xlu0 %133
    %135 = vrot.lane.b32.xlu0 %v106, 64
    %v136 = vpop.permute.xlu0 %135
    %vm147 = vcmask 523264
    %v148 = vsel %vm147, %v87, %v118
    %v149 = vsel %vm147, %v88, %v120
    %v150 = vsel %vm147, %v89, %v122
    %v151 = vsel %vm147, %v90, %v124
    %v152 = vsel %vm147, %v91, %v126
    %v153 = vsel %vm147, %v92, %v128
    %v154 = vsel %vm147, %v93, %v130
    %v155 = vsel %vm147, %v94, %v132
    %v156 = vsel %vm147, %v95, %v134
    %v157 = vsel %vm147, %v96, %v136
    %v158 = vld [vmem:[%s6] sm:$0x1]
    %v159 = vld [vmem:[#allocation3] sm:$0xff]
    %v160 = vld [vmem:[#allocation3 + $0x8] sm:$0xff]
    %v161 = vld [vmem:[#allocation3 + $0x10] sm:$0xff]
    %v162 = vld [vmem:[#allocation3 + $0x18] sm:$0xff]
    %v163 = vld [vmem:[#allocation3 + $0x20] sm:$0xff]
    %v164 = vld [vmem:[#allocation3 + $0x28] sm:$0xff]
    %v165 = vld [vmem:[#allocation3 + $0x30] sm:$0xff]
    %v166 = vld [vmem:[#allocation3 + $0x38] sm:$0xff]
    %v167 = vld [vmem:[#allocation3 + $0x40] sm:$0xff]
    %v168 = vld [vmem:[#allocation3 + $0x48] sm:$0xff]
    %v169 = vld [vmem:[#allocation3 + $0x50] sm:$0xff]
    %v170 = vld [vmem:[#allocation3 + $0x58] sm:$0xff]
    %v171 = vld [vmem:[#allocation3 + $0x60] sm:$0xff]
    %v172 = vld [vmem:[#allocation3 + $0x68] sm:$0xff]
    %v173 = vld [vmem:[#allocation3 + $0x70] sm:$0xff]
    %v174 = vld [vmem:[#allocation3 + $0x78] sm:$0xff]
    %v176 = vlaneseq
    %v177 = vshrl.u32 %v176, 7
    %v178 = vsub.s32 0, %v177
    %v179 = vrot.slane %v158, %v178
    %v189 = vcombine.low %v148, %v149
    %v190 = vcombine.low %v150, %v151
    %v191 = vcombine.low %v153, %v154
    %v192 = vcombine.low %v155, %v156
    %v197 = vcombine.low %v179, %v179
    %199 = vmatprep.subr.mxu0 0.0
    %200 = vmatpush1.msra.mxu0 %v159
    %201 = vmatprep.subr.mxu0 0.0
    %202 = vmatpush1.msra.mxu0 %v160
    %203 = vmatprep.subr.mxu0 0.0
    %204 = vmatpush1.msra.mxu0 %v161
    %205 = vmatprep.subr.mxu0 0.0
    %206 = vmatpush1.msra.mxu0 %v162
    %207 = vmatprep.subr.mxu0 0.0
    %208 = vmatpush1.msra.mxu0 %v163
    %209 = vmatprep.subr.mxu0 0.0
    %210 = vmatpush1.msra.mxu0 %v164
    %211 = vmatprep.subr.mxu0 0.0
    %212 = vmatpush1.msra.mxu0 %v165
    %213 = vmatprep.subr.mxu0 0.0
    %214 = vmatpush1.msra.mxu0 %v166
    %215 = vmatprep.subr.mxu0 0.0
    %216 = vmatpush1.msra.mxu0 %v167
    %217 = vmatprep.subr.mxu0 0.0
    %218 = vmatpush1.msra.mxu0 %v168
    %219 = vmatprep.subr.mxu0 0.0
    %220 = vmatpush1.msra.mxu0 %v169
    %221 = vmatprep.subr.mxu0 0.0
    %222 = vmatpush1.msra.mxu0 %v170
    %223 = vmatprep.subr.mxu0 0.0
    %224 = vmatpush1.msra.mxu0 %v171
    %225 = vmatprep.subr.mxu0 0.0
    %226 = vmatpush1.msra.mxu0 %v172
    %227 = vmatprep.subr.mxu0 0.0
    %228 = vmatpush1.msra.mxu0 %v173
    %229 = vmatprep.subr.mxu0 0.0
    %230 = vmatpush1.msra.mxu0 %v174
    %231 = vmatprep.subr.mxu0 0.0
    %232 = vmatpush1.msra.mxu0 0.0
    %233 = vmatprep.subr.mxu0 0.0
    %234 = vmatpush1.msra.mxu0 0.0
    %235 = vmatprep.subr.mxu0 0.0
    %236 = vmatpush1.msra.mxu0 0.0
    %237 = vmatprep.subr.mxu0 0.0
    %238 = vmatpush1.msra.mxu0 0.0
    %239 = vmatprep.subr.mxu0 0.0
    %240 = vmatpush1.msra.mxu0 0.0
    %241 = vmatprep.subr.mxu0 0.0
    %242 = vmatpush1.msra.mxu0 0.0
    %243 = vmatprep.subr.mxu0 0.0
    %244 = vmatpush1.msra.mxu0 0.0
    %245 = vmatprep.subr.mxu0 0.0
    %246 = vmatpush1.msra.mxu0 0.0
    %247 = vmatprep.subr.mxu0 0.0
    %248 = vmatpush1.msra.mxu0 0.0
    %249 = vmatprep.subr.mxu0 0.0
    %250 = vmatpush1.msra.mxu0 0.0
    %251 = vmatprep.subr.mxu0 0.0
    %252 = vmatpush1.msra.mxu0 0.0
    %253 = vmatprep.subr.mxu0 0.0
    %254 = vmatpush1.msra.mxu0 0.0
    %255 = vmatprep.subr.mxu0 0.0
    %256 = vmatpush1.msra.mxu0 0.0
    %257 = vmatprep.subr.mxu0 0.0
    %258 = vmatpush1.msra.mxu0 0.0
    %259 = vmatprep.subr.mxu0 0.0
    %260 = vmatpush1.msra.mxu0 0.0
    %261 = vmatprep.subr.mxu0 0.0
    %262 = vmatpush1.msra.mxu0 0.0
    %263 = vmatprep.mubr.f32.mxu0 0.0
    %264 = vmatmul.mubr.f32.gmra.mrb[0].mxu0 %v189
    %v265 = vpop.f32.mrb[0].mxu0
    %v266 = vadd.f32 %v197, %v265
    %v267 = vpop.f32.mrb[0].mxu0
    %268 = vmatprep.mubr.f32.mxu0 0.0
    %269 = vmatmul.mubr.f32.gmra.mrb[0].mxu0 %v190
    %v270 = vpop.f32.mrb[0].mxu0
    %v271 = vadd.f32 %v197, %v270
    %v272 = vpop.f32.mrb[0].mxu0
    %273 = vmatprep.mubr.f32.mxu0 0.0
    %274 = vmatmul.mubr.f32.gmra.mrb[0].mxu0 %v191
    %v275 = vpop.f32.mrb[0].mxu0
    %v276 = vadd.f32 %v197, %v275
    %v277 = vpop.f32.mrb[0].mxu0
    %278 = vmatprep.mubr.f32.mxu0 0.0
    %279 = vmatmul.mubr.f32.gmra.mrb[0].mxu0 %v192
    %v280 = vpop.f32.mrb[0].mxu0
    %v281 = vadd.f32 %v197, %v280
    %v282 = vpop.f32.mrb[0].mxu0
    %283 = vdwg.mxu0
    %v288 = vcombine.high %v266, %v266
    %v289 = vcombine.high %v271, %v271
    %v290 = vcombine.high %v276, %v276
    %v291 = vcombine.high %v281, %v281
    %v296 = vld [vmem:[#allocation5] sm:$0xff]
    %v297 = vld [vmem:[#allocation5 + $0x8] sm:$0xff]
    %v298 = vld [vmem:[#allocation5 + $0x10] sm:$0xff]
    %v299 = vld [vmem:[#allocation5 + $0x18] sm:$0xff]
    %v300 = vld [vmem:[#allocation5 + $0x20] sm:$0xff]
    %v301 = vld [vmem:[#allocation5 + $0x28] sm:$0xff]
    %v302 = vld [vmem:[#allocation5 + $0x30] sm:$0xff]
    %v303 = vld [vmem:[#allocation5 + $0x38] sm:$0xff]
    %v304 = vld [vmem:[#allocation5 + $0x40] sm:$0xff]
    %v305 = vld [vmem:[#allocation5 + $0x48] sm:$0xff]
    %v306 = vld [vmem:[#allocation5 + $0x50] sm:$0xff]
    %v307 = vld [vmem:[#allocation5 + $0x58] sm:$0xff]
    %v308 = vld [vmem:[#allocation5 + $0x60] sm:$0xff]
    %v309 = vld [vmem:[#allocation5 + $0x68] sm:$0xff]
    %v310 = vld [vmem:[#allocation5 + $0x70] sm:$0xff]
    %v311 = vld [vmem:[#allocation5 + $0x78] sm:$0xff]
    %v312 = vld [vmem:[%s5] sm:$0xff]
    %v313 = vld [vmem:[%s5 + $0x8] sm:$0xff]
    %v314 = vld [vmem:[%s5 + $0x10] sm:$0xff]
    %v315 = vld [vmem:[%s5 + $0x18] sm:$0xff]
    %v316 = vld [vmem:[%s5 + $0x20] sm:$0xff]
    %v317 = vld [vmem:[%s5 + $0x28] sm:$0xff]
    %v318 = vld [vmem:[%s5 + $0x30] sm:$0xff]
    %v319 = vld [vmem:[%s5 + $0x38] sm:$0xff]
    %v320 = vld [vmem:[%s5 + $0x40] sm:$0xff]
    %v321 = vld [vmem:[%s5 + $0x48] sm:$0xff]
    %v322 = vld [vmem:[%s5 + $0x50] sm:$0xff]
    %v323 = vld [vmem:[%s5 + $0x58] sm:$0xff]
    %v324 = vld [vmem:[%s5 + $0x60] sm:$0xff]
    %v325 = vld [vmem:[%s5 + $0x68] sm:$0xff]
    %v326 = vld [vmem:[%s5 + $0x70] sm:$0xff]
    %v327 = vld [vmem:[%s5 + $0x78] sm:$0xff]
    %v330 = vcombine.low %v149, %v150
    %v331 = vcombine.low %v151, %v152
    %v332 = vcombine.low %v154, %v155
    %v333 = vcombine.low %v156, %v157
    %338 = vmatprep.subr.mxu0 0.0
    %339 = vmatpush1.msra.mxu0 %v312
    %340 = vmatprep.subr.mxu0 0.0
    %341 = vmatpush1.msra.mxu0 %v313
    %342 = vmatprep.subr.mxu0 0.0
    %343 = vmatpush1.msra.mxu0 %v314
    %344 = vmatprep.subr.mxu0 0.0
    %345 = vmatpush1.msra.mxu0 %v315
    %346 = vmatprep.subr.mxu0 0.0
    %347 = vmatpush1.msra.mxu0 %v316
    %348 = vmatprep.subr.mxu0 0.0
    %349 = vmatpush1.msra.mxu0 %v317
    %350 = vmatprep.subr.mxu0 0.0
    %351 = vmatpush1.msra.mxu0 %v318
    %352 = vmatprep.subr.mxu0 0.0
    %353 = vmatpush1.msra.mxu0 %v319
    %354 = vmatprep.subr.mxu0 0.0
    %355 = vmatpush1.msra.mxu0 %v320
    %356 = vmatprep.subr.mxu0 0.0
    %357 = vmatpush1.msra.mxu0 %v321
    %358 = vmatprep.subr.mxu0 0.0
    %359 = vmatpush1.msra.mxu0 %v322
    %360 = vmatprep.subr.mxu0 0.0
    %361 = vmatpush1.msra.mxu0 %v323
    %362 = vmatprep.subr.mxu0 0.0
    %363 = vmatpush1.msra.mxu0 %v324
    %364 = vmatprep.subr.mxu0 0.0
    %365 = vmatpush1.msra.mxu0 %v325
    %366 = vmatprep.subr.mxu0 0.0
    %367 = vmatpush1.msra.mxu0 %v326
    %368 = vmatprep.subr.mxu0 0.0
    %369 = vmatpush1.msra.mxu0 %v327
    %370 = vmatprep.subr.mxu0 0.0
    %371 = vmatpush1.msra.mxu0 0.0
    %372 = vmatprep.subr.mxu0 0.0
    %373 = vmatpush1.msra.mxu0 0.0
    %374 = vmatprep.subr.mxu0 0.0
    %375 = vmatpush1.msra.mxu0 0.0
    %376 = vmatprep.subr.mxu0 0.0
    %377 = vmatpush1.msra.mxu0 0.0
    %378 = vmatprep.subr.mxu0 0.0
    %379 = vmatpush1.msra.mxu0 0.0
    %380 = vmatprep.subr.mxu0 0.0
    %381 = vmatpush1.msra.mxu0 0.0
    %382 = vmatprep.subr.mxu0 0.0
    %383 = vmatpush1.msra.mxu0 0.0
    %384 = vmatprep.subr.mxu0 0.0
    %385 = vmatpush1.msra.mxu0 0.0
    %386 = vmatprep.subr.mxu0 0.0
    %387 = vmatpush1.msra.mxu0 0.0
    %388 = vmatprep.subr.mxu0 0.0
    %389 = vmatpush1.msra.mxu0 0.0
    %390 = vmatprep.subr.mxu0 0.0
    %391 = vmatpush1.msra.mxu0 0.0
    %392 = vmatprep.subr.mxu0 0.0
    %393 = vmatpush1.msra.mxu0 0.0
    %394 = vmatprep.subr.mxu0 0.0
    %395 = vmatpush1.msra.mxu0 0.0
    %396 = vmatprep.subr.mxu0 0.0
    %397 = vmatpush1.msra.mxu0 0.0
    %398 = vmatprep.subr.mxu0 0.0
    %399 = vmatpush1.msra.mxu0 0.0
    %400 = vmatprep.subr.mxu0 0.0
    %401 = vmatpush1.msra.mxu0 0.0
    %402 = vmatprep.mubr.f32.mxu0 0.0
    %403 = vmatmul.mubr.f32.gmra.mrb[0].mxu0 %v330
    %v404 = vpop.f32.mrb[0].mxu0
    %v405 = vadd.f32 0.0, %v404
    %v406 = vpop.f32.mrb[0].mxu0
    %407 = vmatprep.mubr.f32.mxu0 0.0
    %408 = vmatmul.mubr.f32.gmra.mrb[0].mxu0 %v331
    %v409 = vpop.f32.mrb[0].mxu0
    %v410 = vadd.f32 0.0, %v409
    %v411 = vpop.f32.mrb[0].mxu0
    %412 = vmatprep.mubr.f32.mxu0 0.0
    %413 = vmatmul.mubr.f32.gmra.mrb[0].mxu0 %v332
    %v414 = vpop.f32.mrb[0].mxu0
    %v415 = vadd.f32 0.0, %v414
    %v416 = vpop.f32.mrb[0].mxu0
    %417 = vmatprep.mubr.f32.mxu0 0.0
    %418 = vmatmul.mubr.f32.gmra.mrb[0].mxu0 %v333
    %v419 = vpop.f32.mrb[0].mxu0
    %v420 = vadd.f32 0.0, %v419
    %v421 = vpop.f32.mrb[0].mxu0
    %422 = vdwg.mxu0
    %423 = vmatprep.subr.mxu0 0.0
    %424 = vmatpush1.msra.mxu0 %v296
    %425 = vmatprep.subr.mxu0 0.0
    %426 = vmatpush1.msra.mxu0 %v297
    %427 = vmatprep.subr.mxu0 0.0
    %428 = vmatpush1.msra.mxu0 %v298
    %429 = vmatprep.subr.mxu0 0.0
    %430 = vmatpush1.msra.mxu0 %v299
    %431 = vmatprep.subr.mxu0 0.0
    %432 = vmatpush1.msra.mxu0 %v300
    %433 = vmatprep.subr.mxu0 0.0
    %434 = vmatpush1.msra.mxu0 %v301
    %435 = vmatprep.subr.mxu0 0.0
    %436 = vmatpush1.msra.mxu0 %v302
    %437 = vmatprep.subr.mxu0 0.0
    %438 = vmatpush1.msra.mxu0 %v303
    %439 = vmatprep.subr.mxu0 0.0
    %440 = vmatpush1.msra.mxu0 %v304
    %441 = vmatprep.subr.mxu0 0.0
    %442 = vmatpush1.msra.mxu0 %v305
    %443 = vmatprep.subr.mxu0 0.0
    %444 = vmatpush1.msra.mxu0 %v306
    %445 = vmatprep.subr.mxu0 0.0
    %446 = vmatpush1.msra.mxu0 %v307
    %447 = vmatprep.subr.mxu0 0.0
    %448 = vmatpush1.msra.mxu0 %v308
    %449 = vmatprep.subr.mxu0 0.0
    %450 = vmatpush1.msra.mxu0 %v309
    %451 = vmatprep.subr.mxu0 0.0
    %452 = vmatpush1.msra.mxu0 %v310
    %453 = vmatprep.subr.mxu0 0.0
    %454 = vmatpush1.msra.mxu0 %v311
    %455 = vmatprep.subr.mxu0 0.0
    %456 = vmatpush1.msra.mxu0 0.0
    %457 = vmatprep.subr.mxu0 0.0
    %458 = vmatpush1.msra.mxu0 0.0
    %459 = vmatprep.subr.mxu0 0.0
    %460 = vmatpush1.msra.mxu0 0.0
    %461 = vmatprep.subr.mxu0 0.0
    %462 = vmatpush1.msra.mxu0 0.0
    %463 = vmatprep.subr.mxu0 0.0
    %464 = vmatpush1.msra.mxu0 0.0
    %465 = vmatprep.subr.mxu0 0.0
    %466 = vmatpush1.msra.mxu0 0.0
    %467 = vmatprep.subr.mxu0 0.0
    %468 = vmatpush1.msra.mxu0 0.0
    %469 = vmatprep.subr.mxu0 0.0
    %470 = vmatpush1.msra.mxu0 0.0
    %471 = vmatprep.subr.mxu0 0.0
    %472 = vmatpush1.msra.mxu0 0.0
    %473 = vmatprep.subr.mxu0 0.0
    %474 = vmatpush1.msra.mxu0 0.0
    %475 = vmatprep.subr.mxu0 0.0
    %476 = vmatpush1.msra.mxu0 0.0
    %477 = vmatprep.subr.mxu0 0.0
    %478 = vmatpush1.msra.mxu0 0.0
    %479 = vmatprep.subr.mxu0 0.0
    %480 = vmatpush1.msra.mxu0 0.0
    %481 = vmatprep.subr.mxu0 0.0
    %482 = vmatpush1.msra.mxu0 0.0
    %483 = vmatprep.subr.mxu0 0.0
    %484 = vmatpush1.msra.mxu0 0.0
    %485 = vmatprep.subr.mxu0 0.0
    %486 = vmatpush1.msra.mxu0 0.0
    %487 = vmatprep.mubr.f32.mxu0 0.0
    %488 = vmatmul.mubr.f32.gmra.mrb[0].mxu0 %v189
    %v489 = vpop.f32.mrb[0].mxu0
    %v490 = vadd.f32 %v405, %v489
    %v491 = vpop.f32.mrb[0].mxu0
    %492 = vmatprep.mubr.f32.mxu0 0.0
    %493 = vmatmul.mubr.f32.gmra.mrb[0].mxu0 %v190
    %v494 = vpop.f32.mrb[0].mxu0
    %v495 = vadd.f32 %v410, %v494
    %v496 = vpop.f32.mrb[0].mxu0
    %497 = vmatprep.mubr.f32.mxu0 0.0
    %498 = vmatmul.mubr.f32.gmra.mrb[0].mxu0 %v191
    %v499 = vpop.f32.mrb[0].mxu0
    %v500 = vadd.f32 %v415, %v499
    %v501 = vpop.f32.mrb[0].mxu0
    %502 = vmatprep.mubr.f32.mxu0 0.0
    %503 = vmatmul.mubr.f32.gmra.mrb[0].mxu0 %v192
    %v504 = vpop.f32.mrb[0].mxu0
    %v505 = vadd.f32 %v420, %v504
    %v506 = vpop.f32.mrb[0].mxu0
    %507 = vdwg.mxu0
    %v512 = vcombine.high %v490, %v490
    %v513 = vcombine.high %v495, %v495
    %v514 = vcombine.high %v500, %v500
    %v515 = vcombine.high %v505, %v505
    %v520 = vadd.f32 %v490, %v179
    %v521 = vadd.f32 %v512, %v179
    %v522 = vadd.f32 %v495, %v179
    %v523 = vadd.f32 %v513, %v179
    %v524 = vadd.f32 %v500, %v179
    %v525 = vadd.f32 %v514, %v179
    %v526 = vadd.f32 %v505, %v179
    %v527 = vadd.f32 %v515, %v179
    %528 = vst [vmem:[%s7] sm:$0xf] %v266
    %529 = vst [vmem:[%s7 + $0x8] sm:$0xf] %v288
    %530 = vst [vmem:[%s7 + $0x10] sm:$0xf] %v271
    %531 = vst [vmem:[%s7 + $0x18] sm:$0xf] %v289
    %532 = vst [vmem:[%s7 + $0x20] sm:$0xf] %v276
    %533 = vst [vmem:[%s7 + $0x28] sm:$0xf] %v290
    %534 = vst [vmem:[%s7 + $0x30] sm:$0xf] %v281
    %535 = vst [vmem:[%s7 + $0x38] sm:$0xf] %v291
    %s536 = scalar_lea.vmem %s7, 4
    %537 = vst [vmem:[%s536] sm:$0xf] %v520
    %538 = vst [vmem:[%s536 + $0x8] sm:$0xf] %v521
    %539 = vst [vmem:[%s536 + $0x10] sm:$0xf] %v522
    %540 = vst [vmem:[%s536 + $0x18] sm:$0xf] %v523
    %541 = vst [vmem:[%s536 + $0x20] sm:$0xf] %v524
    %542 = vst [vmem:[%s536 + $0x28] sm:$0xf] %v525
    %543 = vst [vmem:[%s536 + $0x30] sm:$0xf] %v526
    %544 = vst [vmem:[%s536 + $0x38] sm:$0xf] %v527
    %vm545 = vcmask 1043456
    %v546 = vsel %vm545, %v266, 0.0
    %v547 = vsel %vm545, %v288, 0.0
    %v548 = vadd.f32 %v546, %v547
    %v549 = vsel %vm545, %v271, 0.0
    %v550 = vadd.f32 %v548, %v549
    %v551 = vsel %vm545, %v289, 0.0
    %v552 = vadd.f32 %v550, %v551
    %v553 = vsel %vm545, %v276, 0.0
    %v554 = vadd.f32 %v552, %v553
    %v555 = vsel %vm545, %v290, 0.0
    %v556 = vadd.f32 %v554, %v555
    %v557 = vsel %vm545, %v281, 0.0
    %v558 = vadd.f32 %v556, %v557
    %v559 = vsel %vm545, %v291, 0.0
    %v560 = vadd.f32 %v558, %v559
    %v561 = vrot.slane %v560, 4
    %v562 = vadd.f32 %v560, %v561
    %v563 = vrot.slane %v562, 2
    %v564 = vadd.f32 %v562, %v563
    %v565 = vrot.slane %v564, 1
    %v566 = vadd.f32 %v564, %v565
    %v567 = vsel %vm545, %v520, 0.0
    %v568 = vsel %vm545, %v521, 0.0
    %v569 = vadd.f32 %v567, %v568
    %v570 = vsel %vm545, %v522, 0.0
    %v571 = vadd.f32 %v569, %v570
    %v572 = vsel %vm545, %v523, 0.0
    %v573 = vadd.f32 %v571, %v572
    %v574 = vsel %vm545, %v524, 0.0
    %v575 = vadd.f32 %v573, %v574
    %v576 = vsel %vm545, %v525, 0.0
    %v577 = vadd.f32 %v575, %v576
    %v578 = vsel %vm545, %v526, 0.0
    %v579 = vadd.f32 %v577, %v578
    %v580 = vsel %vm545, %v527, 0.0
    %v581 = vadd.f32 %v579, %v580
    %v582 = vrot.slane %v581, 4
    %v583 = vadd.f32 %v581, %v582
    %v584 = vrot.slane %v583, 2
    %v585 = vadd.f32 %v583, %v584
    %v586 = vrot.slane %v585, 1
    %v587 = vadd.f32 %v585, %v586
    %v588 = vadd.f32 %v566, %v587
    %v589 = vmul.f32 %v588, 0.015625
    %v590 = vsub.f32 %v266, %v589
    %v591 = vsub.f32 %v288, %v589
    %v592 = vsub.f32 %v271, %v589
    %v593 = vsub.f32 %v289, %v589
    %v594 = vsub.f32 %v276, %v589
    %v595 = vsub.f32 %v290, %v589
    %v596 = vsub.f32 %v281, %v589
    %v597 = vsub.f32 %v291, %v589
    %v598 = vsub.f32 %v520, %v589
    %v599 = vsub.f32 %v521, %v589
    %v600 = vsub.f32 %v522, %v589
    %v601 = vsub.f32 %v523, %v589
    %v602 = vsub.f32 %v524, %v589
    %v603 = vsub.f32 %v525, %v589
    %v604 = vsub.f32 %v526, %v589
    %v605 = vsub.f32 %v527, %v589
    %v606 = vmul.f32 %v590, %v590
    %v607 = vmul.f32 %v591, %v591
    %v608 = vmul.f32 %v592, %v592
    %v609 = vmul.f32 %v593, %v593
    %v610 = vmul.f32 %v594, %v594
    %v611 = vmul.f32 %v595, %v595
    %v612 = vmul.f32 %v596, %v596
    %v613 = vmul.f32 %v597, %v597
    %v614 = vsel %vm545, %v606, 0.0
    %v615 = vsel %vm545, %v607, 0.0
    %v616 = vadd.f32 %v614, %v615
    %v617 = vsel %vm545, %v608, 0.0
    %v618 = vadd.f32 %v616, %v617
    %v619 = vsel %vm545, %v609, 0.0
    %v620 = vadd.f32 %v618, %v619
    %v621 = vsel %vm545, %v610, 0.0
    %v622 = vadd.f32 %v620, %v621
    %v623 = vsel %vm545, %v611, 0.0
    %v624 = vadd.f32 %v622, %v623
    %v625 = vsel %vm545, %v612, 0.0
    %v626 = vadd.f32 %v624, %v625
    %v627 = vsel %vm545, %v613, 0.0
    %v628 = vadd.f32 %v626, %v627
    %v629 = vrot.slane %v628, 4
    %v630 = vadd.f32 %v628, %v629
    %v631 = vrot.slane %v630, 2
    %v632 = vadd.f32 %v630, %v631
    %v633 = vrot.slane %v632, 1
    %v634 = vadd.f32 %v632, %v633
    %v635 = vmul.f32 %v598, %v598
    %v636 = vmul.f32 %v599, %v599
    %v637 = vmul.f32 %v600, %v600
    %v638 = vmul.f32 %v601, %v601
    %v639 = vmul.f32 %v602, %v602
    %v640 = vmul.f32 %v603, %v603
    %v641 = vmul.f32 %v604, %v604
    %v642 = vmul.f32 %v605, %v605
    %v643 = vsel %vm545, %v635, 0.0
    %v644 = vsel %vm545, %v636, 0.0
    %v645 = vadd.f32 %v643, %v644
    %v646 = vsel %vm545, %v637, 0.0
    %v647 = vadd.f32 %v645, %v646
    %v648 = vsel %vm545, %v638, 0.0
    %v649 = vadd.f32 %v647, %v648
    %v650 = vsel %vm545, %v639, 0.0
    %v651 = vadd.f32 %v649, %v650
    %v652 = vsel %vm545, %v640, 0.0
    %v653 = vadd.f32 %v651, %v652
    %v654 = vsel %vm545, %v641, 0.0
    %v655 = vadd.f32 %v653, %v654
    %v656 = vsel %vm545, %v642, 0.0
    %v657 = vadd.f32 %v655, %v656
    %v658 = vrot.slane %v657, 4
    %v659 = vadd.f32 %v657, %v658
    %v660 = vrot.slane %v659, 2
    %v661 = vadd.f32 %v659, %v660
    %v662 = vrot.slane %v661, 1
    %v663 = vadd.f32 %v661, %v662
    %v664 = vadd.f32 %v634, %v663
    %665 = vst [vmem:[%s8] sm:$0x1] %v589
    %666 = vst [vmem:[%s9] sm:$0x1] %v664
    // Predicated region
    $region38: #{a_call__.3} parent=1 // pred_check
      _
    $region39: #{a_call__.3} parent=1 // pred_check_branch
      %668 = sbr.rel (0) target = $region41
    $region40: #{a_call__.3} parent=1 // pred_region
      _
    $region41: #{a_call__.3} parent=1 // pred_fallthru
      _
    // Predicated region
    $region42: #{a_call__.3} parent=1 // pred_check
      _
    $region43: #{a_call__.3} parent=1 // pred_check_branch
      %670 = sbr.rel (0) target = $region45
    $region44: #{a_call__.3} parent=1 // pred_region
      _
    $region45: #{a_call__.3} parent=1 // pred_fallthru
      _
    // Predicated region
    $region46: #{a_call__.3} parent=1 // pred_check
      _
    $region47: #{a_call__.3} parent=1 // pred_check_branch
      %672 = sbr.rel (0) target = $region49
    $region48: #{a_call__.3} parent=1 // pred_region
      _
    $region49: #{a_call__.3} parent=1 // pred_fallthru
      _
    // Predicated region
    $region50: #{a_call__.3} parent=1 // pred_check
      _
    $region51: #{a_call__.3} parent=1 // pred_check_branch
      %674 = sbr.rel (0) target = $region53
    $region52: #{a_call__.3} parent=1 // pred_region
      _
    $region53: #{a_call__.3} parent=1 // pred_fallthru
      _
    // Predicated region
    $region54: #{a_call__.3} parent=1 // pred_check
      _
    $region55: #{a_call__.3} parent=1 // pred_check_branch
      %676 = sbr.rel (0) target = $region57
    $region56: #{a_call__.3} parent=1 // pred_region
      _
    $region57: #{a_call__.3} parent=1 // pred_fallthru
      _
    // Predicated region
    $region58: #{a_call__.3} parent=1 // pred_check
      _
    $region59: #{a_call__.3} parent=1 // pred_check_branch
      %678 = sbr.rel (0) target = $region61
    $region60: #{a_call__.3} parent=1 // pred_region
      _
    $region61: #{a_call__.3} parent=1 // pred_fallthru
      _
    %679 = vsyncpa [#allocation4], 1
    %680 = vsyncpa [#allocation6], 1

// kernel: a_call__.4
$region0: #{a_call__.4}
  #allocation0 [shape = 'u32[]', space=smem, size = 0x4, offset = 0x4, fixed_abs, tag = 'smem constant byte address 0x4 - core index']
  #allocation1 [shape = 'u32[144,128]{1,0:T(1,128)}', space=vmem, size = 0x12000, scoped, tag = 'internal scratch']
  #allocation2 [shape = 'f32[2,9,9,64]{3,2,1,0:T(8,128)}', space=vmem, size = 0x24000, scoped, tag = 'scratch operand']
  %s0 = inlined_call_operand.vmem [shape: f32[2,8,8,64], index: 0, kind: input, shape index: {}]
  %s1 = inlined_call_operand.vmem [shape: f32[1,1,1,64], index: 1, kind: input, shape index: {}]
  %s2 = inlined_call_operand.vmem [shape: f32[1,1,1,64], index: 2, kind: input, shape index: {}]
  %s3 = inlined_call_operand.vmem [shape: f32[128,128], index: 3, kind: input, shape index: {}]
  %s4 = inlined_call_operand.vmem [shape: f32[128,128], index: 4, kind: input, shape index: {}]
  %s5 = inlined_call_operand.vmem [shape: f32[128,128], index: 5, kind: input, shape index: {}]
  %s6 = inlined_call_operand.vmem [shape: f32[1,1,1,128], index: 6, kind: input, shape index: {}]
  %s7 = inlined_call_operand.vmem [shape: f32[2,8,2,8,128], index: 7, kind: output, shape index: {0}]
  %s8 = inlined_call_operand.vmem [shape: f32[1,1,128], index: 8, kind: output, shape index: {1}]
  %s9 = inlined_call_operand.vmem [shape: f32[1,1,128], index: 9, kind: output, shape index: {2}]
  %10 = xla_tuple %s7, %s8, %s9
  %s11 = sld [smem:[#allocation0]]
  $region54: #{a_call__.4} parent=0
    _
  %s13 = ssub.s32 1, %s11
  %s14 = scalar_select 0, %s13, %s11
  // Predicated region
  $region2: #{a_call__.4} parent=0 // pred_check
    _
  $region3: #{a_call__.4} parent=0 // pred_check_branch
    %16 = sbr.rel (0) target = $region5
  $region4: #{a_call__.4} parent=0 // pred_region
    _
  $region5: #{a_call__.4} parent=0 // pred_fallthru
    _
  // Predicated region
  $region6: #{a_call__.4} parent=0 // pred_check
    _
  $region7: #{a_call__.4} parent=0 // pred_check_branch
    %18 = sbr.rel (0) target = $region9
  $region8: #{a_call__.4} parent=0 // pred_region
    _
  $region9: #{a_call__.4} parent=0 // pred_fallthru
    _
  // Predicated region
  $region10: #{a_call__.4} parent=0 // pred_check
    _
  $region11: #{a_call__.4} parent=0 // pred_check_branch
    %20 = sbr.rel (0) target = $region13
  $region12: #{a_call__.4} parent=0 // pred_region
    _
  $region13: #{a_call__.4} parent=0 // pred_fallthru
    _
  // Predicated region
  $region14: #{a_call__.4} parent=0 // pred_check
    _
  $region15: #{a_call__.4} parent=0 // pred_check_branch
    %22 = sbr.rel (0) target = $region17
  $region16: #{a_call__.4} parent=0 // pred_region
    _
  $region17: #{a_call__.4} parent=0 // pred_fallthru
    _
  // Predicated region
  $region18: #{a_call__.4} parent=0 // pred_check
    _
  $region19: #{a_call__.4} parent=0 // pred_check_branch
    %24 = sbr.rel (0) target = $region21
  $region20: #{a_call__.4} parent=0 // pred_region
    _
  $region21: #{a_call__.4} parent=0 // pred_fallthru
    _
  // Predicated region
  $region22: #{a_call__.4} parent=0 // pred_check
    _
  $region23: #{a_call__.4} parent=0 // pred_check_branch
    %26 = sbr.rel (0) target = $region25
  $region24: #{a_call__.4} parent=0 // pred_region
    _
  $region25: #{a_call__.4} parent=0 // pred_fallthru
    _
  // Predicated region
  $region26: #{a_call__.4} parent=0 // pred_check
    _
  $region27: #{a_call__.4} parent=0 // pred_check_branch
    %28 = sbr.rel (0) target = $region29
  $region28: #{a_call__.4} parent=0 // pred_region
    _
  $region29: #{a_call__.4} parent=0 // pred_fallthru
    _
  %v29 = vld [vmem:[%s0] sm:$0xff]
  %v30 = vld [vmem:[%s0 + $0x8] sm:$0xff]
  %v31 = vld [vmem:[%s0 + $0x10] sm:$0xff]
  %v32 = vld [vmem:[%s0 + $0x18] sm:$0xff]
  %v33 = vld [vmem:[%s0 + $0x20] sm:$0xff]
  %v34 = vld [vmem:[%s0 + $0x28] sm:$0xff]
  %v35 = vld [vmem:[%s0 + $0x30] sm:$0xff]
  %v36 = vld [vmem:[%s0 + $0x38] sm:$0xff]
  %v37 = vld [vmem:[%s0 + $0x40] sm:$0xff]
  %v38 = vld [vmem:[%s0 + $0x48] sm:$0xff]
  %v39 = vld [vmem:[%s0 + $0x50] sm:$0xff]
  %v40 = vld [vmem:[%s0 + $0x58] sm:$0xff]
  %v41 = vld [vmem:[%s0 + $0x60] sm:$0xff]
  %v42 = vld [vmem:[%s0 + $0x68] sm:$0xff]
  %v43 = vld [vmem:[%s0 + $0x70] sm:$0xff]
  %v44 = vld [vmem:[%s0 + $0x78] sm:$0xff]
  %v45 = vld [vmem:[%s1] sm:$0x1]
  %v47 = vlaneseq
  %v48 = vshrl.u32 %v47, 7
  %v49 = vsub.s32 0, %v48
  %v50 = vrot.slane %v45, %v49
  %v52 = vmul.f32 %v29, %v50
  %v53 = vmul.f32 %v30, %v50
  %v54 = vmul.f32 %v31, %v50
  %v55 = vmul.f32 %v32, %v50
  %v56 = vmul.f32 %v33, %v50
  %v57 = vmul.f32 %v34, %v50
  %v58 = vmul.f32 %v35, %v50
  %v59 = vmul.f32 %v36, %v50
  %v60 = vmul.f32 %v37, %v50
  %v61 = vmul.f32 %v38, %v50
  %v62 = vmul.f32 %v39, %v50
  %v63 = vmul.f32 %v40, %v50
  %v64 = vmul.f32 %v41, %v50
  %v65 = vmul.f32 %v42, %v50
  %v66 = vmul.f32 %v43, %v50
  %v67 = vmul.f32 %v44, %v50
  %v68 = vld [vmem:[%s2] sm:$0x1]
  %v70 = vlaneseq
  %v71 = vshrl.u32 %v70, 7
  %v72 = vsub.s32 0, %v71
  %v73 = vrot.slane %v68, %v72
  %v75 = vadd.f32 %v52, %v73
  %v76 = vadd.f32 %v53, %v73
  %v77 = vadd.f32 %v54, %v73
  %v78 = vadd.f32 %v55, %v73
  %v79 = vadd.f32 %v56, %v73
  %v80 = vadd.f32 %v57, %v73
  %v81 = vadd.f32 %v58, %v73
  %v82 = vadd.f32 %v59, %v73
  %v83 = vadd.f32 %v60, %v73
  %v84 = vadd.f32 %v61, %v73
  %v85 = vadd.f32 %v62, %v73
  %v86 = vadd.f32 %v63, %v73
  %v87 = vadd.f32 %v64, %v73
  %v88 = vadd.f32 %v65, %v73
  %v89 = vadd.f32 %v66, %v73
  %v90 = vadd.f32 %v67, %v73
  %vm91 = vcmp.ge.f32.partialorder %v75, 0.0
  %vm92 = vcmp.ge.f32.partialorder %v76, 0.0
  %vm93 = vcmp.ge.f32.partialorder %v77, 0.0
  %vm94 = vcmp.ge.f32.partialorder %v78, 0.0
  %vm95 = vcmp.ge.f32.partialorder %v79, 0.0
  %vm96 = vcmp.ge.f32.partialorder %v80, 0.0
  %vm97 = vcmp.ge.f32.partialorder %v81, 0.0
  %vm98 = vcmp.ge.f32.partialorder %v82, 0.0
  %vm99 = vcmp.ge.f32.partialorder %v83, 0.0
  %vm100 = vcmp.ge.f32.partialorder %v84, 0.0
  %vm101 = vcmp.ge.f32.partialorder %v85, 0.0
  %vm102 = vcmp.ge.f32.partialorder %v86, 0.0
  %vm103 = vcmp.ge.f32.partialorder %v87, 0.0
  %vm104 = vcmp.ge.f32.partialorder %v88, 0.0
  %vm105 = vcmp.ge.f32.partialorder %v89, 0.0
  %vm106 = vcmp.ge.f32.partialorder %v90, 0.0
  %v107 = vmul.f32 %v75, 0.01
  %v108 = vmul.f32 %v76, 0.01
  %v109 = vmul.f32 %v77, 0.01
  %v110 = vmul.f32 %v78, 0.01
  %v111 = vmul.f32 %v79, 0.01
  %v112 = vmul.f32 %v80, 0.01
  %v113 = vmul.f32 %v81, 0.01
  %v114 = vmul.f32 %v82, 0.01
  %v115 = vmul.f32 %v83, 0.01
  %v116 = vmul.f32 %v84, 0.01
  %v117 = vmul.f32 %v85, 0.01
  %v118 = vmul.f32 %v86, 0.01
  %v119 = vmul.f32 %v87, 0.01
  %v120 = vmul.f32 %v88, 0.01
  %v121 = vmul.f32 %v89, 0.01
  %v122 = vmul.f32 %v90, 0.01
  %v123 = vsel %vm91, %v75, %v107
  %v124 = vsel %vm92, %v76, %v108
  %v125 = vsel %vm93, %v77, %v109
  %v126 = vsel %vm94, %v78, %v110
  %v127 = vsel %vm95, %v79, %v111
  %v128 = vsel %vm96, %v80, %v112
  %v129 = vsel %vm97, %v81, %v113
  %v130 = vsel %vm98, %v82, %v114
  %v131 = vsel %vm99, %v83, %v115
  %v132 = vsel %vm100, %v84, %v116
  %v133 = vsel %vm101, %v85, %v117
  %v134 = vsel %vm102, %v86, %v118
  %v135 = vsel %vm103, %v87, %v119
  %v136 = vsel %vm104, %v88, %v120
  %v137 = vsel %vm105, %v89, %v121
  %v138 = vsel %vm106, %v90, %v122
  %vm139 = vcmask 523264
  %140 = vst.msk [vmem:[#allocation2] sm:$0xff] %vm139, %v123
  %141 = vst.msk [vmem:[#allocation2 + $0x10] sm:$0xff] %vm139, %v124
  %142 = vst.msk [vmem:[#allocation2 + $0x20] sm:$0xff] %vm139, %v125
  %143 = vst.msk [vmem:[#allocation2 + $0x30] sm:$0xff] %vm139, %v126
  %144 = vst.msk [vmem:[#allocation2 + $0x40] sm:$0xff] %vm139, %v127
  %145 = vst.msk [vmem:[#allocation2 + $0x50] sm:$0xff] %vm139, %v128
  %146 = vst.msk [vmem:[#allocation2 + $0x60] sm:$0xff] %vm139, %v129
  %147 = vst.msk [vmem:[#allocation2 + $0x70] sm:$0xff] %vm139, %v130
  %148 = vst.msk [vmem:[#allocation2 + $0x90] sm:$0xff] %vm139, %v131
  %149 = vst.msk [vmem:[#allocation2 + $0xa0] sm:$0xff] %vm139, %v132
  %150 = vst.msk [vmem:[#allocation2 + $0xb0] sm:$0xff] %vm139, %v133
  %151 = vst.msk [vmem:[#allocation2 + $0xc0] sm:$0xff] %vm139, %v134
  %152 = vst.msk [vmem:[#allocation2 + $0xd0] sm:$0xff] %vm139, %v135
  %153 = vst.msk [vmem:[#allocation2 + $0xe0] sm:$0xff] %vm139, %v136
  %154 = vst.msk [vmem:[#allocation2 + $0xf0] sm:$0xff] %vm139, %v137
  %155 = vst.msk [vmem:[#allocation2 + $0x100] sm:$0xff] %vm139, %v138
  %s156 = scalar_lea.vmem [#allocation2], 128
  %157 = vst.msk [vmem:[%s156] sm:$0xff] %vm139, 0.0
  %vm158 = vcmask 516096
  %159 = vst.msk [vmem:[%s156 + $0x8] sm:$0x1] %vm158, 0.0
  %160 = vst.msk [vmem:[%s156 + $0x90] sm:$0xff] %vm139, 0.0
  %161 = vst.msk [vmem:[%s156 + $0x98] sm:$0x1] %vm158, 0.0
  %162 = vst.msk [vmem:[#allocation2 + $0x8] sm:$0x1] %vm158, 0.0
  %163 = vst.msk [vmem:[#allocation2 + $0x18] sm:$0x1] %vm158, 0.0
  %164 = vst.msk [vmem:[#allocation2 + $0x28] sm:$0x1] %vm158, 0.0
  %165 = vst.msk [vmem:[#allocation2 + $0x38] sm:$0x1] %vm158, 0.0
  %166 = vst.msk [vmem:[#allocation2 + $0x48] sm:$0x1] %vm158, 0.0
  %167 = vst.msk [vmem:[#allocation2 + $0x58] sm:$0x1] %vm158, 0.0
  %168 = vst.msk [vmem:[#allocation2 + $0x68] sm:$0x1] %vm158, 0.0
  %169 = vst.msk [vmem:[#allocation2 + $0x78] sm:$0x1] %vm158, 0.0
  %170 = vst.msk [vmem:[#allocation2 + $0x98] sm:$0x1] %vm158, 0.0
  %171 = vst.msk [vmem:[#allocation2 + $0xa8] sm:$0x1] %vm158, 0.0
  %172 = vst.msk [vmem:[#allocation2 + $0xb8] sm:$0x1] %vm158, 0.0
  %173 = vst.msk [vmem:[#allocation2 + $0xc8] sm:$0x1] %vm158, 0.0
  %174 = vst.msk [vmem:[#allocation2 + $0xd8] sm:$0x1] %vm158, 0.0
  %175 = vst.msk [vmem:[#allocation2 + $0xe8] sm:$0x1] %vm158, 0.0
  %176 = vst.msk [vmem:[#allocation2 + $0xf8] sm:$0x1] %vm158, 0.0
  %177 = vst.msk [vmem:[#allocation2 + $0x108] sm:$0x1] %vm158, 0.0
  %v178 = vld [vmem:[#allocation2] sm:$0xff]
  %v179 = vld [vmem:[#allocation2 + $0x10] sm:$0xff]
  %v180 = vld [vmem:[#allocation2 + $0x20] sm:$0xff]
  %v181 = vld [vmem:[#allocation2 + $0x30] sm:$0xff]
  %v182 = vld [vmem:[#allocation2 + $0x40] sm:$0xff]
  %v183 = vld [vmem:[#allocation2 + $0x50] sm:$0xff]
  %v184 = vld [vmem:[#allocation2 + $0x60] sm:$0xff]
  %v185 = vld [vmem:[#allocation2 + $0x70] sm:$0xff]
  %v186 = vld [vmem:[#allocation2 + $0x80] sm:$0xff]
  %v187 = vld [vmem:[#allocation2 + $0x90] sm:$0xff]
  %v188 = vld [vmem:[#allocation2 + $0xa0] sm:$0xff]
  %v189 = vld [vmem:[#allocation2 + $0xb0] sm:$0xff]
  %v190 = vld [vmem:[#allocation2 + $0xc0] sm:$0xff]
  %v191 = vld [vmem:[#allocation2 + $0xd0] sm:$0xff]
  %v192 = vld [vmem:[#allocation2 + $0xe0] sm:$0xff]
  %v193 = vld [vmem:[#allocation2 + $0xf0] sm:$0xff]
  %v194 = vld [vmem:[#allocation2 + $0x100] sm:$0xff]
  %v195 = vld [vmem:[#allocation2 + $0x110] sm:$0xff]
  %v196 = vld [vmem:[#allocation2 + $0x1] sm:$0xff]
  %v197 = vld [vmem:[#allocation2 + $0x11] sm:$0xff]
  %v198 = vld [vmem:[#allocation2 + $0x21] sm:$0xff]
  %v199 = vld [vmem:[#allocation2 + $0x31] sm:$0xff]
  %v200 = vld [vmem:[#allocation2 + $0x41] sm:$0xff]
  %v201 = vld [vmem:[#allocation2 + $0x51] sm:$0xff]
  %v202 = vld [vmem:[#allocation2 + $0x61] sm:$0xff]
  %v203 = vld [vmem:[#allocation2 + $0x71] sm:$0xff]
  %v204 = vld [vmem:[#allocation2 + $0x81] sm:$0xff]
  %v205 = vld [vmem:[#allocation2 + $0x91] sm:$0xff]
  %v206 = vld [vmem:[#allocation2 + $0xa1] sm:$0xff]
  %v207 = vld [vmem:[#allocation2 + $0xb1] sm:$0xff]
  %v208 = vld [vmem:[#allocation2 + $0xc1] sm:$0xff]
  %v209 = vld [vmem:[#allocation2 + $0xd1] sm:$0xff]
  %v210 = vld [vmem:[#allocation2 + $0xe1] sm:$0xff]
  %v211 = vld [vmem:[#allocation2 + $0xf1] sm:$0xff]
  %v212 = vld [vmem:[#allocation2 + $0x101] sm:$0xff]
  %v213 = vld [vmem:[#allocation2 + $0x111] sm:$0xff]
  %232 = vrot.lane.b32.xlu0 %v196, 64
  %v233 = vpop.permute.xlu0 %232
  %234 = vrot.lane.b32.xlu0 %v197, 64
  %v235 = vpop.permute.xlu0 %234
  %236 = vrot.lane.b32.xlu0 %v198, 64
  %v237 = vpop.permute.xlu0 %236
  %238 = vrot.lane.b32.xlu0 %v199, 64
  %v239 = vpop.permute.xlu0 %238
  %240 = vrot.lane.b32.xlu0 %v200, 64
  %v241 = vpop.permute.xlu0 %240
  %242 = vrot.lane.b32.xlu0 %v201, 64
  %v243 = vpop.permute.xlu0 %242
  %244 = vrot.lane.b32.xlu0 %v202, 64
  %v245 = vpop.permute.xlu0 %244
  %246 = vrot.lane.b32.xlu0 %v203, 64
  %v247 = vpop.permute.xlu0 %246
  %248 = vrot.lane.b32.xlu0 %v204, 64
  %v249 = vpop.permute.xlu0 %248
  %250 = vrot.lane.b32.xlu0 %v205, 64
  %v251 = vpop.permute.xlu0 %250
  %252 = vrot.lane.b32.xlu0 %v206, 64
  %v253 = vpop.permute.xlu0 %252
  %254 = vrot.lane.b32.xlu0 %v207, 64
  %v255 = vpop.permute.xlu0 %254
  %256 = vrot.lane.b32.xlu0 %v208, 64
  %v257 = vpop.permute.xlu0 %256
  %258 = vrot.lane.b32.xlu0 %v209, 64
  %v259 = vpop.permute.xlu0 %258
  %260 = vrot.lane.b32.xlu0 %v210, 64
  %v261 = vpop.permute.xlu0 %260
  %262 = vrot.lane.b32.xlu0 %v211, 64
  %v263 = vpop.permute.xlu0 %262
  %264 = vrot.lane.b32.xlu0 %v212, 64
  %v265 = vpop.permute.xlu0 %264
  %266 = vrot.lane.b32.xlu0 %v213, 64
  %v267 = vpop.permute.xlu0 %266
  %v286 = vsel %vm139, %v178, %v233
  %v287 = vsel %vm139, %v179, %v235
  %v288 = vsel %vm139, %v180, %v237
  %v289 = vsel %vm139, %v181, %v239
  %v290 = vsel %vm139, %v182, %v241
  %v291 = vsel %vm139, %v183, %v243
  %v292 = vsel %vm139, %v184, %v245
  %v293 = vsel %vm139, %v185, %v247
  %v294 = vsel %vm139, %v186, %v249
  %v295 = vsel %vm139, %v187, %v251
  %v296 = vsel %vm139, %v188, %v253
  %v297 = vsel %vm139, %v189, %v255
  %v298 = vsel %vm139, %v190, %v257
  %v299 = vsel %vm139, %v191, %v259
  %v300 = vsel %vm139, %v192, %v261
  %v301 = vsel %vm139, %v193, %v263
  %v302 = vsel %vm139, %v194, %v265
  %v303 = vsel %vm139, %v195, %v267
  %v304 = vld [vmem:[%s6] sm:$0x1]
  %v305 = vld [vmem:[%s3] sm:$0xff]
  %v306 = vld [vmem:[%s3 + $0x8] sm:$0xff]
  %v307 = vld [vmem:[%s3 + $0x10] sm:$0xff]
  %v308 = vld [vmem:[%s3 + $0x18] sm:$0xff]
  %v309 = vld [vmem:[%s3 + $0x20] sm:$0xff]
  %v310 = vld [vmem:[%s3 + $0x28] sm:$0xff]
  %v311 = vld [vmem:[%s3 + $0x30] sm:$0xff]
  %v312 = vld [vmem:[%s3 + $0x38] sm:$0xff]
  %v313 = vld [vmem:[%s3 + $0x40] sm:$0xff]
  %v314 = vld [vmem:[%s3 + $0x48] sm:$0xff]
  %v315 = vld [vmem:[%s3 + $0x50] sm:$0xff]
  %v316 = vld [vmem:[%s3 + $0x58] sm:$0xff]
  %v317 = vld [vmem:[%s3 + $0x60] sm:$0xff]
  %v318 = vld [vmem:[%s3 + $0x68] sm:$0xff]
  %v319 = vld [vmem:[%s3 + $0x70] sm:$0xff]
  %v320 = vld [vmem:[%s3 + $0x78] sm:$0xff]
  %v322 = vlaneseq
  %v323 = vshrl.u32 %v322, 7
  %v324 = vsub.s32 0, %v323
  %v325 = vrot.slane %v304, %v324
  %327 = vmatprep.subr.mxu0 0.0
  %328 = vmatpush1.msra.mxu0 %v305
  %329 = vmatprep.subr.mxu0 0.0
  %330 = vmatpush1.msra.mxu0 %v306
  %331 = vmatprep.subr.mxu0 0.0
  %332 = vmatpush1.msra.mxu0 %v307
  %333 = vmatprep.subr.mxu0 0.0
  %334 = vmatpush1.msra.mxu0 %v308
  %335 = vmatprep.subr.mxu0 0.0
  %336 = vmatpush1.msra.mxu0 %v309
  %337 = vmatprep.subr.mxu0 0.0
  %338 = vmatpush1.msra.mxu0 %v310
  %339 = vmatprep.subr.mxu0 0.0
  %340 = vmatpush1.msra.mxu0 %v311
  %341 = vmatprep.subr.mxu0 0.0
  %342 = vmatpush1.msra.mxu0 %v312
  %343 = vmatprep.subr.mxu0 0.0
  %344 = vmatpush1.msra.mxu0 %v313
  %345 = vmatprep.subr.mxu0 0.0
  %346 = vmatpush1.msra.mxu0 %v314
  %347 = vmatprep.subr.mxu0 0.0
  %348 = vmatpush1.msra.mxu0 %v315
  %349 = vmatprep.subr.mxu0 0.0
  %350 = vmatpush1.msra.mxu0 %v316
  %351 = vmatprep.subr.mxu0 0.0
  %352 = vmatpush1.msra.mxu0 %v317
  %353 = vmatprep.subr.mxu0 0.0
  %354 = vmatpush1.msra.mxu0 %v318
  %355 = vmatprep.subr.mxu0 0.0
  %356 = vmatpush1.msra.mxu0 %v319
  %357 = vmatprep.subr.mxu0 0.0
  %358 = vmatpush1.msra.mxu0 %v320
  %359 = vmatprep.subr.mxu0 0.0
  %360 = vmatpush1.msra.mxu0 0.0
  %361 = vmatprep.subr.mxu0 0.0
  %362 = vmatpush1.msra.mxu0 0.0
  %363 = vmatprep.subr.mxu0 0.0
  %364 = vmatpush1.msra.mxu0 0.0
  %365 = vmatprep.subr.mxu0 0.0
  %366 = vmatpush1.msra.mxu0 0.0
  %367 = vmatprep.subr.mxu0 0.0
  %368 = vmatpush1.msra.mxu0 0.0
  %369 = vmatprep.subr.mxu0 0.0
  %370 = vmatpush1.msra.mxu0 0.0
  %371 = vmatprep.subr.mxu0 0.0
  %372 = vmatpush1.msra.mxu0 0.0
  %373 = vmatprep.subr.mxu0 0.0
  %374 = vmatpush1.msra.mxu0 0.0
  %375 = vmatprep.subr.mxu0 0.0
  %376 = vmatpush1.msra.mxu0 0.0
  %377 = vmatprep.subr.mxu0 0.0
  %378 = vmatpush1.msra.mxu0 0.0
  %379 = vmatprep.subr.mxu0 0.0
  %380 = vmatpush1.msra.mxu0 0.0
  %381 = vmatprep.subr.mxu0 0.0
  %382 = vmatpush1.msra.mxu0 0.0
  %383 = vmatprep.subr.mxu0 0.0
  %384 = vmatpush1.msra.mxu0 0.0
  %385 = vmatprep.subr.mxu0 0.0
  %386 = vmatpush1.msra.mxu0 0.0
  %387 = vmatprep.subr.mxu0 0.0
  %388 = vmatpush1.msra.mxu0 0.0
  %389 = vmatprep.subr.mxu0 0.0
  %390 = vmatpush1.msra.mxu0 0.0
  %391 = vmatprep.mubr.f32.mxu0 0.0
  %392 = vmatmul.mubr.f32.gmra.mrb[0].mxu0 %v286
  %v393 = vpop.f32.mrb[0].mxu0
  %v394 = vadd.f32 %v325, %v393
  %v395 = vpop.f32.mrb[0].mxu0
  %396 = vmatprep.mubr.f32.mxu0 0.0
  %397 = vmatmul.mubr.f32.gmra.mrb[0].mxu0 %v287
  %v398 = vpop.f32.mrb[0].mxu0
  %v399 = vadd.f32 %v325, %v398
  %v400 = vpop.f32.mrb[0].mxu0
  %401 = vmatprep.mubr.f32.mxu0 0.0
  %402 = vmatmul.mubr.f32.gmra.mrb[0].mxu0 %v288
  %v403 = vpop.f32.mrb[0].mxu0
  %v404 = vadd.f32 %v325, %v403
  %v405 = vpop.f32.mrb[0].mxu0
  %406 = vmatprep.mubr.f32.mxu0 0.0
  %407 = vmatmul.mubr.f32.gmra.mrb[0].mxu0 %v289
  %v408 = vpop.f32.mrb[0].mxu0
  %v409 = vadd.f32 %v325, %v408
  %v410 = vpop.f32.mrb[0].mxu0
  %411 = vmatprep.mubr.f32.mxu0 0.0
  %412 = vmatmul.mubr.f32.gmra.mrb[0].mxu0 %v290
  %v413 = vpop.f32.mrb[0].mxu0
  %v414 = vadd.f32 %v325, %v413
  %v415 = vpop.f32.mrb[0].mxu0
  %416 = vmatprep.mubr.f32.mxu0 0.0
  %417 = vmatmul.mubr.f32.gmra.mrb[0].mxu0 %v291
  %v418 = vpop.f32.mrb[0].mxu0
  %v419 = vadd.f32 %v325, %v418
  %v420 = vpop.f32.mrb[0].mxu0
  %421 = vmatprep.mubr.f32.mxu0 0.0
  %422 = vmatmul.mubr.f32.gmra.mrb[0].mxu0 %v292
  %v423 = vpop.f32.mrb[0].mxu0
  %v424 = vadd.f32 %v325, %v423
  %v425 = vpop.f32.mrb[0].mxu0
  %426 = vmatprep.mubr.f32.mxu0 0.0
  %427 = vmatmul.mubr.f32.gmra.mrb[0].mxu0 %v293
  %v428 = vpop.f32.mrb[0].mxu0
  %v429 = vadd.f32 %v325, %v428
  %v430 = vpop.f32.mrb[0].mxu0
  %431 = vmatprep.mubr.f32.mxu0 0.0
  %432 = vmatmul.mubr.f32.gmra.mrb[0].mxu0 %v295
  %v433 = vpop.f32.mrb[0].mxu0
  %v434 = vadd.f32 %v325, %v433
  %v435 = vpop.f32.mrb[0].mxu0
  %436 = vmatprep.mubr.f32.mxu0 0.0
  %437 = vmatmul.mubr.f32.gmra.mrb[0].mxu0 %v296
  %v438 = vpop.f32.mrb[0].mxu0
  %v439 = vadd.f32 %v325, %v438
  %v440 = vpop.f32.mrb[0].mxu0
  %441 = vmatprep.mubr.f32.mxu0 0.0
  %442 = vmatmul.mubr.f32.gmra.mrb[0].mxu0 %v297
  %v443 = vpop.f32.mrb[0].mxu0
  %v444 = vadd.f32 %v325, %v443
  %v445 = vpop.f32.mrb[0].mxu0
  %446 = vmatprep.mubr.f32.mxu0 0.0
  %447 = vmatmul.mubr.f32.gmra.mrb[0].mxu0 %v298
  %v448 = vpop.f32.mrb[0].mxu0
  %v449 = vadd.f32 %v325, %v448
  %v450 = vpop.f32.mrb[0].mxu0
  %451 = vmatprep.mubr.f32.mxu0 0.0
  %452 = vmatmul.mubr.f32.gmra.mrb[0].mxu0 %v299
  %v453 = vpop.f32.mrb[0].mxu0
  %v454 = vadd.f32 %v325, %v453
  %v455 = vpop.f32.mrb[0].mxu0
  %456 = vmatprep.mubr.f32.mxu0 0.0
  %457 = vmatmul.mubr.f32.gmra.mrb[0].mxu0 %v300
  %v458 = vpop.f32.mrb[0].mxu0
  %v459 = vadd.f32 %v325, %v458
  %v460 = vpop.f32.mrb[0].mxu0
  %461 = vmatprep.mubr.f32.mxu0 0.0
  %462 = vmatmul.mubr.f32.gmra.mrb[0].mxu0 %v301
  %v463 = vpop.f32.mrb[0].mxu0
  %v464 = vadd.f32 %v325, %v463
  %v465 = vpop.f32.mrb[0].mxu0
  %466 = vmatprep.mubr.f32.mxu0 0.0
  %467 = vmatmul.mubr.f32.gmra.mrb[0].mxu0 %v302
  %v468 = vpop.f32.mrb[0].mxu0
  %v469 = vadd.f32 %v325, %v468
  %v470 = vpop.f32.mrb[0].mxu0
  %471 = vdwg.mxu0
  %v472 = vld [vmem:[%s4] sm:$0xff]
  %v473 = vld [vmem:[%s4 + $0x8] sm:$0xff]
  %v474 = vld [vmem:[%s4 + $0x10] sm:$0xff]
  %v475 = vld [vmem:[%s4 + $0x18] sm:$0xff]
  %v476 = vld [vmem:[%s4 + $0x20] sm:$0xff]
  %v477 = vld [vmem:[%s4 + $0x28] sm:$0xff]
  %v478 = vld [vmem:[%s4 + $0x30] sm:$0xff]
  %v479 = vld [vmem:[%s4 + $0x38] sm:$0xff]
  %v480 = vld [vmem:[%s4 + $0x40] sm:$0xff]
  %v481 = vld [vmem:[%s4 + $0x48] sm:$0xff]
  %v482 = vld [vmem:[%s4 + $0x50] sm:$0xff]
  %v483 = vld [vmem:[%s4 + $0x58] sm:$0xff]
  %v484 = vld [vmem:[%s4 + $0x60] sm:$0xff]
  %v485 = vld [vmem:[%s4 + $0x68] sm:$0xff]
  %v486 = vld [vmem:[%s4 + $0x70] sm:$0xff]
  %v487 = vld [vmem:[%s4 + $0x78] sm:$0xff]
  %v488 = vld [vmem:[%s5] sm:$0xff]
  %v489 = vld [vmem:[%s5 + $0x8] sm:$0xff]
  %v490 = vld [vmem:[%s5 + $0x10] sm:$0xff]
  %v491 = vld [vmem:[%s5 + $0x18] sm:$0xff]
  %v492 = vld [vmem:[%s5 + $0x20] sm:$0xff]
  %v493 = vld [vmem:[%s5 + $0x28] sm:$0xff]
  %v494 = vld [vmem:[%s5 + $0x30] sm:$0xff]
  %v495 = vld [vmem:[%s5 + $0x38] sm:$0xff]
  %v496 = vld [vmem:[%s5 + $0x40] sm:$0xff]
  %v497 = vld [vmem:[%s5 + $0x48] sm:$0xff]
  %v498 = vld [vmem:[%s5 + $0x50] sm:$0xff]
  %v499 = vld [vmem:[%s5 + $0x58] sm:$0xff]
  %v500 = vld [vmem:[%s5 + $0x60] sm:$0xff]
  %v501 = vld [vmem:[%s5 + $0x68] sm:$0xff]
  %v502 = vld [vmem:[%s5 + $0x70] sm:$0xff]
  %v503 = vld [vmem:[%s5 + $0x78] sm:$0xff]
  %504 = vmatprep.subr.mxu0 0.0
  %505 = vmatpush1.msra.mxu0 %v488
  %506 = vmatprep.subr.mxu0 0.0
  %507 = vmatpush1.msra.mxu0 %v489
  %508 = vmatprep.subr.mxu0 0.0
  %509 = vmatpush1.msra.mxu0 %v490
  %510 = vmatprep.subr.mxu0 0.0
  %511 = vmatpush1.msra.mxu0 %v491
  %512 = vmatprep.subr.mxu0 0.0
  %513 = vmatpush1.msra.mxu0 %v492
  %514 = vmatprep.subr.mxu0 0.0
  %515 = vmatpush1.msra.mxu0 %v493
  %516 = vmatprep.subr.mxu0 0.0
  %517 = vmatpush1.msra.mxu0 %v494
  %518 = vmatprep.subr.mxu0 0.0
  %519 = vmatpush1.msra.mxu0 %v495
  %520 = vmatprep.subr.mxu0 0.0
  %521 = vmatpush1.msra.mxu0 %v496
  %522 = vmatprep.subr.mxu0 0.0
  %523 = vmatpush1.msra.mxu0 %v497
  %524 = vmatprep.subr.mxu0 0.0
  %525 = vmatpush1.msra.mxu0 %v498
  %526 = vmatprep.subr.mxu0 0.0
  %527 = vmatpush1.msra.mxu0 %v499
  %528 = vmatprep.subr.mxu0 0.0
  %529 = vmatpush1.msra.mxu0 %v500
  %530 = vmatprep.subr.mxu0 0.0
  %531 = vmatpush1.msra.mxu0 %v501
  %532 = vmatprep.subr.mxu0 0.0
  %533 = vmatpush1.msra.mxu0 %v502
  %534 = vmatprep.subr.mxu0 0.0
  %535 = vmatpush1.msra.mxu0 %v503
  %536 = vmatprep.subr.mxu0 0.0
  %537 = vmatpush1.msra.mxu0 0.0
  %538 = vmatprep.subr.mxu0 0.0
  %539 = vmatpush1.msra.mxu0 0.0
  %540 = vmatprep.subr.mxu0 0.0
  %541 = vmatpush1.msra.mxu0 0.0
  %542 = vmatprep.subr.mxu0 0.0
  %543 = vmatpush1.msra.mxu0 0.0
  %544 = vmatprep.subr.mxu0 0.0
  %545 = vmatpush1.msra.mxu0 0.0
  %546 = vmatprep.subr.mxu0 0.0
  %547 = vmatpush1.msra.mxu0 0.0
  %548 = vmatprep.subr.mxu0 0.0
  %549 = vmatpush1.msra.mxu0 0.0
  %550 = vmatprep.subr.mxu0 0.0
  %551 = vmatpush1.msra.mxu0 0.0
  %552 = vmatprep.subr.mxu0 0.0
  %553 = vmatpush1.msra.mxu0 0.0
  %554 = vmatprep.subr.mxu0 0.0
  %555 = vmatpush1.msra.mxu0 0.0
  %556 = vmatprep.subr.mxu0 0.0
  %557 = vmatpush1.msra.mxu0 0.0
  %558 = vmatprep.subr.mxu0 0.0
  %559 = vmatpush1.msra.mxu0 0.0
  %560 = vmatprep.subr.mxu0 0.0
  %561 = vmatpush1.msra.mxu0 0.0
  %562 = vmatprep.subr.mxu0 0.0
  %563 = vmatpush1.msra.mxu0 0.0
  %564 = vmatprep.subr.mxu0 0.0
  %565 = vmatpush1.msra.mxu0 0.0
  %566 = vmatprep.subr.mxu0 0.0
  %567 = vmatpush1.msra.mxu0 0.0
  %568 = vmatprep.mubr.f32.mxu0 0.0
  %569 = vmatmul.mubr.f32.gmra.mrb[0].mxu0 %v287
  %v570 = vpop.f32.mrb[0].mxu0
  %v571 = vadd.f32 0.0, %v570
  %v572 = vpop.f32.mrb[0].mxu0
  %573 = vmatprep.mubr.f32.mxu0 0.0
  %574 = vmatmul.mubr.f32.gmra.mrb[0].mxu0 %v288
  %v575 = vpop.f32.mrb[0].mxu0
  %v576 = vadd.f32 0.0, %v575
  %v577 = vpop.f32.mrb[0].mxu0
  %578 = vmatprep.mubr.f32.mxu0 0.0
  %579 = vmatmul.mubr.f32.gmra.mrb[0].mxu0 %v289
  %v580 = vpop.f32.mrb[0].mxu0
  %v581 = vadd.f32 0.0, %v580
  %v582 = vpop.f32.mrb[0].mxu0
  %583 = vmatprep.mubr.f32.mxu0 0.0
  %584 = vmatmul.mubr.f32.gmra.mrb[0].mxu0 %v290
  %v585 = vpop.f32.mrb[0].mxu0
  %v586 = vadd.f32 0.0, %v585
  %v587 = vpop.f32.mrb[0].mxu0
  %588 = vmatprep.mubr.f32.mxu0 0.0
  %589 = vmatmul.mubr.f32.gmra.mrb[0].mxu0 %v291
  %v590 = vpop.f32.mrb[0].mxu0
  %v591 = vadd.f32 0.0, %v590
  %v592 = vpop.f32.mrb[0].mxu0
  %593 = vmatprep.mubr.f32.mxu0 0.0
  %594 = vmatmul.mubr.f32.gmra.mrb[0].mxu0 %v292
  %v595 = vpop.f32.mrb[0].mxu0
  %v596 = vadd.f32 0.0, %v595
  %v597 = vpop.f32.mrb[0].mxu0
  %598 = vmatprep.mubr.f32.mxu0 0.0
  %599 = vmatmul.mubr.f32.gmra.mrb[0].mxu0 %v293
  %v600 = vpop.f32.mrb[0].mxu0
  %v601 = vadd.f32 0.0, %v600
  %v602 = vpop.f32.mrb[0].mxu0
  %603 = vmatprep.mubr.f32.mxu0 0.0
  %604 = vmatmul.mubr.f32.gmra.mrb[0].mxu0 %v294
  %v605 = vpop.f32.mrb[0].mxu0
  %v606 = vadd.f32 0.0, %v605
  %v607 = vpop.f32.mrb[0].mxu0
  %608 = vmatprep.mubr.f32.mxu0 0.0
  %609 = vmatmul.mubr.f32.gmra.mrb[0].mxu0 %v296
  %v610 = vpop.f32.mrb[0].mxu0
  %v611 = vadd.f32 0.0, %v610
  %v612 = vpop.f32.mrb[0].mxu0
  %613 = vmatprep.mubr.f32.mxu0 0.0
  %614 = vmatmul.mubr.f32.gmra.mrb[0].mxu0 %v297
  %v615 = vpop.f32.mrb[0].mxu0
  %v616 = vadd.f32 0.0, %v615
  %v617 = vpop.f32.mrb[0].mxu0
  %618 = vmatprep.mubr.f32.mxu0 0.0
  %619 = vmatmul.mubr.f32.gmra.mrb[0].mxu0 %v298
  %v620 = vpop.f32.mrb[0].mxu0
  %v621 = vadd.f32 0.0, %v620
  %v622 = vpop.f32.mrb[0].mxu0
  %623 = vmatprep.mubr.f32.mxu0 0.0
  %624 = vmatmul.mubr.f32.gmra.mrb[0].mxu0 %v299
  %v625 = vpop.f32.mrb[0].mxu0
  %v626 = vadd.f32 0.0, %v625
  %v627 = vpop.f32.mrb[0].mxu0
  %628 = vmatprep.mubr.f32.mxu0 0.0
  %629 = vmatmul.mubr.f32.gmra.mrb[0].mxu0 %v300
  %v630 = vpop.f32.mrb[0].mxu0
  %v631 = vadd.f32 0.0, %v630
  %v632 = vpop.f32.mrb[0].mxu0
  %633 = vmatprep.mubr.f32.mxu0 0.0
  %634 = vmatmul.mubr.f32.gmra.mrb[0].mxu0 %v301
  %v635 = vpop.f32.mrb[0].mxu0
  %v636 = vadd.f32 0.0, %v635
  %v637 = vpop.f32.mrb[0].mxu0
  %638 = vmatprep.mubr.f32.mxu0 0.0
  %639 = vmatmul.mubr.f32.gmra.mrb[0].mxu0 %v302
  %v640 = vpop.f32.mrb[0].mxu0
  %v641 = vadd.f32 0.0, %v640
  %v642 = vpop.f32.mrb[0].mxu0
  %643 = vmatprep.mubr.f32.mxu0 0.0
  %644 = vmatmul.mubr.f32.gmra.mrb[0].mxu0 %v303
  %v645 = vpop.f32.mrb[0].mxu0
  %v646 = vadd.f32 0.0, %v645
  %v647 = vpop.f32.mrb[0].mxu0
  %648 = vdwg.mxu0
  %649 = vmatprep.subr.mxu0 0.0
  %650 = vmatpush1.msra.mxu0 %v472
  %651 = vmatprep.subr.mxu0 0.0
  %652 = vmatpush1.msra.mxu0 %v473
  %653 = vmatprep.subr.mxu0 0.0
  %654 = vmatpush1.msra.mxu0 %v474
  %655 = vmatprep.subr.mxu0 0.0
  %656 = vmatpush1.msra.mxu0 %v475
  %657 = vmatprep.subr.mxu0 0.0
  %658 = vmatpush1.msra.mxu0 %v476
  %659 = vmatprep.subr.mxu0 0.0
  %660 = vmatpush1.msra.mxu0 %v477
  %661 = vmatprep.subr.mxu0 0.0
  %662 = vmatpush1.msra.mxu0 %v478
  %663 = vmatprep.subr.mxu0 0.0
  %664 = vmatpush1.msra.mxu0 %v479
  %665 = vmatprep.subr.mxu0 0.0
  %666 = vmatpush1.msra.mxu0 %v480
  %667 = vmatprep.subr.mxu0 0.0
  %668 = vmatpush1.msra.mxu0 %v481
  %669 = vmatprep.subr.mxu0 0.0
  %670 = vmatpush1.msra.mxu0 %v482
  %671 = vmatprep.subr.mxu0 0.0
  %672 = vmatpush1.msra.mxu0 %v483
  %673 = vmatprep.subr.mxu0 0.0
  %674 = vmatpush1.msra.mxu0 %v484
  %675 = vmatprep.subr.mxu0 0.0
  %676 = vmatpush1.msra.mxu0 %v485
  %677 = vmatprep.subr.mxu0 0.0
  %678 = vmatpush1.msra.mxu0 %v486
  %679 = vmatprep.subr.mxu0 0.0
  %680 = vmatpush1.msra.mxu0 %v487
  %681 = vmatprep.subr.mxu0 0.0
  %682 = vmatpush1.msra.mxu0 0.0
  %683 = vmatprep.subr.mxu0 0.0
  %684 = vmatpush1.msra.mxu0 0.0
  %685 = vmatprep.subr.mxu0 0.0
  %686 = vmatpush1.msra.mxu0 0.0
  %687 = vmatprep.subr.mxu0 0.0
  %688 = vmatpush1.msra.mxu0 0.0
  %689 = vmatprep.subr.mxu0 0.0
  %690 = vmatpush1.msra.mxu0 0.0
  %691 = vmatprep.subr.mxu0 0.0
  %692 = vmatpush1.msra.mxu0 0.0
  %693 = vmatprep.subr.mxu0 0.0
  %694 = vmatpush1.msra.mxu0 0.0
  %695 = vmatprep.subr.mxu0 0.0
  %696 = vmatpush1.msra.mxu0 0.0
  %697 = vmatprep.subr.mxu0 0.0
  %698 = vmatpush1.msra.mxu0 0.0
  %699 = vmatprep.subr.mxu0 0.0
  %700 = vmatpush1.msra.mxu0 0.0
  %701 = vmatprep.subr.mxu0 0.0
  %702 = vmatpush1.msra.mxu0 0.0
  %703 = vmatprep.subr.mxu0 0.0
  %704 = vmatpush1.msra.mxu0 0.0
  %705 = vmatprep.subr.mxu0 0.0
  %706 = vmatpush1.msra.mxu0 0.0
  %707 = vmatprep.subr.mxu0 0.0
  %708 = vmatpush1.msra.mxu0 0.0
  %709 = vmatprep.subr.mxu0 0.0
  %710 = vmatpush1.msra.mxu0 0.0
  %711 = vmatprep.subr.mxu0 0.0
  %712 = vmatpush1.msra.mxu0 0.0
  %713 = vmatprep.mubr.f32.mxu0 0.0
  %714 = vmatmul.mubr.f32.gmra.mrb[0].mxu0 %v286
  %v715 = vpop.f32.mrb[0].mxu0
  %v716 = vadd.f32 %v571, %v715
  %v717 = vpop.f32.mrb[0].mxu0
  %718 = vmatprep.mubr.f32.mxu0 0.0
  %719 = vmatmul.mubr.f32.gmra.mrb[0].mxu0 %v287
  %v720 = vpop.f32.mrb[0].mxu0
  %v721 = vadd.f32 %v576, %v720
  %v722 = vpop.f32.mrb[0].mxu0
  %723 = vmatprep.mubr.f32.mxu0 0.0
  %724 = vmatmul.mubr.f32.gmra.mrb[0].mxu0 %v288
  %v725 = vpop.f32.mrb[0].mxu0
  %v726 = vadd.f32 %v581, %v725
  %v727 = vpop.f32.mrb[0].mxu0
  %728 = vmatprep.mubr.f32.mxu0 0.0
  %729 = vmatmul.mubr.f32.gmra.mrb[0].mxu0 %v289
  %v730 = vpop.f32.mrb[0].mxu0
  %v731 = vadd.f32 %v586, %v730
  %v732 = vpop.f32.mrb[0].mxu0
  %733 = vmatprep.mubr.f32.mxu0 0.0
  %734 = vmatmul.mubr.f32.gmra.mrb[0].mxu0 %v290
  %v735 = vpop.f32.mrb[0].mxu0
  %v736 = vadd.f32 %v591, %v735
  %v737 = vpop.f32.mrb[0].mxu0
  %738 = vmatprep.mubr.f32.mxu0 0.0
  %739 = vmatmul.mubr.f32.gmra.mrb[0].mxu0 %v291
  %v740 = vpop.f32.mrb[0].mxu0
  %v741 = vadd.f32 %v596, %v740
  %v742 = vpop.f32.mrb[0].mxu0
  %743 = vmatprep.mubr.f32.mxu0 0.0
  %744 = vmatmul.mubr.f32.gmra.mrb[0].mxu0 %v292
  %v745 = vpop.f32.mrb[0].mxu0
  %v746 = vadd.f32 %v601, %v745
  %v747 = vpop.f32.mrb[0].mxu0
  %748 = vmatprep.mubr.f32.mxu0 0.0
  %749 = vmatmul.mubr.f32.gmra.mrb[0].mxu0 %v293
  %v750 = vpop.f32.mrb[0].mxu0
  %v751 = vadd.f32 %v606, %v750
  %v752 = vpop.f32.mrb[0].mxu0
  %753 = vmatprep.mubr.f32.mxu0 0.0
  %754 = vmatmul.mubr.f32.gmra.mrb[0].mxu0 %v295
  %v755 = vpop.f32.mrb[0].mxu0
  %v756 = vadd.f32 %v611, %v755
  %v757 = vpop.f32.mrb[0].mxu0
  %758 = vmatprep.mubr.f32.mxu0 0.0
  %759 = vmatmul.mubr.f32.gmra.mrb[0].mxu0 %v296
  %v760 = vpop.f32.mrb[0].mxu0
  %v761 = vadd.f32 %v616, %v760
  %v762 = vpop.f32.mrb[0].mxu0
  %763 = vmatprep.mubr.f32.mxu0 0.0
  %764 = vmatmul.mubr.f32.gmra.mrb[0].mxu0 %v297
  %v765 = vpop.f32.mrb[0].mxu0
  %v766 = vadd.f32 %v621, %v765
  %v767 = vpop.f32.mrb[0].mxu0
  %768 = vmatprep.mubr.f32.mxu0 0.0
  %769 = vmatmul.mubr.f32.gmra.mrb[0].mxu0 %v298
  %v770 = vpop.f32.mrb[0].mxu0
  %v771 = vadd.f32 %v626, %v770
  %v772 = vpop.f32.mrb[0].mxu0
  %773 = vmatprep.mubr.f32.mxu0 0.0
  %774 = vmatmul.mubr.f32.gmra.mrb[0].mxu0 %v299
  %v775 = vpop.f32.mrb[0].mxu0
  %v776 = vadd.f32 %v631, %v775
  %v777 = vpop.f32.mrb[0].mxu0
  %778 = vmatprep.mubr.f32.mxu0 0.0
  %779 = vmatmul.mubr.f32.gmra.mrb[0].mxu0 %v300
  %v780 = vpop.f32.mrb[0].mxu0
  %v781 = vadd.f32 %v636, %v780
  %v782 = vpop.f32.mrb[0].mxu0
  %783 = vmatprep.mubr.f32.mxu0 0.0
  %784 = vmatmul.mubr.f32.gmra.mrb[0].mxu0 %v301
  %v785 = vpop.f32.mrb[0].mxu0
  %v786 = vadd.f32 %v641, %v785
  %v787 = vpop.f32.mrb[0].mxu0
  %788 = vmatprep.mubr.f32.mxu0 0.0
  %789 = vmatmul.mubr.f32.gmra.mrb[0].mxu0 %v302
  %v790 = vpop.f32.mrb[0].mxu0
  %v791 = vadd.f32 %v646, %v790
  %v792 = vpop.f32.mrb[0].mxu0
  %793 = vdwg.mxu0
  %v794 = vadd.f32 %v716, %v325
  %v795 = vadd.f32 %v721, %v325
  %v796 = vadd.f32 %v726, %v325
  %v797 = vadd.f32 %v731, %v325
  %v798 = vadd.f32 %v736, %v325
  %v799 = vadd.f32 %v741, %v325
  %v800 = vadd.f32 %v746, %v325
  %v801 = vadd.f32 %v751, %v325
  %v802 = vadd.f32 %v756, %v325
  %v803 = vadd.f32 %v761, %v325
  %v804 = vadd.f32 %v766, %v325
  %v805 = vadd.f32 %v771, %v325
  %v806 = vadd.f32 %v776, %v325
  %v807 = vadd.f32 %v781, %v325
  %v808 = vadd.f32 %v786, %v325
  %v809 = vadd.f32 %v791, %v325
  %810 = vst [vmem:[%s7] sm:$0xff] %v394
  %811 = vst [vmem:[%s7 + $0x10] sm:$0xff] %v399
  %812 = vst [vmem:[%s7 + $0x20] sm:$0xff] %v404
  %813 = vst [vmem:[%s7 + $0x30] sm:$0xff] %v409
  %814 = vst [vmem:[%s7 + $0x40] sm:$0xff] %v414
  %815 = vst [vmem:[%s7 + $0x50] sm:$0xff] %v419
  %816 = vst [vmem:[%s7 + $0x60] sm:$0xff] %v424
  %817 = vst [vmem:[%s7 + $0x70] sm:$0xff] %v429
  %818 = vst [vmem:[%s7 + $0x80] sm:$0xff] %v434
  %819 = vst [vmem:[%s7 + $0x90] sm:$0xff] %v439
  %820 = vst [vmem:[%s7 + $0xa0] sm:$0xff] %v444
  %821 = vst [vmem:[%s7 + $0xb0] sm:$0xff] %v449
  %822 = vst [vmem:[%s7 + $0xc0] sm:$0xff] %v454
  %823 = vst [vmem:[%s7 + $0xd0] sm:$0xff] %v459
  %824 = vst [vmem:[%s7 + $0xe0] sm:$0xff] %v464
  %825 = vst [vmem:[%s7 + $0xf0] sm:$0xff] %v469
  %s826 = scalar_lea.vmem %s7, 8
  %827 = vst [vmem:[%s826] sm:$0xff] %v794
  %828 = vst [vmem:[%s826 + $0x10] sm:$0xff] %v795
  %829 = vst [vmem:[%s826 + $0x20] sm:$0xff] %v796
  %830 = vst [vmem:[%s826 + $0x30] sm:$0xff] %v797
  %831 = vst [vmem:[%s826 + $0x40] sm:$0xff] %v798
  %832 = vst [vmem:[%s826 + $0x50] sm:$0xff] %v799
  %833 = vst [vmem:[%s826 + $0x60] sm:$0xff] %v800
  %834 = vst [vmem:[%s826 + $0x70] sm:$0xff] %v801
  %835 = vst [vmem:[%s826 + $0x80] sm:$0xff] %v802
  %836 = vst [vmem:[%s826 + $0x90] sm:$0xff] %v803
  %837 = vst [vmem:[%s826 + $0xa0] sm:$0xff] %v804
  %838 = vst [vmem:[%s826 + $0xb0] sm:$0xff] %v805
  %839 = vst [vmem:[%s826 + $0xc0] sm:$0xff] %v806
  %840 = vst [vmem:[%s826 + $0xd0] sm:$0xff] %v807
  %841 = vst [vmem:[%s826 + $0xe0] sm:$0xff] %v808
  %842 = vst [vmem:[%s826 + $0xf0] sm:$0xff] %v809
  %v843 = vadd.f32 %v394, %v399
  %v844 = vadd.f32 %v843, %v404
  %v845 = vadd.f32 %v844, %v409
  %v846 = vadd.f32 %v845, %v414
  %v847 = vadd.f32 %v846, %v419
  %v848 = vadd.f32 %v847, %v424
  %v849 = vadd.f32 %v848, %v429
  %v850 = vadd.f32 %v849, %v434
  %v851 = vadd.f32 %v850, %v439
  %v852 = vadd.f32 %v851, %v444
  %v853 = vadd.f32 %v852, %v449
  %v854 = vadd.f32 %v853, %v454
  %v855 = vadd.f32 %v854, %v459
  %v856 = vadd.f32 %v855, %v464
  %v857 = vadd.f32 %v856, %v469
  %v858 = vrot.slane %v857, 4
  %v859 = vadd.f32 %v857, %v858
  %v860 = vrot.slane %v859, 2
  %v861 = vadd.f32 %v859, %v860
  %v862 = vrot.slane %v861, 1
  %v863 = vadd.f32 %v861, %v862
  %v864 = vadd.f32 %v794, %v795
  %v865 = vadd.f32 %v864, %v796
  %v866 = vadd.f32 %v865, %v797
  %v867 = vadd.f32 %v866, %v798
  %v868 = vadd.f32 %v867, %v799
  %v869 = vadd.f32 %v868, %v800
  %v870 = vadd.f32 %v869, %v801
  %v871 = vadd.f32 %v870, %v802
  %v872 = vadd.f32 %v871, %v803
  %v873 = vadd.f32 %v872, %v804
  %v874 = vadd.f32 %v873, %v805
  %v875 = vadd.f32 %v874, %v806
  %v876 = vadd.f32 %v875, %v807
  %v877 = vadd.f32 %v876, %v808
  %v878 = vadd.f32 %v877, %v809
  %v879 = vrot.slane %v878, 4
  %v880 = vadd.f32 %v878, %v879
  %v881 = vrot.slane %v880, 2
  %v882 = vadd.f32 %v880, %v881
  %v883 = vrot.slane %v882, 1
  %v884 = vadd.f32 %v882, %v883
  %v885 = vadd.f32 %v863, %v884
  %v886 = vmul.f32 %v885, 0.00390625
  %v887 = vsub.f32 %v394, %v886
  %v888 = vsub.f32 %v399, %v886
  %v889 = vsub.f32 %v404, %v886
  %v890 = vsub.f32 %v409, %v886
  %v891 = vsub.f32 %v414, %v886
  %v892 = vsub.f32 %v419, %v886
  %v893 = vsub.f32 %v424, %v886
  %v894 = vsub.f32 %v429, %v886
  %v895 = vsub.f32 %v434, %v886
  %v896 = vsub.f32 %v439, %v886
  %v897 = vsub.f32 %v444, %v886
  %v898 = vsub.f32 %v449, %v886
  %v899 = vsub.f32 %v454, %v886
  %v900 = vsub.f32 %v459, %v886
  %v901 = vsub.f32 %v464, %v886
  %v902 = vsub.f32 %v469, %v886
  %v903 = vsub.f32 %v794, %v886
  %v904 = vsub.f32 %v795, %v886
  %v905 = vsub.f32 %v796, %v886
  %v906 = vsub.f32 %v797, %v886
  %v907 = vsub.f32 %v798, %v886
  %v908 = vsub.f32 %v799, %v886
  %v909 = vsub.f32 %v800, %v886
  %v910 = vsub.f32 %v801, %v886
  %v911 = vsub.f32 %v802, %v886
  %v912 = vsub.f32 %v803, %v886
  %v913 = vsub.f32 %v804, %v886
  %v914 = vsub.f32 %v805, %v886
  %v915 = vsub.f32 %v806, %v886
  %v916 = vsub.f32 %v807, %v886
  %v917 = vsub.f32 %v808, %v886
  %v918 = vsub.f32 %v809, %v886
  %v919 = vmul.f32 %v887, %v887
  %v920 = vmul.f32 %v888, %v888
  %v921 = vmul.f32 %v889, %v889
  %v922 = vmul.f32 %v890, %v890
  %v923 = vmul.f32 %v891, %v891
  %v924 = vmul.f32 %v892, %v892
  %v925 = vmul.f32 %v893, %v893
  %v926 = vmul.f32 %v894, %v894
  %v927 = vmul.f32 %v895, %v895
  %v928 = vmul.f32 %v896, %v896
  %v929 = vmul.f32 %v897, %v897
  %v930 = vmul.f32 %v898, %v898
  %v931 = vmul.f32 %v899, %v899
  %v932 = vmul.f32 %v900, %v900
  %v933 = vmul.f32 %v901, %v901
  %v934 = vmul.f32 %v902, %v902
  %v935 = vadd.f32 %v919, %v920
  %v936 = vadd.f32 %v935, %v921
  %v937 = vadd.f32 %v936, %v922
  %v938 = vadd.f32 %v937, %v923
  %v939 = vadd.f32 %v938, %v924
  %v940 = vadd.f32 %v939, %v925
  %v941 = vadd.f32 %v940, %v926
  %v942 = vadd.f32 %v941, %v927
  %v943 = vadd.f32 %v942, %v928
  %v944 = vadd.f32 %v943, %v929
  %v945 = vadd.f32 %v944, %v930
  %v946 = vadd.f32 %v945, %v931
  %v947 = vadd.f32 %v946, %v932
  %v948 = vadd.f32 %v947, %v933
  %v949 = vadd.f32 %v948, %v934
  %v950 = vrot.slane %v949, 4
  %v951 = vadd.f32 %v949, %v950
  %v952 = vrot.slane %v951, 2
  %v953 = vadd.f32 %v951, %v952
  %v954 = vrot.slane %v953, 1
  %v955 = vadd.f32 %v953, %v954
  %v956 = vmul.f32 %v903, %v903
  %v957 = vmul.f32 %v904, %v904
  %v958 = vmul.f32 %v905, %v905
  %v959 = vmul.f32 %v906, %v906
  %v960 = vmul.f32 %v907, %v907
  %v961 = vmul.f32 %v908, %v908
  %v962 = vmul.f32 %v909, %v909
  %v963 = vmul.f32 %v910, %v910
  %v964 = vmul.f32 %v911, %v911
  %v965 = vmul.f32 %v912, %v912
  %v966 = vmul.f32 %v913, %v913
  %v967 = vmul.f32 %v914, %v914
  %v968 = vmul.f32 %v915, %v915
  %v969 = vmul.f32 %v916, %v916
  %v970 = vmul.f32 %v917, %v917
  %v971 = vmul.f32 %v918, %v918
  %v972 = vadd.f32 %v956, %v957
  %v973 = vadd.f32 %v972, %v958
  %v974 = vadd.f32 %v973, %v959
  %v975 = vadd.f32 %v974, %v960
  %v976 = vadd.f32 %v975, %v961
  %v977 = vadd.f32 %v976, %v962
  %v978 = vadd.f32 %v977, %v963
  %v979 = vadd.f32 %v978, %v964
  %v980 = vadd.f32 %v979, %v965
  %v981 = vadd.f32 %v980, %v966
  %v982 = vadd.f32 %v981, %v967
  %v983 = vadd.f32 %v982, %v968
  %v984 = vadd.f32 %v983, %v969
  %v985 = vadd.f32 %v984, %v970
  %v986 = vadd.f32 %v985, %v971
  %v987 = vrot.slane %v986, 4
  %v988 = vadd.f32 %v986, %v987
  %v989 = vrot.slane %v988, 2
  %v990 = vadd.f32 %v988, %v989
  %v991 = vrot.slane %v990, 1
  %v992 = vadd.f32 %v990, %v991
  %v993 = vadd.f32 %v955, %v992
  %994 = vst [vmem:[%s8] sm:$0x1] %v886
  %995 = vst [vmem:[%s9] sm:$0x1] %v993
  // Predicated region
  $region30: #{a_call__.4} parent=0 // pred_check
    _
  $region31: #{a_call__.4} parent=0 // pred_check_branch
    %997 = sbr.rel (0) target = $region33
  $region32: #{a_call__.4} parent=0 // pred_region
    _
  $region33: #{a_call__.4} parent=0 // pred_fallthru
    _
  // Predicated region
  $region34: #{a_call__.4} parent=0 // pred_check
    _
  $region35: #{a_call__.4} parent=0 // pred_check_branch
    %999 = sbr.rel (0) target = $region37
  $region36: #{a_call__.4} parent=0 // pred_region
    _
  $region37: #{a_call__.4} parent=0 // pred_fallthru
    _
  // Predicated region
  $region38: #{a_call__.4} parent=0 // pred_check
    _
  $region39: #{a_call__.4} parent=0 // pred_check_branch
    %1001 = sbr.rel (0) target = $region41
  $region40: #{a_call__.4} parent=0 // pred_region
    _
  $region41: #{a_call__.4} parent=0 // pred_fallthru
    _
  // Predicated region
  $region42: #{a_call__.4} parent=0 // pred_check
    _
  $region43: #{a_call__.4} parent=0 // pred_check_branch
    %1003 = sbr.rel (0) target = $region45
  $region44: #{a_call__.4} parent=0 // pred_region
    _
  $region45: #{a_call__.4} parent=0 // pred_fallthru
    _
  // Predicated region
  $region46: #{a_call__.4} parent=0 // pred_check
    _
  $region47: #{a_call__.4} parent=0 // pred_check_branch
    %1005 = sbr.rel (0) target = $region49
  $region48: #{a_call__.4} parent=0 // pred_region
    _
  $region49: #{a_call__.4} parent=0 // pred_fallthru
    _
  // Predicated region
  $region50: #{a_call__.4} parent=0 // pred_check
    _
  $region51: #{a_call__.4} parent=0 // pred_check_branch
    %1007 = sbr.rel (0) target = $region53
  $region52: #{a_call__.4} parent=0 // pred_region
    _
  $region53: #{a_call__.4} parent=0 // pred_fallthru
    _

// kernel: a_call__.5
$region0: #{a_call__.5}
  #allocation0 [shape = 'u32[]', space=smem, size = 0x4, offset = 0x4, fixed_abs, tag = 'smem constant byte address 0x4 - core index']
  #allocation1 [shape = 'u32[144,128]{1,0:T(1,128)}', space=vmem, size = 0x12000, scoped, tag = 'internal scratch']
  %s0 = inlined_call_operand.vmem [shape: f32[2,16,16,64], index: 0, kind: input, shape index: {}]
  %s1 = inlined_call_operand.vmem [shape: f32[1,1,1,64], index: 1, kind: input, shape index: {}]
  %s2 = inlined_call_operand.vmem [shape: f32[1,1,1,64], index: 2, kind: input, shape index: {}]
  %s3 = inlined_call_operand.vmem [shape: f32[2,16,16,64], index: 3, kind: output, shape index: {}]
  %s4 = sld [smem:[#allocation0]]
  $region22: #{a_call__.5} parent=0
    _
  %s6 = ssub.s32 1, %s4
  %s7 = scalar_select 0, %s6, %s4
  // Predicated region
  $region2: #{a_call__.5} parent=0 // pred_check
    _
  $region3: #{a_call__.5} parent=0 // pred_check_branch
    %9 = sbr.rel (0) target = $region5
  $region4: #{a_call__.5} parent=0 // pred_region
    _
  $region5: #{a_call__.5} parent=0 // pred_fallthru
    _
  // Predicated region
  $region6: #{a_call__.5} parent=0 // pred_check
    _
  $region7: #{a_call__.5} parent=0 // pred_check_branch
    %11 = sbr.rel (0) target = $region9
  $region8: #{a_call__.5} parent=0 // pred_region
    _
  $region9: #{a_call__.5} parent=0 // pred_fallthru
    _
  // Predicated region
  $region10: #{a_call__.5} parent=0 // pred_check
    _
  $region11: #{a_call__.5} parent=0 // pred_check_branch
    %13 = sbr.rel (0) target = $region13
  $region12: #{a_call__.5} parent=0 // pred_region
    _
  $region13: #{a_call__.5} parent=0 // pred_fallthru
    _
  %v14 = vld [vmem:[%s0] sm:$0xff]
  %v15 = vld [vmem:[%s0 + $0x8] sm:$0xff]
  %v16 = vld [vmem:[%s0 + $0x10] sm:$0xff]
  %v17 = vld [vmem:[%s0 + $0x18] sm:$0xff]
  %v18 = vld [vmem:[%s0 + $0x20] sm:$0xff]
  %v19 = vld [vmem:[%s0 + $0x28] sm:$0xff]
  %v20 = vld [vmem:[%s0 + $0x30] sm:$0xff]
  %v21 = vld [vmem:[%s0 + $0x38] sm:$0xff]
  %v22 = vld [vmem:[%s0 + $0x40] sm:$0xff]
  %v23 = vld [vmem:[%s0 + $0x48] sm:$0xff]
  %v24 = vld [vmem:[%s0 + $0x50] sm:$0xff]
  %v25 = vld [vmem:[%s0 + $0x58] sm:$0xff]
  %v26 = vld [vmem:[%s0 + $0x60] sm:$0xff]
  %v27 = vld [vmem:[%s0 + $0x68] sm:$0xff]
  %v28 = vld [vmem:[%s0 + $0x70] sm:$0xff]
  %v29 = vld [vmem:[%s0 + $0x78] sm:$0xff]
  %v30 = vld [vmem:[%s0 + $0x80] sm:$0xff]
  %v31 = vld [vmem:[%s0 + $0x88] sm:$0xff]
  %v32 = vld [vmem:[%s0 + $0x90] sm:$0xff]
  %v33 = vld [vmem:[%s0 + $0x98] sm:$0xff]
  %v34 = vld [vmem:[%s0 + $0xa0] sm:$0xff]
  %v35 = vld [vmem:[%s0 + $0xa8] sm:$0xff]
  %v36 = vld [vmem:[%s0 + $0xb0] sm:$0xff]
  %v37 = vld [vmem:[%s0 + $0xb8] sm:$0xff]
  %v38 = vld [vmem:[%s0 + $0xc0] sm:$0xff]
  %v39 = vld [vmem:[%s0 + $0xc8] sm:$0xff]
  %v40 = vld [vmem:[%s0 + $0xd0] sm:$0xff]
  %v41 = vld [vmem:[%s0 + $0xd8] sm:$0xff]
  %v42 = vld [vmem:[%s0 + $0xe0] sm:$0xff]
  %v43 = vld [vmem:[%s0 + $0xe8] sm:$0xff]
  %v44 = vld [vmem:[%s0 + $0xf0] sm:$0xff]
  %v45 = vld [vmem:[%s0 + $0xf8] sm:$0xff]
  %v46 = vld [vmem:[%s0 + $0x100] sm:$0xff]
  %v47 = vld [vmem:[%s0 + $0x108] sm:$0xff]
  %v48 = vld [vmem:[%s0 + $0x110] sm:$0xff]
  %v49 = vld [vmem:[%s0 + $0x118] sm:$0xff]
  %v50 = vld [vmem:[%s0 + $0x120] sm:$0xff]
  %v51 = vld [vmem:[%s0 + $0x128] sm:$0xff]
  %v52 = vld [vmem:[%s0 + $0x130] sm:$0xff]
  %v53 = vld [vmem:[%s0 + $0x138] sm:$0xff]
  %v54 = vld [vmem:[%s0 + $0x140] sm:$0xff]
  %v55 = vld [vmem:[%s0 + $0x148] sm:$0xff]
  %v56 = vld [vmem:[%s0 + $0x150] sm:$0xff]
  %v57 = vld [vmem:[%s0 + $0x158] sm:$0xff]
  %v58 = vld [vmem:[%s0 + $0x160] sm:$0xff]
  %v59 = vld [vmem:[%s0 + $0x168] sm:$0xff]
  %v60 = vld [vmem:[%s0 + $0x170] sm:$0xff]
  %v61 = vld [vmem:[%s0 + $0x178] sm:$0xff]
  %v62 = vld [vmem:[%s0 + $0x180] sm:$0xff]
  %v63 = vld [vmem:[%s0 + $0x188] sm:$0xff]
  %v64 = vld [vmem:[%s0 + $0x190] sm:$0xff]
  %v65 = vld [vmem:[%s0 + $0x198] sm:$0xff]
  %v66 = vld [vmem:[%s0 + $0x1a0] sm:$0xff]
  %v67 = vld [vmem:[%s0 + $0x1a8] sm:$0xff]
  %v68 = vld [vmem:[%s0 + $0x1b0] sm:$0xff]
  %v69 = vld [vmem:[%s0 + $0x1b8] sm:$0xff]
  %v70 = vld [vmem:[%s0 + $0x1c0] sm:$0xff]
  %v71 = vld [vmem:[%s0 + $0x1c8] sm:$0xff]
  %v72 = vld [vmem:[%s0 + $0x1d0] sm:$0xff]
  %v73 = vld [vmem:[%s0 + $0x1d8] sm:$0xff]
  %v74 = vld [vmem:[%s0 + $0x1e0] sm:$0xff]
  %v75 = vld [vmem:[%s0 + $0x1e8] sm:$0xff]
  %v76 = vld [vmem:[%s0 + $0x1f0] sm:$0xff]
  %v77 = vld [vmem:[%s0 + $0x1f8] sm:$0xff]
  %v78 = vld [vmem:[%s1] sm:$0x1]
  %v80 = vlaneseq
  %v81 = vshrl.u32 %v80, 7
  %v82 = vsub.s32 0, %v81
  %v83 = vrot.slane %v78, %v82
  %v85 = vmul.f32 %v14, %v83
  %v86 = vmul.f32 %v15, %v83
  %v87 = vmul.f32 %v16, %v83
  %v88 = vmul.f32 %v17, %v83
  %v89 = vmul.f32 %v18, %v83
  %v90 = vmul.f32 %v19, %v83
  %v91 = vmul.f32 %v20, %v83
  %v92 = vmul.f32 %v21, %v83
  %v93 = vmul.f32 %v22, %v83
  %v94 = vmul.f32 %v23, %v83
  %v95 = vmul.f32 %v24, %v83
  %v96 = vmul.f32 %v25, %v83
  %v97 = vmul.f32 %v26, %v83
  %v98 = vmul.f32 %v27, %v83
  %v99 = vmul.f32 %v28, %v83
  %v100 = vmul.f32 %v29, %v83
  %v101 = vmul.f32 %v30, %v83
  %v102 = vmul.f32 %v31, %v83
  %v103 = vmul.f32 %v32, %v83
  %v104 = vmul.f32 %v33, %v83
  %v105 = vmul.f32 %v34, %v83
  %v106 = vmul.f32 %v35, %v83
  %v107 = vmul.f32 %v36, %v83
  %v108 = vmul.f32 %v37, %v83
  %v109 = vmul.f32 %v38, %v83
  %v110 = vmul.f32 %v39, %v83
  %v111 = vmul.f32 %v40, %v83
  %v112 = vmul.f32 %v41, %v83
  %v113 = vmul.f32 %v42, %v83
  %v114 = vmul.f32 %v43, %v83
  %v115 = vmul.f32 %v44, %v83
  %v116 = vmul.f32 %v45, %v83
  %v117 = vmul.f32 %v46, %v83
  %v118 = vmul.f32 %v47, %v83
  %v119 = vmul.f32 %v48, %v83
  %v120 = vmul.f32 %v49, %v83
  %v121 = vmul.f32 %v50, %v83
  %v122 = vmul.f32 %v51, %v83
  %v123 = vmul.f32 %v52, %v83
  %v124 = vmul.f32 %v53, %v83
  %v125 = vmul.f32 %v54, %v83
  %v126 = vmul.f32 %v55, %v83
  %v127 = vmul.f32 %v56, %v83
  %v128 = vmul.f32 %v57, %v83
  %v129 = vmul.f32 %v58, %v83
  %v130 = vmul.f32 %v59, %v83
  %v131 = vmul.f32 %v60, %v83
  %v132 = vmul.f32 %v61, %v83
  %v133 = vmul.f32 %v62, %v83
  %v134 = vmul.f32 %v63, %v83
  %v135 = vmul.f32 %v64, %v83
  %v136 = vmul.f32 %v65, %v83
  %v137 = vmul.f32 %v66, %v83
  %v138 = vmul.f32 %v67, %v83
  %v139 = vmul.f32 %v68, %v83
  %v140 = vmul.f32 %v69, %v83
  %v141 = vmul.f32 %v70, %v83
  %v142 = vmul.f32 %v71, %v83
  %v143 = vmul.f32 %v72, %v83
  %v144 = vmul.f32 %v73, %v83
  %v145 = vmul.f32 %v74, %v83
  %v146 = vmul.f32 %v75, %v83
  %v147 = vmul.f32 %v76, %v83
  %v148 = vmul.f32 %v77, %v83
  %v149 = vld [vmem:[%s2] sm:$0x1]
  %v151 = vlaneseq
  %v152 = vshrl.u32 %v151, 7
  %v153 = vsub.s32 0, %v152
  %v154 = vrot.slane %v149, %v153
  %v156 = vadd.f32 %v85, %v154
  %v157 = vadd.f32 %v86, %v154
  %v158 = vadd.f32 %v87, %v154
  %v159 = vadd.f32 %v88, %v154
  %v160 = vadd.f32 %v89, %v154
  %v161 = vadd.f32 %v90, %v154
  %v162 = vadd.f32 %v91, %v154
  %v163 = vadd.f32 %v92, %v154
  %v164 = vadd.f32 %v93, %v154
  %v165 = vadd.f32 %v94, %v154
  %v166 = vadd.f32 %v95, %v154
  %v167 = vadd.f32 %v96, %v154
  %v168 = vadd.f32 %v97, %v154
  %v169 = vadd.f32 %v98, %v154
  %v170 = vadd.f32 %v99, %v154
  %v171 = vadd.f32 %v100, %v154
  %v172 = vadd.f32 %v101, %v154
  %v173 = vadd.f32 %v102, %v154
  %v174 = vadd.f32 %v103, %v154
  %v175 = vadd.f32 %v104, %v154
  %v176 = vadd.f32 %v105, %v154
  %v177 = vadd.f32 %v106, %v154
  %v178 = vadd.f32 %v107, %v154
  %v179 = vadd.f32 %v108, %v154
  %v180 = vadd.f32 %v109, %v154
  %v181 = vadd.f32 %v110, %v154
  %v182 = vadd.f32 %v111, %v154
  %v183 = vadd.f32 %v112, %v154
  %v184 = vadd.f32 %v113, %v154
  %v185 = vadd.f32 %v114, %v154
  %v186 = vadd.f32 %v115, %v154
  %v187 = vadd.f32 %v116, %v154
  %v188 = vadd.f32 %v117, %v154
  %v189 = vadd.f32 %v118, %v154
  %v190 = vadd.f32 %v119, %v154
  %v191 = vadd.f32 %v120, %v154
  %v192 = vadd.f32 %v121, %v154
  %v193 = vadd.f32 %v122, %v154
  %v194 = vadd.f32 %v123, %v154
  %v195 = vadd.f32 %v124, %v154
  %v196 = vadd.f32 %v125, %v154
  %v197 = vadd.f32 %v126, %v154
  %v198 = vadd.f32 %v127, %v154
  %v199 = vadd.f32 %v128, %v154
  %v200 = vadd.f32 %v129, %v154
  %v201 = vadd.f32 %v130, %v154
  %v202 = vadd.f32 %v131, %v154
  %v203 = vadd.f32 %v132, %v154
  %v204 = vadd.f32 %v133, %v154
  %v205 = vadd.f32 %v134, %v154
  %v206 = vadd.f32 %v135, %v154
  %v207 = vadd.f32 %v136, %v154
  %v208 = vadd.f32 %v137, %v154
  %v209 = vadd.f32 %v138, %v154
  %v210 = vadd.f32 %v139, %v154
  %v211 = vadd.f32 %v140, %v154
  %v212 = vadd.f32 %v141, %v154
  %v213 = vadd.f32 %v142, %v154
  %v214 = vadd.f32 %v143, %v154
  %v215 = vadd.f32 %v144, %v154
  %v216 = vadd.f32 %v145, %v154
  %v217 = vadd.f32 %v146, %v154
  %v218 = vadd.f32 %v147, %v154
  %v219 = vadd.f32 %v148, %v154
  %vm220 = vcmp.ge.f32.partialorder %v156, 0.0
  %vm221 = vcmp.ge.f32.partialorder %v157, 0.0
  %vm222 = vcmp.ge.f32.partialorder %v158, 0.0
  %vm223 = vcmp.ge.f32.partialorder %v159, 0.0
  %vm224 = vcmp.ge.f32.partialorder %v160, 0.0
  %vm225 = vcmp.ge.f32.partialorder %v161, 0.0
  %vm226 = vcmp.ge.f32.partialorder %v162, 0.0
  %vm227 = vcmp.ge.f32.partialorder %v163, 0.0
  %vm228 = vcmp.ge.f32.partialorder %v164, 0.0
  %vm229 = vcmp.ge.f32.partialorder %v165, 0.0
  %vm230 = vcmp.ge.f32.partialorder %v166, 0.0
  %vm231 = vcmp.ge.f32.partialorder %v167, 0.0
  %vm232 = vcmp.ge.f32.partialorder %v168, 0.0
  %vm233 = vcmp.ge.f32.partialorder %v169, 0.0
  %vm234 = vcmp.ge.f32.partialorder %v170, 0.0
  %vm235 = vcmp.ge.f32.partialorder %v171, 0.0
  %vm236 = vcmp.ge.f32.partialorder %v172, 0.0
  %vm237 = vcmp.ge.f32.partialorder %v173, 0.0
  %vm238 = vcmp.ge.f32.partialorder %v174, 0.0
  %vm239 = vcmp.ge.f32.partialorder %v175, 0.0
  %vm240 = vcmp.ge.f32.partialorder %v176, 0.0
  %vm241 = vcmp.ge.f32.partialorder %v177, 0.0
  %vm242 = vcmp.ge.f32.partialorder %v178, 0.0
  %vm243 = vcmp.ge.f32.partialorder %v179, 0.0
  %vm244 = vcmp.ge.f32.partialorder %v180, 0.0
  %vm245 = vcmp.ge.f32.partialorder %v181, 0.0
  %vm246 = vcmp.ge.f32.partialorder %v182, 0.0
  %vm247 = vcmp.ge.f32.partialorder %v183, 0.0
  %vm248 = vcmp.ge.f32.partialorder %v184, 0.0
  %vm249 = vcmp.ge.f32.partialorder %v185, 0.0
  %vm250 = vcmp.ge.f32.partialorder %v186, 0.0
  %vm251 = vcmp.ge.f32.partialorder %v187, 0.0
  %vm252 = vcmp.ge.f32.partialorder %v188, 0.0
  %vm253 = vcmp.ge.f32.partialorder %v189, 0.0
  %vm254 = vcmp.ge.f32.partialorder %v190, 0.0
  %vm255 = vcmp.ge.f32.partialorder %v191, 0.0
  %vm256 = vcmp.ge.f32.partialorder %v192, 0.0
  %vm257 = vcmp.ge.f32.partialorder %v193, 0.0
  %vm258 = vcmp.ge.f32.partialorder %v194, 0.0
  %vm259 = vcmp.ge.f32.partialorder %v195, 0.0
  %vm260 = vcmp.ge.f32.partialorder %v196, 0.0
  %vm261 = vcmp.ge.f32.partialorder %v197, 0.0
  %vm262 = vcmp.ge.f32.partialorder %v198, 0.0
  %vm263 = vcmp.ge.f32.partialorder %v199, 0.0
  %vm264 = vcmp.ge.f32.partialorder %v200, 0.0
  %vm265 = vcmp.ge.f32.partialorder %v201, 0.0
  %vm266 = vcmp.ge.f32.partialorder %v202, 0.0
  %vm267 = vcmp.ge.f32.partialorder %v203, 0.0
  %vm268 = vcmp.ge.f32.partialorder %v204, 0.0
  %vm269 = vcmp.ge.f32.partialorder %v205, 0.0
  %vm270 = vcmp.ge.f32.partialorder %v206, 0.0
  %vm271 = vcmp.ge.f32.partialorder %v207, 0.0
  %vm272 = vcmp.ge.f32.partialorder %v208, 0.0
  %vm273 = vcmp.ge.f32.partialorder %v209, 0.0
  %vm274 = vcmp.ge.f32.partialorder %v210, 0.0
  %vm275 = vcmp.ge.f32.partialorder %v211, 0.0
  %vm276 = vcmp.ge.f32.partialorder %v212, 0.0
  %vm277 = vcmp.ge.f32.partialorder %v213, 0.0
  %vm278 = vcmp.ge.f32.partialorder %v214, 0.0
  %vm279 = vcmp.ge.f32.partialorder %v215, 0.0
  %vm280 = vcmp.ge.f32.partialorder %v216, 0.0
  %vm281 = vcmp.ge.f32.partialorder %v217, 0.0
  %vm282 = vcmp.ge.f32.partialorder %v218, 0.0
  %vm283 = vcmp.ge.f32.partialorder %v219, 0.0
  %v284 = vmul.f32 %v156, 0.01
  %v285 = vmul.f32 %v157, 0.01
  %v286 = vmul.f32 %v158, 0.01
  %v287 = vmul.f32 %v159, 0.01
  %v288 = vmul.f32 %v160, 0.01
  %v289 = vmul.f32 %v161, 0.01
  %v290 = vmul.f32 %v162, 0.01
  %v291 = vmul.f32 %v163, 0.01
  %v292 = vmul.f32 %v164, 0.01
  %v293 = vmul.f32 %v165, 0.01
  %v294 = vmul.f32 %v166, 0.01
  %v295 = vmul.f32 %v167, 0.01
  %v296 = vmul.f32 %v168, 0.01
  %v297 = vmul.f32 %v169, 0.01
  %v298 = vmul.f32 %v170, 0.01
  %v299 = vmul.f32 %v171, 0.01
  %v300 = vmul.f32 %v172, 0.01
  %v301 = vmul.f32 %v173, 0.01
  %v302 = vmul.f32 %v174, 0.01
  %v303 = vmul.f32 %v175, 0.01
  %v304 = vmul.f32 %v176, 0.01
  %v305 = vmul.f32 %v177, 0.01
  %v306 = vmul.f32 %v178, 0.01
  %v307 = vmul.f32 %v179, 0.01
  %v308 = vmul.f32 %v180, 0.01
  %v309 = vmul.f32 %v181, 0.01
  %v310 = vmul.f32 %v182, 0.01
  %v311 = vmul.f32 %v183, 0.01
  %v312 = vmul.f32 %v184, 0.01
  %v313 = vmul.f32 %v185, 0.01
  %v314 = vmul.f32 %v186, 0.01
  %v315 = vmul.f32 %v187, 0.01
  %v316 = vmul.f32 %v188, 0.01
  %v317 = vmul.f32 %v189, 0.01
  %v318 = vmul.f32 %v190, 0.01
  %v319 = vmul.f32 %v191, 0.01
  %v320 = vmul.f32 %v192, 0.01
  %v321 = vmul.f32 %v193, 0.01
  %v322 = vmul.f32 %v194, 0.01
  %v323 = vmul.f32 %v195, 0.01
  %v324 = vmul.f32 %v196, 0.01
  %v325 = vmul.f32 %v197, 0.01
  %v326 = vmul.f32 %v198, 0.01
  %v327 = vmul.f32 %v199, 0.01
  %v328 = vmul.f32 %v200, 0.01
  %v329 = vmul.f32 %v201, 0.01
  %v330 = vmul.f32 %v202, 0.01
  %v331 = vmul.f32 %v203, 0.01
  %v332 = vmul.f32 %v204, 0.01
  %v333 = vmul.f32 %v205, 0.01
  %v334 = vmul.f32 %v206, 0.01
  %v335 = vmul.f32 %v207, 0.01
  %v336 = vmul.f32 %v208, 0.01
  %v337 = vmul.f32 %v209, 0.01
  %v338 = vmul.f32 %v210, 0.01
  %v339 = vmul.f32 %v211, 0.01
  %v340 = vmul.f32 %v212, 0.01
  %v341 = vmul.f32 %v213, 0.01
  %v342 = vmul.f32 %v214, 0.01
  %v343 = vmul.f32 %v215, 0.01
  %v344 = vmul.f32 %v216, 0.01
  %v345 = vmul.f32 %v217, 0.01
  %v346 = vmul.f32 %v218, 0.01
  %v347 = vmul.f32 %v219, 0.01
  %v348 = vsel %vm220, %v156, %v284
  %v349 = vsel %vm221, %v157, %v285
  %v350 = vsel %vm222, %v158, %v286
  %v351 = vsel %vm223, %v159, %v287
  %v352 = vsel %vm224, %v160, %v288
  %v353 = vsel %vm225, %v161, %v289
  %v354 = vsel %vm226, %v162, %v290
  %v355 = vsel %vm227, %v163, %v291
  %v356 = vsel %vm228, %v164, %v292
  %v357 = vsel %vm229, %v165, %v293
  %v358 = vsel %vm230, %v166, %v294
  %v359 = vsel %vm231, %v167, %v295
  %v360 = vsel %vm232, %v168, %v296
  %v361 = vsel %vm233, %v169, %v297
  %v362 = vsel %vm234, %v170, %v298
  %v363 = vsel %vm235, %v171, %v299
  %v364 = vsel %vm236, %v172, %v300
  %v365 = vsel %vm237, %v173, %v301
  %v366 = vsel %vm238, %v174, %v302
  %v367 = vsel %vm239, %v175, %v303
  %v368 = vsel %vm240, %v176, %v304
  %v369 = vsel %vm241, %v177, %v305
  %v370 = vsel %vm242, %v178, %v306
  %v371 = vsel %vm243, %v179, %v307
  %v372 = vsel %vm244, %v180, %v308
  %v373 = vsel %vm245, %v181, %v309
  %v374 = vsel %vm246, %v182, %v310
  %v375 = vsel %vm247, %v183, %v311
  %v376 = vsel %vm248, %v184, %v312
  %v377 = vsel %vm249, %v185, %v313
  %v378 = vsel %vm250, %v186, %v314
  %v379 = vsel %vm251, %v187, %v315
  %v380 = vsel %vm252, %v188, %v316
  %v381 = vsel %vm253, %v189, %v317
  %v382 = vsel %vm254, %v190, %v318
  %v383 = vsel %vm255, %v191, %v319
  %v384 = vsel %vm256, %v192, %v320
  %v385 = vsel %vm257, %v193, %v321
  %v386 = vsel %vm258, %v194, %v322
  %v387 = vsel %vm259, %v195, %v323
  %v388 = vsel %vm260, %v196, %v324
  %v389 = vsel %vm261, %v197, %v325
  %v390 = vsel %vm262, %v198, %v326
  %v391 = vsel %vm263, %v199, %v327
  %v392 = vsel %vm264, %v200, %v328
  %v393 = vsel %vm265, %v201, %v329
  %v394 = vsel %vm266, %v202, %v330
  %v395 = vsel %vm267, %v203, %v331
  %v396 = vsel %vm268, %v204, %v332
  %v397 = vsel %vm269, %v205, %v333
  %v398 = vsel %vm270, %v206, %v334
  %v399 = vsel %vm271, %v207, %v335
  %v400 = vsel %vm272, %v208, %v336
  %v401 = vsel %vm273, %v209, %v337
  %v402 = vsel %vm274, %v210, %v338
  %v403 = vsel %vm275, %v211, %v339
  %v404 = vsel %vm276, %v212, %v340
  %v405 = vsel %vm277, %v213, %v341
  %v406 = vsel %vm278, %v214, %v342
  %v407 = vsel %vm279, %v215, %v343
  %v408 = vsel %vm280, %v216, %v344
  %v409 = vsel %vm281, %v217, %v345
  %v410 = vsel %vm282, %v218, %v346
  %v411 = vsel %vm283, %v219, %v347
  %vm412 = vcmask 523264
  %413 = vst.msk [vmem:[%s3] sm:$0xff] %vm412, %v348
  %414 = vst.msk [vmem:[%s3 + $0x8] sm:$0xff] %vm412, %v349
  %415 = vst.msk [vmem:[%s3 + $0x10] sm:$0xff] %vm412, %v350
  %416 = vst.msk [vmem:[%s3 + $0x18] sm:$0xff] %vm412, %v351
  %417 = vst.msk [vmem:[%s3 + $0x20] sm:$0xff] %vm412, %v352
  %418 = vst.msk [vmem:[%s3 + $0x28] sm:$0xff] %vm412, %v353
  %419 = vst.msk [vmem:[%s3 + $0x30] sm:$0xff] %vm412, %v354
  %420 = vst.msk [vmem:[%s3 + $0x38] sm:$0xff] %vm412, %v355
  %421 = vst.msk [vmem:[%s3 + $0x40] sm:$0xff] %vm412, %v356
  %422 = vst.msk [vmem:[%s3 + $0x48] sm:$0xff] %vm412, %v357
  %423 = vst.msk [vmem:[%s3 + $0x50] sm:$0xff] %vm412, %v358
  %424 = vst.msk [vmem:[%s3 + $0x58] sm:$0xff] %vm412, %v359
  %425 = vst.msk [vmem:[%s3 + $0x60] sm:$0xff] %vm412, %v360
  %426 = vst.msk [vmem:[%s3 + $0x68] sm:$0xff] %vm412, %v361
  %427 = vst.msk [vmem:[%s3 + $0x70] sm:$0xff] %vm412, %v362
  %428 = vst.msk [vmem:[%s3 + $0x78] sm:$0xff] %vm412, %v363
  %429 = vst.msk [vmem:[%s3 + $0x80] sm:$0xff] %vm412, %v364
  %430 = vst.msk [vmem:[%s3 + $0x88] sm:$0xff] %vm412, %v365
  %431 = vst.msk [vmem:[%s3 + $0x90] sm:$0xff] %vm412, %v366
  %432 = vst.msk [vmem:[%s3 + $0x98] sm:$0xff] %vm412, %v367
  %433 = vst.msk [vmem:[%s3 + $0xa0] sm:$0xff] %vm412, %v368
  %434 = vst.msk [vmem:[%s3 + $0xa8] sm:$0xff] %vm412, %v369
  %435 = vst.msk [vmem:[%s3 + $0xb0] sm:$0xff] %vm412, %v370
  %436 = vst.msk [vmem:[%s3 + $0xb8] sm:$0xff] %vm412, %v371
  %437 = vst.msk [vmem:[%s3 + $0xc0] sm:$0xff] %vm412, %v372
  %438 = vst.msk [vmem:[%s3 + $0xc8] sm:$0xff] %vm412, %v373
  %439 = vst.msk [vmem:[%s3 + $0xd0] sm:$0xff] %vm412, %v374
  %440 = vst.msk [vmem:[%s3 + $0xd8] sm:$0xff] %vm412, %v375
  %441 = vst.msk [vmem:[%s3 + $0xe0] sm:$0xff] %vm412, %v376
  %442 = vst.msk [vmem:[%s3 + $0xe8] sm:$0xff] %vm412, %v377
  %443 = vst.msk [vmem:[%s3 + $0xf0] sm:$0xff] %vm412, %v378
  %444 = vst.msk [vmem:[%s3 + $0xf8] sm:$0xff] %vm412, %v379
  %445 = vst.msk [vmem:[%s3 + $0x100] sm:$0xff] %vm412, %v380
  %446 = vst.msk [vmem:[%s3 + $0x108] sm:$0xff] %vm412, %v381
  %447 = vst.msk [vmem:[%s3 + $0x110] sm:$0xff] %vm412, %v382
  %448 = vst.msk [vmem:[%s3 + $0x118] sm:$0xff] %vm412, %v383
  %449 = vst.msk [vmem:[%s3 + $0x120] sm:$0xff] %vm412, %v384
  %450 = vst.msk [vmem:[%s3 + $0x128] sm:$0xff] %vm412, %v385
  %451 = vst.msk [vmem:[%s3 + $0x130] sm:$0xff] %vm412, %v386
  %452 = vst.msk [vmem:[%s3 + $0x138] sm:$0xff] %vm412, %v387
  %453 = vst.msk [vmem:[%s3 + $0x140] sm:$0xff] %vm412, %v388
  %454 = vst.msk [vmem:[%s3 + $0x148] sm:$0xff] %vm412, %v389
  %455 = vst.msk [vmem:[%s3 + $0x150] sm:$0xff] %vm412, %v390
  %456 = vst.msk [vmem:[%s3 + $0x158] sm:$0xff] %vm412, %v391
  %457 = vst.msk [vmem:[%s3 + $0x160] sm:$0xff] %vm412, %v392
  %458 = vst.msk [vmem:[%s3 + $0x168] sm:$0xff] %vm412, %v393
  %459 = vst.msk [vmem:[%s3 + $0x170] sm:$0xff] %vm412, %v394
  %460 = vst.msk [vmem:[%s3 + $0x178] sm:$0xff] %vm412, %v395
  %461 = vst.msk [vmem:[%s3 + $0x180] sm:$0xff] %vm412, %v396
  %462 = vst.msk [vmem:[%s3 + $0x188] sm:$0xff] %vm412, %v397
  %463 = vst.msk [vmem:[%s3 + $0x190] sm:$0xff] %vm412, %v398
  %464 = vst.msk [vmem:[%s3 + $0x198] sm:$0xff] %vm412, %v399
  %465 = vst.msk [vmem:[%s3 + $0x1a0] sm:$0xff] %vm412, %v400
  %466 = vst.msk [vmem:[%s3 + $0x1a8] sm:$0xff] %vm412, %v401
  %467 = vst.msk [vmem:[%s3 + $0x1b0] sm:$0xff] %vm412, %v402
  %468 = vst.msk [vmem:[%s3 + $0x1b8] sm:$0xff] %vm412, %v403
  %469 = vst.msk [vmem:[%s3 + $0x1c0] sm:$0xff] %vm412, %v404
  %470 = vst.msk [vmem:[%s3 + $0x1c8] sm:$0xff] %vm412, %v405
  %471 = vst.msk [vmem:[%s3 + $0x1d0] sm:$0xff] %vm412, %v406
  %472 = vst.msk [vmem:[%s3 + $0x1d8] sm:$0xff] %vm412, %v407
  %473 = vst.msk [vmem:[%s3 + $0x1e0] sm:$0xff] %vm412, %v408
  %474 = vst.msk [vmem:[%s3 + $0x1e8] sm:$0xff] %vm412, %v409
  %475 = vst.msk [vmem:[%s3 + $0x1f0] sm:$0xff] %vm412, %v410
  %476 = vst.msk [vmem:[%s3 + $0x1f8] sm:$0xff] %vm412, %v411
  // Predicated region
  $region14: #{a_call__.5} parent=0 // pred_check
    _
  $region15: #{a_call__.5} parent=0 // pred_check_branch
    %478 = sbr.rel (0) target = $region17
  $region16: #{a_call__.5} parent=0 // pred_region
    _
  $region17: #{a_call__.5} parent=0 // pred_fallthru
    _
  // Predicated region
  $region18: #{a_call__.5} parent=0 // pred_check
    _
  $region19: #{a_call__.5} parent=0 // pred_check_branch
    %480 = sbr.rel (0) target = $region21
  $region20: #{a_call__.5} parent=0 // pred_region
    _
  $region21: #{a_call__.5} parent=0 // pred_fallthru
    _

</llo_original>
